<compile_context>
chip_gen: v6e
topology: v6e:2x2x1
jax: 0.10.0
libtpu: 0.0.40
codegen_flags: <defaults>
</compile_context>

<pallas_src>
import functools

import jax
import jax.numpy as jnp
import numpy as np
from jax import lax
from jax.experimental import pallas as pl
from jax.experimental.pallas import tpu as pltpu

EPS = 1e-5


def _decoder_block_kernel(wide, x_ref, xh_ref, w1_ref, b1_ref, *rest):
    if wide:
        wd_a_ref, wd_b_ref, b2_ref, w3_ref, b3_ref, o_ref = rest
    else:
        wdm_ref, wdr_ref, wdd_ref, wddr_ref, b2_ref, w3_ref, b3_ref, o_ref = rest

    TH, W, Cin = x_ref.shape[1], x_ref.shape[2], x_ref.shape[3]
    C = w1_ref.shape[1]
    Cout = w3_ref.shape[1]
    M = TH * W
    f32, bf16 = jnp.float32, jnp.bfloat16

    def dot(a, b):
        return jnp.dot(a, b, preferred_element_type=f32)

    # ---- conv1 (1x1, BN1 scale folded) + shift + ReLU ---------------------
    # Main tile and +1-row halo are two matmuls sharing w1 (no input concat).
    w1 = w1_ref[...]
    b1 = b1_ref[...]
    h_main = jnp.maximum(dot(x_ref[0].reshape(M, Cin), w1) + b1, 0.0)   # (M, C)
    h_halo = jnp.maximum(dot(xh_ref[0, 0], w1) + b1, 0.0)               # (W, C)
    # On the last row-tile the halo row lies outside the image -> zero.
    halo_scale = jnp.where(pl.program_id(1) == pl.num_programs(1) - 1, 0.0, 1.0)

    # ---- shifted deconv operands: flattened (M+W, C) bf16, no scratch -----
    # flat index i = p*W + q; row shift (+W) is a 16-row-aligned slice, the
    # column shift (+1) is one shifted bf16 copy + iota mask on q == W-1.
    h = jnp.concatenate(
        [h_main.astype(bf16), (h_halo * halo_scale).astype(bf16)], axis=0)
    not_last_col = (
        lax.broadcasted_iota(jnp.int32, (M + W, 1), 0) % W != W - 1).astype(bf16)
    h_s = jnp.concatenate([h[1:], jnp.zeros((1, C), bf16)], axis=0) * not_last_col

    h0, hd = h[0:M], h[W:M + W]            # in[p,   q], in[p+1, q]
    hr, hdr = h_s[0:M], h_s[W:M + W]       # in[p, q+1], in[p+1, q+1]

    # ---- ConvTranspose2d(3x3, s=2, p=1, op=1) as parity-plane matmuls -----
    if wide:
        # Two K=2C block matmuls (zero-blocked RHS built at fold time):
        # fills the 256-wide MXU on v6e / v7x.
        a_out = dot(jnp.concatenate([h0, hr], axis=1), wd_a_ref[...])   # (M, 4C)
        b_out = dot(jnp.concatenate([hd, hdr], axis=1), wd_b_ref[...])  # (M, 2C)
        ee = a_out[:, 0 * C:1 * C]
        eo = a_out[:, 1 * C:2 * C]
        oe = a_out[:, 2 * C:3 * C] + b_out[:, 0:C]
        oo = a_out[:, 3 * C:4 * C] + b_out[:, C:2 * C]
    else:
        # Four K=C matmuls: no zero-block waste, matches v5e's 128-wide MXU.
        m = dot(h0, wdm_ref[...])          # (M, 4C): [ee | eo | oe | oo]
        r = dot(hr, wdr_ref[...])          # (M, 2C): [eo | oo]
        d = dot(hd, wdd_ref[...])          # (M, 2C): [oe | oo]
        dr = dot(hdr, wddr_ref[...])       # (M,  C): [oo]
        ee = m[:, 0 * C:1 * C]
        eo = m[:, 1 * C:2 * C] + r[:, 0:C]
        oe = m[:, 2 * C:3 * C] + d[:, 0:C]
        oo = m[:, 3 * C:4 * C] + r[:, C:2 * C] + d[:, C:2 * C] + dr

    # ---- BN2 shift + ReLU (per plane, bf16) -> conv3 -> BN3 shift + ReLU --
    b2, b3, w3 = b2_ref[...], b3_ref[...], w3_ref[...]
    planes = [jnp.maximum(p + b2, 0.0).astype(bf16) for p in (ee, eo, oe, oo)]
    if wide:
        h2 = jnp.concatenate(planes, axis=0)                 # (4M, C) bf16
        y = jnp.maximum(dot(h2, w3) + b3, 0.0).astype(bf16)  # (4M, Cout)
        for k in range(4):
            o_ref[0, k] = y[k * M:(k + 1) * M].reshape(TH, W, Cout)
    else:
        for k, p in enumerate(planes):
            yk = jnp.maximum(dot(p, w3) + b3, 0.0)
            o_ref[0, k] = yk.astype(bf16).reshape(TH, W, Cout)


def decoder_block_forward(x_nchw, kp, row_tile=16, wide_deconv=True):
    """x_nchw: [N, Cin, H, W] float32; kp: dict of folded kernel params."""
    N, Cin, H, W = x_nchw.shape
    C = kp["w1"].shape[1]
    Cout = kp["w3"].shape[1]
    assert W % 8 == 0 and Cin % 128 == 0 and C % 128 == 0 and Cout % 128 == 0, (
        "kernel assumes lane/sublane-dense shapes")

    # Largest divisor of H not exceeding row_tile (no whole-image fallback).
    TH = max(d for d in range(1, min(row_tile, H) + 1) if H % d == 0)
    grid = (N, H // TH)

    # bf16 input, fused into the (PyTorch interface) NCHW -> NHWC transpose.
    x_nhwc = jnp.transpose(x_nchw, (0, 2, 3, 1)).astype(jnp.bfloat16)

    def full(arr):
        nd = arr.ndim
        return pl.BlockSpec(arr.shape, lambda n, i, _nd=nd: (0,) * _nd)

    halo_spec = pl.BlockSpec(
        (1, 1, W, Cin),
        lambda n, i: (n, jnp.minimum((i + 1) * TH, H - 1), 0, 0))

    if wide_deconv:
        dec_w = [kp["wd_a"], kp["wd_b"]]
    else:
        dec_w = [kp["wdm"], kp["wdr"], kp["wdd"], kp["wddr"]]
    weights = [kp["w1"], kp["b1"], *dec_w, kp["b2"], kp["w3"], kp["b3"]]

    in_specs = ([pl.BlockSpec((1, TH, W, Cin), lambda n, i: (n, i, 0, 0)),
                 halo_spec] + [full(w) for w in weights])

    # VMEM budget from the actual double-buffered per-step footprint plus
    # headroom for in-kernel temporaries, clamped to v7x's 64 MiB.
    def nbytes(shape, dtype):
        return int(np.prod(shape)) * np.dtype(dtype).itemsize

    per_step = 2 * (nbytes((1, TH, W, Cin), jnp.bfloat16)
                    + nbytes((1, 1, W, Cin), jnp.bfloat16)
                    + nbytes((1, 4, TH, W, Cout), jnp.bfloat16)
                    + sum(int(v.size) * v.dtype.itemsize for v in weights))
    vmem_limit = int(min(64 * 2**20, max(2 * per_step + 16 * 2**20, 24 * 2**20)))

    grid_spec = pltpu.PrefetchScalarGridSpec(
        num_scalar_prefetch=0,
        grid=grid,
        in_specs=in_specs,
        out_specs=pl.BlockSpec((1, 4, TH, W, Cout),
                               lambda n, i: (n, 0, i, 0, 0)),
    )

    out = pl.pallas_call(
        functools.partial(_decoder_block_kernel, wide_deconv),
        out_shape=jax.ShapeDtypeStruct((N, 4, H, W, Cout), jnp.bfloat16),
        grid_spec=grid_spec,
        compiler_params=pltpu.CompilerParams(
            dimension_semantics=("parallel", "parallel"),
            vmem_limit_bytes=vmem_limit),
    )(x_nhwc, x_nhwc, *weights)

    # out[n, 2a+b, p, q, c] == y_nhwc[n, 2p+a, 2q+b, c].  Fuse parity
    # interleave + bf16->f32 cast into the one NCHW transpose copy.
    out = out.reshape(N, 2, 2, H, W, Cout)
    y = jnp.transpose(out, (0, 5, 3, 1, 4, 2)).astype(jnp.float32)
    return y.reshape(N, Cout, 2 * H, 2 * W)


# ----------------------- parameter setup (deterministic) -------------------

def init_pt_params(key, in_channels, n_filters):
    Cmid = in_channels // 4
    ks = jax.random.split(key, 18)
    f = lambda k, shape, s=0.1: jax.random.normal(k, shape, jnp.float32) * s
    return {
        "w1": f(ks[0], (Cmid, in_channels, 1, 1)), "b1": f(ks[1], (Cmid,)),
        "g1": 1.0 + f(ks[2], (Cmid,)), "beta1": f(ks[3], (Cmid,)),
        "m1": f(ks[4], (Cmid,)), "v1": jnp.abs(f(ks[5], (Cmid,))) + 0.5,
        "wd": f(ks[6], (Cmid, Cmid, 3, 3)), "bd": f(ks[7], (Cmid,)),
        "g2": 1.0 + f(ks[8], (Cmid,)), "beta2": f(ks[9], (Cmid,)),
        "m2": f(ks[10], (Cmid,)), "v2": jnp.abs(f(ks[11], (Cmid,))) + 0.5,
        "w3": f(ks[12], (n_filters, Cmid, 1, 1)), "b3": f(ks[13], (n_filters,)),
        "g3": 1.0 + f(ks[14], (n_filters,)), "beta3": f(ks[15], (n_filters,)),
        "m3": f(ks[16], (n_filters,)), "v3": jnp.abs(f(ks[17], (n_filters,))) + 0.5,
    }


def fold_params(pt):
    """Fold BN scales into bf16 weights; conv biases into the BN shifts."""
    def bn_fold(g, v, beta, m):
        scale = g / jnp.sqrt(v + EPS)
        return scale, beta - m * scale

    s1, sh1 = bn_fold(pt["g1"], pt["v1"], pt["beta1"], pt["m1"])
    s2, sh2 = bn_fold(pt["g2"], pt["v2"], pt["beta2"], pt["m2"])
    s3, sh3 = bn_fold(pt["g3"], pt["v3"], pt["beta3"], pt["m3"])
    bf16 = jnp.bfloat16
    C = pt["w1"].shape[0]

    # conv1: [Cin, Cmid], BN1 scale folded into output columns.
    w1 = jnp.transpose(pt["w1"][:, :, 0, 0], (1, 0)) * s1[None, :]
    b1f = (s1 * pt["b1"] + sh1).reshape(1, -1)

    # deconv taps: [kH, kW, Cmid_in, Cmid_out], BN2 scale folded in.
    wd = jnp.transpose(pt["wd"], (2, 3, 0, 1)) * s2[None, None, None, :]
    zero = jnp.zeros((C, C), jnp.float32)
    # narrow (v5e, K=C) tap groups sharing a shifted LHS.
    wdm = jnp.concatenate([wd[1, 1], wd[1, 2], wd[2, 1], wd[2, 2]], axis=1)
    wdr = jnp.concatenate([wd[1, 0], wd[2, 0]], axis=1)
    wdd = jnp.concatenate([wd[0, 1], wd[0, 2]], axis=1)
    wddr = wd[0, 0]
    # wide (v6e/v7x, K=2C) zero-blocked RHS for [h0|hr] and [hd|hdr].
    wd_a = jnp.concatenate([
        jnp.concatenate([wd[1, 1], wd[1, 2], wd[2, 1], wd[2, 2]], axis=1),
        jnp.concatenate([zero, wd[1, 0], zero, wd[2, 0]], axis=1)], axis=0)
    wd_b = jnp.concatenate([
        jnp.concatenate([wd[0, 1], wd[0, 2]], axis=1),
        jnp.concatenate([zero, wd[0, 0]], axis=1)], axis=0)
    b2f = (s2 * pt["bd"] + sh2).reshape(1, -1)

    # conv3: [Cmid, Cout], BN3 scale folded in.
    w3 = jnp.transpose(pt["w3"][:, :, 0, 0], (1, 0)) * s3[None, :]
    b3f = (s3 * pt["b3"] + sh3).reshape(1, -1)

    return {
        "w1": w1.astype(bf16), "b1": b1f,
        "wdm": wdm.astype(bf16), "wdr": wdr.astype(bf16),
        "wdd": wdd.astype(bf16), "wddr": wddr.astype(bf16),
        "wd_a": wd_a.astype(bf16), "wd_b": wd_b.astype(bf16),
        "b2": b2f,
        "w3": w3.astype(bf16), "b3": b3f,
    }


# ----------------------- pure-JAX reference --------------------------------

def reference_forward(x_nchw, pt):
    x = jnp.transpose(x_nchw, (0, 2, 3, 1))  # NHWC

    def bn(h, g, beta, m, v):
        return (h - m) / jnp.sqrt(v + EPS) * g + beta

    h = jnp.einsum("nhwc,dc->nhwd", x, pt["w1"][:, :, 0, 0]) + pt["b1"]
    h = jax.nn.relu(bn(h, pt["g1"], pt["beta1"], pt["m1"], pt["v1"]))

    # ConvTranspose2d(3,3,stride=2,pad=1,out_pad=1) via dilated conv
    rhs = jnp.transpose(pt["wd"][:, :, ::-1, ::-1], (2, 3, 0, 1))  # HWIO
    h = lax.conv_general_dilated(
        h, rhs, window_strides=(1, 1), padding=((1, 2), (1, 2)),
        lhs_dilation=(2, 2),
        dimension_numbers=("NHWC", "HWIO", "NHWC")) + pt["bd"]
    h = jax.nn.relu(bn(h, pt["g2"], pt["beta2"], pt["m2"], pt["v2"]))

    h = jnp.einsum("nhwc,dc->nhwd", h, pt["w3"][:, :, 0, 0]) + pt["b3"]
    h = jax.nn.relu(bn(h, pt["g3"], pt["beta3"], pt["m3"], pt["v3"]))
    return jnp.transpose(h, (0, 3, 1, 2))


if __name__ == "__main__":
    # Real D-LinkNet decoder4 channel sizes (lane-dense: Cmid=128, Cout=128),
    # small spatial extent to keep the test light.
    N, in_channels, n_filters, H, W = 2, 512, 128, 16, 16
    key = jax.random.PRNGKey(0)
    kx, kparams = jax.random.split(key)
    x = jax.random.normal(kx, (N, in_channels, H, W), jnp.float32)

    pt_params = init_pt_params(kparams, in_channels, n_filters)
    kernel_params = fold_params(pt_params)

    y_ref = jax.block_until_ready(reference_forward(x, pt_params))
    yr_np = np.asarray(y_ref)

    # Exercise: wide MXU path @ M=256, wide path with active halo rows
    # (multi-tile grid), and the narrow v5e path.
    for wide, rt in [(True, 16), (True, 8), (False, 16)]:
        y = jax.block_until_ready(
            decoder_block_forward(x, kernel_params, row_tile=rt,
                                  wide_deconv=wide))
        assert y.shape == (N, n_filters, 2 * H, 2 * W), y.shape
        y_np = np.asarray(y)
        # bf16 MXU matmuls + bf16 output vs all-f32 reference -> loose
        # elementwise tolerance plus a tight global relative-error check.
        rel_l2 = np.linalg.norm(y_np - yr_np) / np.linalg.norm(yr_np)
        assert rel_l2 < 3e-2, f"wide={wide} rt={rt}: rel L2 {rel_l2}"
        np.testing.assert_allclose(y_np, yr_np, rtol=5e-2, atol=5e-1)

    print("KERNEL_OK")
</pallas_src>

<mosaic_0001>
module attributes {stable_mosaic.version = 11 : i64} {
  func.func @_decoder_block_kernel(%arg0: i32, %arg1: i32, %arg2: memref<1x16x16x512xbf16, #tpu.memory_space<vmem>>, %arg3: memref<1x1x16x512xbf16, #tpu.memory_space<vmem>>, %arg4: memref<512x128xbf16, #tpu.memory_space<vmem>>, %arg5: memref<1x128xf32, #tpu.memory_space<vmem>>, %arg6: memref<256x512xbf16, #tpu.memory_space<vmem>>, %arg7: memref<256x256xbf16, #tpu.memory_space<vmem>>, %arg8: memref<1x128xf32, #tpu.memory_space<vmem>>, %arg9: memref<128x128xbf16, #tpu.memory_space<vmem>>, %arg10: memref<1x128xf32, #tpu.memory_space<vmem>>, %arg11: memref<1x4x16x16x128xbf16, #tpu.memory_space<vmem>>) attributes {dimension_semantics = [#tpu.dimension_semantics<parallel>, #tpu.dimension_semantics<parallel>], iteration_bounds = array<i64: 2, 1>, scalar_prefetch = 0 : i64, scratch_operands = 0 : i64, tpu.core_type = #tpu.core_type<tc>, window_params = [{transform_indices = @transform_0, window_bounds = array<i64: 1, 16, 16, 512>}, {transform_indices = @transform_1, window_bounds = array<i64: 1, 1, 16, 512>}, {pipeline_mode = #tpu.pipeline_mode<synchronous>, transform_indices = @transform_2, window_bounds = array<i64: 512, 128>}, {pipeline_mode = #tpu.pipeline_mode<synchronous>, transform_indices = @transform_3, window_bounds = array<i64: 1, 128>}, {pipeline_mode = #tpu.pipeline_mode<synchronous>, transform_indices = @transform_4, window_bounds = array<i64: 256, 512>}, {pipeline_mode = #tpu.pipeline_mode<synchronous>, transform_indices = @transform_5, window_bounds = array<i64: 256, 256>}, {pipeline_mode = #tpu.pipeline_mode<synchronous>, transform_indices = @transform_6, window_bounds = array<i64: 1, 128>}, {pipeline_mode = #tpu.pipeline_mode<synchronous>, transform_indices = @transform_7, window_bounds = array<i64: 128, 128>}, {pipeline_mode = #tpu.pipeline_mode<synchronous>, transform_indices = @transform_8, window_bounds = array<i64: 1, 128>}, {transform_indices = @transform_9, window_bounds = array<i64: 1, 4, 16, 16, 128>}]} {
    %c0 = arith.constant 0 : index
    %c0_0 = arith.constant 0 : index
    %0 = vector.load %arg4[%c0, %c0_0] : memref<512x128xbf16, #tpu.memory_space<vmem>>, vector<512x128xbf16>
    %c0_1 = arith.constant 0 : index
    %c0_2 = arith.constant 0 : index
    %1 = vector.load %arg5[%c0_1, %c0_2] : memref<1x128xf32, #tpu.memory_space<vmem>>, vector<1x128xf32>
    %c0_3 = arith.constant 0 : index
    %c0_4 = arith.constant 0 : index
    %c0_5 = arith.constant 0 : index
    %c0_6 = arith.constant 0 : index
    %2 = vector.load %arg2[%c0_3, %c0_4, %c0_5, %c0_6] : memref<1x16x16x512xbf16, #tpu.memory_space<vmem>>, vector<1x16x16x512xbf16>
    %3 = vector.shape_cast %2 : vector<1x16x16x512xbf16> to vector<16x16x512xbf16>
    %4 = vector.shape_cast %3 : vector<16x16x512xbf16> to vector<256x512xbf16>
    %cst = arith.constant dense<0.000000e+00> : vector<256x128xf32>
    %5 = tpu.matmul %4, %0, %cst {dimension_numbers = #tpu.dot_dimension_numbers<[1], [0], [0], [1], [0, 0, 1, 1], [], []>} : vector<256x512xbf16>, vector<512x128xbf16>, vector<256x128xf32> -> vector<256x128xf32>
    %6 = vector.broadcast %1 : vector<1x128xf32> to vector<256x128xf32>
    %7 = arith.addf %5, %6 : vector<256x128xf32>
    %cst_7 = arith.constant 0.000000e+00 : f32
    %8 = vector.broadcast %cst_7 : f32 to vector<256x128xf32>
    %9 = arith.maximumf %7, %8 : vector<256x128xf32>
    %c0_8 = arith.constant 0 : index
    %c0_9 = arith.constant 0 : index
    %c0_10 = arith.constant 0 : index
    %c0_11 = arith.constant 0 : index
    %10 = vector.load %arg3[%c0_8, %c0_9, %c0_10, %c0_11] : memref<1x1x16x512xbf16, #tpu.memory_space<vmem>>, vector<1x1x16x512xbf16>
    %11 = vector.shape_cast %10 : vector<1x1x16x512xbf16> to vector<16x512xbf16>
    %cst_12 = arith.constant dense<0.000000e+00> : vector<16x128xf32>
    %12 = tpu.matmul %11, %0, %cst_12 {dimension_numbers = #tpu.dot_dimension_numbers<[1], [0], [0], [1], [0, 0, 1, 1], [], []>} : vector<16x512xbf16>, vector<512x128xbf16>, vector<16x128xf32> -> vector<16x128xf32>
    %13 = vector.broadcast %1 : vector<1x128xf32> to vector<16x128xf32>
    %14 = arith.addf %12, %13 : vector<16x128xf32>
    %cst_13 = arith.constant 0.000000e+00 : f32
    %15 = vector.broadcast %cst_13 : f32 to vector<16x128xf32>
    %16 = arith.maximumf %14, %15 : vector<16x128xf32>
    %c0_i32 = arith.constant 0 : i32
    %17 = arith.cmpi eq, %arg1, %c0_i32 : i32
    %cst_14 = arith.constant 0.000000e+00 : f32
    %cst_15 = arith.constant 1.000000e+00 : f32
    %18 = arith.select %17, %cst_14, %cst_15 : f32
    %19 = arith.truncf %9 : vector<256x128xf32> to vector<256x128xbf16>
    %20 = vector.broadcast %18 : f32 to vector<16x128xf32>
    %21 = arith.mulf %16, %20 : vector<16x128xf32>
    %22 = arith.truncf %21 : vector<16x128xf32> to vector<16x128xbf16>
    %23 = tpu.concatenate %19, %22 in 0 : vector<256x128xbf16>, vector<16x128xbf16> -> vector<272x128xbf16>
    %24 = tpu.iota {dimensions = array<i32: 0>} : vector<272x1xi32>
    %c16_i32 = arith.constant 16 : i32
    %c0_i32_16 = arith.constant 0 : i32
    %25 = arith.cmpi eq, %c16_i32, %c0_i32_16 : i32
    %c1_i32 = arith.constant 1 : i32
    %26 = arith.select %25, %c1_i32, %c16_i32 : i32
    %27 = vector.broadcast %26 : i32 to vector<272x1xi32>
    %28 = arith.remsi %24, %27 : vector<272x1xi32>
    %c0_i32_17 = arith.constant 0 : i32
    %29 = vector.broadcast %c0_i32_17 : i32 to vector<272x1xi32>
    %30 = arith.cmpi ne, %28, %29 : vector<272x1xi32>
    %c0_i32_18 = arith.constant 0 : i32
    %31 = vector.broadcast %c0_i32_18 : i32 to vector<272x1xi32>
    %32 = arith.cmpi slt, %28, %31 : vector<272x1xi32>
    %c0_i32_19 = arith.constant 0 : i32
    %33 = arith.cmpi slt, %26, %c0_i32_19 : i32
    %34 = vector.broadcast %33 : i1 to vector<272x1xi1>
    %35 = vector.broadcast %34 : vector<272x1xi1> to vector<272x1xi1>
    %36 = arith.xori %32, %35 : vector<272x1xi1>
    %37 = arith.andi %36, %30 : vector<272x1xi1>
    %38 = vector.broadcast %26 : i32 to vector<272x1xi32>
    %39 = arith.addi %28, %38 : vector<272x1xi32>
    %40 = arith.select %37, %39, %28 : vector<272x1xi1>, vector<272x1xi32>
    %c15_i32 = arith.constant 15 : i32
    %41 = vector.broadcast %c15_i32 : i32 to vector<272x1xi32>
    %42 = arith.cmpi ne, %40, %41 : vector<272x1xi32>
    %43 = arith.extui %42 : vector<272x1xi1> to vector<272x1xi32>
    %44 = arith.sitofp %43 : vector<272x1xi32> to vector<272x1xf32>
    %45 = arith.truncf %44 : vector<272x1xf32> to vector<272x1xbf16>
    %46 = vector.extract_strided_slice %23 {offsets = [1, 0], sizes = [271, 128], strides = [1, 1]} : vector<272x128xbf16> to vector<271x128xbf16>
    %cst_20 = arith.constant 0.000000e+00 : bf16
    %47 = vector.broadcast %cst_20 : bf16 to vector<1x128xbf16>
    %48 = tpu.concatenate %46, %47 in 0 : vector<271x128xbf16>, vector<1x128xbf16> -> vector<272x128xbf16>
    %49 = vector.broadcast %45 : vector<272x1xbf16> to vector<272x128xbf16>
    %50 = arith.mulf %48, %49 : vector<272x128xbf16>
    %51 = vector.extract_strided_slice %23 {offsets = [0, 0], sizes = [256, 128], strides = [1, 1]} : vector<272x128xbf16> to vector<256x128xbf16>
    %52 = vector.extract_strided_slice %23 {offsets = [16, 0], sizes = [256, 128], strides = [1, 1]} : vector<272x128xbf16> to vector<256x128xbf16>
    %53 = vector.extract_strided_slice %50 {offsets = [0, 0], sizes = [256, 128], strides = [1, 1]} : vector<272x128xbf16> to vector<256x128xbf16>
    %54 = vector.extract_strided_slice %50 {offsets = [16, 0], sizes = [256, 128], strides = [1, 1]} : vector<272x128xbf16> to vector<256x128xbf16>
    %55 = tpu.concatenate %51, %53 in 1 : vector<256x128xbf16>, vector<256x128xbf16> -> vector<256x256xbf16>
    %c0_21 = arith.constant 0 : index
    %c0_22 = arith.constant 0 : index
    %56 = vector.load %arg6[%c0_21, %c0_22] : memref<256x512xbf16, #tpu.memory_space<vmem>>, vector<256x512xbf16>
    %cst_23 = arith.constant dense<0.000000e+00> : vector<256x512xf32>
    %57 = tpu.matmul %55, %56, %cst_23 {dimension_numbers = #tpu.dot_dimension_numbers<[1], [0], [0], [1], [0, 0, 1, 1], [], []>} : vector<256x256xbf16>, vector<256x512xbf16>, vector<256x512xf32> -> vector<256x512xf32>
    %58 = tpu.concatenate %52, %54 in 1 : vector<256x128xbf16>, vector<256x128xbf16> -> vector<256x256xbf16>
    %c0_24 = arith.constant 0 : index
    %c0_25 = arith.constant 0 : index
    %59 = vector.load %arg7[%c0_24, %c0_25] : memref<256x256xbf16, #tpu.memory_space<vmem>>, vector<256x256xbf16>
    %cst_26 = arith.constant dense<0.000000e+00> : vector<256x256xf32>
    %60 = tpu.matmul %58, %59, %cst_26 {dimension_numbers = #tpu.dot_dimension_numbers<[1], [0], [0], [1], [0, 0, 1, 1], [], []>} : vector<256x256xbf16>, vector<256x256xbf16>, vector<256x256xf32> -> vector<256x256xf32>
    %61 = vector.extract_strided_slice %57 {offsets = [0, 0], sizes = [256, 128], strides = [1, 1]} : vector<256x512xf32> to vector<256x128xf32>
    %62 = vector.extract_strided_slice %57 {offsets = [0, 128], sizes = [256, 128], strides = [1, 1]} : vector<256x512xf32> to vector<256x128xf32>
    %63 = vector.extract_strided_slice %57 {offsets = [0, 256], sizes = [256, 128], strides = [1, 1]} : vector<256x512xf32> to vector<256x128xf32>
    %64 = vector.extract_strided_slice %60 {offsets = [0, 0], sizes = [256, 128], strides = [1, 1]} : vector<256x256xf32> to vector<256x128xf32>
    %65 = arith.addf %63, %64 : vector<256x128xf32>
    %66 = vector.extract_strided_slice %57 {offsets = [0, 384], sizes = [256, 128], strides = [1, 1]} : vector<256x512xf32> to vector<256x128xf32>
    %67 = vector.extract_strided_slice %60 {offsets = [0, 128], sizes = [256, 128], strides = [1, 1]} : vector<256x256xf32> to vector<256x128xf32>
    %68 = arith.addf %66, %67 : vector<256x128xf32>
    %c0_27 = arith.constant 0 : index
    %c0_28 = arith.constant 0 : index
    %69 = vector.load %arg8[%c0_27, %c0_28] : memref<1x128xf32, #tpu.memory_space<vmem>>, vector<1x128xf32>
    %c0_29 = arith.constant 0 : index
    %c0_30 = arith.constant 0 : index
    %70 = vector.load %arg10[%c0_29, %c0_30] : memref<1x128xf32, #tpu.memory_space<vmem>>, vector<1x128xf32>
    %c0_31 = arith.constant 0 : index
    %c0_32 = arith.constant 0 : index
    %71 = vector.load %arg9[%c0_31, %c0_32] : memref<128x128xbf16, #tpu.memory_space<vmem>>, vector<128x128xbf16>
    %72 = vector.broadcast %69 : vector<1x128xf32> to vector<256x128xf32>
    %73 = arith.addf %61, %72 : vector<256x128xf32>
    %cst_33 = arith.constant 0.000000e+00 : f32
    %74 = vector.broadcast %cst_33 : f32 to vector<256x128xf32>
    %75 = arith.maximumf %73, %74 : vector<256x128xf32>
    %76 = arith.truncf %75 : vector<256x128xf32> to vector<256x128xbf16>
    %77 = vector.broadcast %69 : vector<1x128xf32> to vector<256x128xf32>
    %78 = arith.addf %62, %77 : vector<256x128xf32>
    %cst_34 = arith.constant 0.000000e+00 : f32
    %79 = vector.broadcast %cst_34 : f32 to vector<256x128xf32>
    %80 = arith.maximumf %78, %79 : vector<256x128xf32>
    %81 = arith.truncf %80 : vector<256x128xf32> to vector<256x128xbf16>
    %82 = vector.broadcast %69 : vector<1x128xf32> to vector<256x128xf32>
    %83 = arith.addf %65, %82 : vector<256x128xf32>
    %cst_35 = arith.constant 0.000000e+00 : f32
    %84 = vector.broadcast %cst_35 : f32 to vector<256x128xf32>
    %85 = arith.maximumf %83, %84 : vector<256x128xf32>
    %86 = arith.truncf %85 : vector<256x128xf32> to vector<256x128xbf16>
    %87 = vector.broadcast %69 : vector<1x128xf32> to vector<256x128xf32>
    %88 = arith.addf %68, %87 : vector<256x128xf32>
    %cst_36 = arith.constant 0.000000e+00 : f32
    %89 = vector.broadcast %cst_36 : f32 to vector<256x128xf32>
    %90 = arith.maximumf %88, %89 : vector<256x128xf32>
    %91 = arith.truncf %90 : vector<256x128xf32> to vector<256x128xbf16>
    %92 = tpu.concatenate %76, %81, %86, %91 in 0 : vector<256x128xbf16>, vector<256x128xbf16>, vector<256x128xbf16>, vector<256x128xbf16> -> vector<1024x128xbf16>
    %cst_37 = arith.constant dense<0.000000e+00> : vector<1024x128xf32>
    %93 = tpu.matmul %92, %71, %cst_37 {dimension_numbers = #tpu.dot_dimension_numbers<[1], [0], [0], [1], [0, 0, 1, 1], [], []>} : vector<1024x128xbf16>, vector<128x128xbf16>, vector<1024x128xf32> -> vector<1024x128xf32>
    %94 = vector.broadcast %70 : vector<1x128xf32> to vector<1024x128xf32>
    %95 = arith.addf %93, %94 : vector<1024x128xf32>
    %cst_38 = arith.constant 0.000000e+00 : f32
    %96 = vector.broadcast %cst_38 : f32 to vector<1024x128xf32>
    %97 = arith.maximumf %95, %96 : vector<1024x128xf32>
    %98 = arith.truncf %97 : vector<1024x128xf32> to vector<1024x128xbf16>
    %99 = vector.extract_strided_slice %98 {offsets = [0, 0], sizes = [256, 128], strides = [1, 1]} : vector<1024x128xbf16> to vector<256x128xbf16>
    %100 = vector.shape_cast %99 : vector<256x128xbf16> to vector<16x16x128xbf16>
    %c0_39 = arith.constant 0 : index
    %c0_40 = arith.constant 0 : index
    %c0_41 = arith.constant 0 : index
    %c0_42 = arith.constant 0 : index
    %c0_43 = arith.constant 0 : index
    %101 = vector.load %arg11[%c0_39, %c0_40, %c0_41, %c0_42, %c0_43] : memref<1x4x16x16x128xbf16, #tpu.memory_space<vmem>>, vector<1x1x16x16x128xbf16>
    %102 = vector.shape_cast %101 : vector<1x1x16x16x128xbf16> to vector<16x16x128xbf16>
    %103 = vector.shape_cast %100 : vector<16x16x128xbf16> to vector<1x1x16x16x128xbf16>
    tpu.vector_store %arg11[%c0_39, %c0_40, %c0_41, %c0_42, %c0_43], %103 {strides = array<i32>} : memref<1x4x16x16x128xbf16, #tpu.memory_space<vmem>>, vector<1x1x16x16x128xbf16>,
    %104 = vector.extract_strided_slice %98 {offsets = [256, 0], sizes = [256, 128], strides = [1, 1]} : vector<1024x128xbf16> to vector<256x128xbf16>
    %105 = vector.shape_cast %104 : vector<256x128xbf16> to vector<16x16x128xbf16>
    %c0_44 = arith.constant 0 : index
    %c1 = arith.constant 1 : index
    %c0_45 = arith.constant 0 : index
    %c0_46 = arith.constant 0 : index
    %c0_47 = arith.constant 0 : index
    %106 = vector.load %arg11[%c0_44, %c1, %c0_45, %c0_46, %c0_47] : memref<1x4x16x16x128xbf16, #tpu.memory_space<vmem>>, vector<1x1x16x16x128xbf16>
    %107 = vector.shape_cast %106 : vector<1x1x16x16x128xbf16> to vector<16x16x128xbf16>
    %108 = vector.shape_cast %105 : vector<16x16x128xbf16> to vector<1x1x16x16x128xbf16>
    tpu.vector_store %arg11[%c0_44, %c1, %c0_45, %c0_46, %c0_47], %108 {strides = array<i32>} : memref<1x4x16x16x128xbf16, #tpu.memory_space<vmem>>, vector<1x1x16x16x128xbf16>,
    %109 = vector.extract_strided_slice %98 {offsets = [512, 0], sizes = [256, 128], strides = [1, 1]} : vector<1024x128xbf16> to vector<256x128xbf16>
    %110 = vector.shape_cast %109 : vector<256x128xbf16> to vector<16x16x128xbf16>
    %c0_48 = arith.constant 0 : index
    %c2 = arith.constant 2 : index
    %c0_49 = arith.constant 0 : index
    %c0_50 = arith.constant 0 : index
    %c0_51 = arith.constant 0 : index
    %111 = vector.load %arg11[%c0_48, %c2, %c0_49, %c0_50, %c0_51] : memref<1x4x16x16x128xbf16, #tpu.memory_space<vmem>>, vector<1x1x16x16x128xbf16>
    %112 = vector.shape_cast %111 : vector<1x1x16x16x128xbf16> to vector<16x16x128xbf16>
    %113 = vector.shape_cast %110 : vector<16x16x128xbf16> to vector<1x1x16x16x128xbf16>
    tpu.vector_store %arg11[%c0_48, %c2, %c0_49, %c0_50, %c0_51], %113 {strides = array<i32>} : memref<1x4x16x16x128xbf16, #tpu.memory_space<vmem>>, vector<1x1x16x16x128xbf16>,
    %114 = vector.extract_strided_slice %98 {offsets = [768, 0], sizes = [256, 128], strides = [1, 1]} : vector<1024x128xbf16> to vector<256x128xbf16>
    %115 = vector.shape_cast %114 : vector<256x128xbf16> to vector<16x16x128xbf16>
    %c0_52 = arith.constant 0 : index
    %c3 = arith.constant 3 : index
    %c0_53 = arith.constant 0 : index
    %c0_54 = arith.constant 0 : index
    %c0_55 = arith.constant 0 : index
    %116 = vector.load %arg11[%c0_52, %c3, %c0_53, %c0_54, %c0_55] : memref<1x4x16x16x128xbf16, #tpu.memory_space<vmem>>, vector<1x1x16x16x128xbf16>
    %117 = vector.shape_cast %116 : vector<1x1x16x16x128xbf16> to vector<16x16x128xbf16>
    %118 = vector.shape_cast %115 : vector<16x16x128xbf16> to vector<1x1x16x16x128xbf16>
    tpu.vector_store %arg11[%c0_52, %c3, %c0_53, %c0_54, %c0_55], %118 {strides = array<i32>} : memref<1x4x16x16x128xbf16, #tpu.memory_space<vmem>>, vector<1x1x16x16x128xbf16>,
    return
  }
  func.func @transform_0(%arg0: i32, %arg1: i32) -> (i32, i32, i32, i32) {
    %c0_i32 = arith.constant 0 : i32
    %c0_i32_0 = arith.constant 0 : i32
    %c0_i32_1 = arith.constant 0 : i32
    return %arg0, %arg1, %c0_i32, %c0_i32_0 : i32, i32, i32, i32
  }
  func.func @transform_1(%arg0: i32, %arg1: i32) -> (i32, i32, i32, i32) {
    %c1_i32 = arith.constant 1 : i32
    %0 = arith.addi %arg1, %c1_i32 : i32
    %c16_i32 = arith.constant 16 : i32
    %1 = arith.muli %0, %c16_i32 : i32
    %c15_i32 = arith.constant 15 : i32
    %2 = arith.minsi %1, %c15_i32 : i32
    %c0_i32 = arith.constant 0 : i32
    %c0_i32_0 = arith.constant 0 : i32
    %c0_i32_1 = arith.constant 0 : i32
    return %arg0, %2, %c0_i32, %c0_i32_0 : i32, i32, i32, i32
  }
  func.func @transform_2(%arg0: i32, %arg1: i32) -> (i32, i32) {
    %c0_i32 = arith.constant 0 : i32
    %c0_i32_0 = arith.constant 0 : i32
    %c0_i32_1 = arith.constant 0 : i32
    return %c0_i32, %c0_i32_0 : i32, i32
  }
  func.func @transform_3(%arg0: i32, %arg1: i32) -> (i32, i32) {
    %c0_i32 = arith.constant 0 : i32
    %c0_i32_0 = arith.constant 0 : i32
    %c0_i32_1 = arith.constant 0 : i32
    return %c0_i32, %c0_i32_0 : i32, i32
  }
  func.func @transform_4(%arg0: i32, %arg1: i32) -> (i32, i32) {
    %c0_i32 = arith.constant 0 : i32
    %c0_i32_0 = arith.constant 0 : i32
    %c0_i32_1 = arith.constant 0 : i32
    return %c0_i32, %c0_i32_0 : i32, i32
  }
  func.func @transform_5(%arg0: i32, %arg1: i32) -> (i32, i32) {
    %c0_i32 = arith.constant 0 : i32
    %c0_i32_0 = arith.constant 0 : i32
    %c0_i32_1 = arith.constant 0 : i32
    return %c0_i32, %c0_i32_0 : i32, i32
  }
  func.func @transform_6(%arg0: i32, %arg1: i32) -> (i32, i32) {
    %c0_i32 = arith.constant 0 : i32
    %c0_i32_0 = arith.constant 0 : i32
    %c0_i32_1 = arith.constant 0 : i32
    return %c0_i32, %c0_i32_0 : i32, i32
  }
  func.func @transform_7(%arg0: i32, %arg1: i32) -> (i32, i32) {
    %c0_i32 = arith.constant 0 : i32
    %c0_i32_0 = arith.constant 0 : i32
    %c0_i32_1 = arith.constant 0 : i32
    return %c0_i32, %c0_i32_0 : i32, i32
  }
  func.func @transform_8(%arg0: i32, %arg1: i32) -> (i32, i32) {
    %c0_i32 = arith.constant 0 : i32
    %c0_i32_0 = arith.constant 0 : i32
    %c0_i32_1 = arith.constant 0 : i32
    return %c0_i32, %c0_i32_0 : i32, i32
  }
  func.func @transform_9(%arg0: i32, %arg1: i32) -> (i32, i32, i32, i32, i32) {
    %c0_i32 = arith.constant 0 : i32
    %c0_i32_0 = arith.constant 0 : i32
    %c0_i32_1 = arith.constant 0 : i32
    %c0_i32_2 = arith.constant 0 : i32
    return %arg0, %c0_i32, %arg1, %c0_i32_0, %c0_i32_1 : i32, i32, i32, i32, i32
  }
}

</mosaic_0001>

<llo_original>
// kernel: tpu_custom_call.1
$region0: #{tpu_custom_call.1}
  #allocation0 [shape = 'u32[]', space=smem, size = 0x4, offset = 0x4, fixed_abs, tag = 'smem constant byte address 0x4 - core index']
  #allocation1 [shape = 'u32[144,128]{1,0:T(1,128)}', space=vmem, size = 0x12000, scoped, tag = 'internal scratch']
  %s0 = inlined_call_operand.hbm [shape: bf16[2,16,16,512], index: 0, kind: input, shape index: {}]
  %s1 = inlined_call_operand.hbm [shape: bf16[2,16,16,512], index: 1, kind: input, shape index: {}]
  %s2 = inlined_call_operand.hbm [shape: bf16[512,128], index: 2, kind: input, shape index: {}]
  %s3 = inlined_call_operand.vmem [shape: f32[1,128], index: 3, kind: input, shape index: {}]
  %s4 = inlined_call_operand.hbm [shape: bf16[256,512], index: 4, kind: input, shape index: {}]
  %s5 = inlined_call_operand.hbm [shape: bf16[256,256], index: 5, kind: input, shape index: {}]
  %s6 = inlined_call_operand.vmem [shape: f32[1,128], index: 6, kind: input, shape index: {}]
  %s7 = inlined_call_operand.hbm [shape: bf16[128,128], index: 7, kind: input, shape index: {}]
  %s8 = inlined_call_operand.vmem [shape: f32[1,128], index: 8, kind: input, shape index: {}]
  %s9 = inlined_call_operand.hbm [shape: bf16[2,4,16,16,128], index: 9, kind: output, shape index: {}]
  %s10 = sld [smem:[#allocation0]]
  $region93: #{tpu_custom_call.1} parent=0
    _
  %s12 = ssub.s32 1, %s10
  %s13 = scalar_select 0, %s12, %s10
  $region1: #{tpu_custom_call.1} parent=0
    #allocation2 [shape = 'u8[524288]{0}', space=vmem, size = 0x80000, scoped, tag = 'input window, operand 0']
    #allocation3 [shape = 's32[2]{0}', space=sflag, size = 0x8, scoped, tag = 'scoped memory for tpu_custom_call.1']
    #allocation4 [shape = 's32[2]{0}', space=sflag, size = 0x8, scoped, tag = 'scoped memory for tpu_custom_call.1']
    #allocation5 [shape = 'u8[32768]{0}', space=vmem, size = 0x8000, scoped, tag = 'input window, operand 1']
    #allocation6 [shape = 's32[2]{0}', space=sflag, size = 0x8, scoped, tag = 'scoped memory for tpu_custom_call.1']
    #allocation7 [shape = 'u8[131072]{0}', space=vmem, size = 0x20000, scoped, tag = 'input window, operand 2, single buffered']
    #allocation8 [shape = 'u8[262144]{0}', space=vmem, size = 0x40000, scoped, tag = 'input window, operand 4, single buffered']
    #allocation9 [shape = 's32[1]{0}', space=sflag, size = 0x4, scoped, tag = 'scoped memory for tpu_custom_call.1']
    #allocation10 [shape = 'u8[131072]{0}', space=vmem, size = 0x20000, scoped, tag = 'input window, operand 5, single buffered']
    #allocation11 [shape = 'u8[32768]{0}', space=vmem, size = 0x8000, scoped, tag = 'input window, operand 7, single buffered']
    #allocation12 [shape = 's32[1]{0}', space=sflag, size = 0x4, scoped, tag = 'scoped memory for tpu_custom_call.1']
    #allocation13 [shape = 'u8[524288]{0}', space=vmem, size = 0x80000, scoped, tag = 'output window, operand 0']
    %14 = vsyncpa [#allocation3], 0
    %s15 = scalar_lea.sflag [#allocation3], 1
    %16 = vsyncpa %s15, 0
    %17 = vsyncpa [#allocation6], 0
    %s18 = scalar_lea.sflag [#allocation6], 1
    %19 = vsyncpa %s18, 0
    %20 = vsyncpa [#allocation9], 0
    %21 = vsyncpa [#allocation12], 0
    %22 = vsyncpa [#allocation4], 0
    %s23 = scalar_lea.sflag [#allocation4], 1
    %24 = vsyncpa %s23, 0
    loop: start=0, step=1, limit=4
    $region2: #{tpu_custom_call.1} parent=1 // loop_pre_header
      _
    $region3: #{tpu_custom_call.1} parent=1 // loop_header
      %s26 = sphi 0, %s30
      %p27 = scmp.ge.s32.totalorder %s26, 4
      %s33 = sphi 0, %s45
      %s34 = sphi 0, %s41
      %s35 = sphi 0, %s33
      %s36 = sphi 0, %s34
      %s37 = sphi 0, %s35
      %s38 = sphi 0, %s36
      %s50 = sphi 0, %s52
      %s53 = sphi 0, %s50
      %s54 = sphi 0, %s53
      %s70 = sphi 0, %s54
      %s86 = sphi 0, %s88
      %s89 = sphi 0, %s86
      %s90 = sphi 0, %s89
      %s106 = sphi 0, %s90
      %s110 = sphi 0, %s110
      %s112 = sphi 0, %s110
      %s113 = sphi 0, %s112
      %s127 = sphi 0, %s113
      %s131 = sphi 0, %s131
      %s133 = sphi 0, %s131
      %s134 = sphi 0, %s133
      %s148 = sphi 0, %s134
      %s152 = sphi 0, %s152
      %s154 = sphi 0, %s152
      %s155 = sphi 0, %s154
      %s169 = sphi 0, %s155
      %s173 = sphi 0, %s173
      %s175 = sphi 0, %s173
      %s176 = sphi 0, %s175
      %s190 = sphi 0, %s176
      %s194 = sphi 0, %s194
      %s196 = sphi 0, %s194
      %s197 = sphi 0, %s196
      %s211 = sphi 0, %s197
      %s215 = sphi 0, %s215
      %s217 = sphi 0, %s215
      %s218 = sphi 0, %s217
      %s232 = sphi 0, %s218
      %s236 = sphi 0, %s236
      %s238 = sphi 0, %s236
      %s239 = sphi 0, %s238
      %s253 = sphi 0, %s239
      %s261 = sphi 0, %s263
      %s264 = sphi 0, %s261
      %s265 = sphi 0, %s264
      %s281 = sphi 0, %s265
    $region4: #{tpu_custom_call.1} parent=1 // loop_header_branch
      %29 = sbr.rel (%p27) target = $region8
    $region5: #{tpu_custom_call.1} parent=1 // loop_body
      %s31 = ssub.s32 %s26, 1
      %s32 = ssub.s32 %s26, 2
      %s39 = sadd.s32 1, %s34
      %p40 = scmp.ge.s32.totalorder %s39, 1
      %s41 = scalar_select %p40, 0, %s39
      %s42 = sadd.s32 1, %s33
      %s43 = scalar_select %p40, %s42, %s33
      %p44 = scmp.ge.s32.totalorder %s43, 2
      %s45 = scalar_select %p44, 0, %s43
      %s46 = ssub.s32 %s33, %s45
      %s47 = ssub.s32 %s34, %s41
      %s48 = sor.u32 %s46, %s47
      %p49 = scmp.eq.s32.totalorder %s48, 0
      %s51 = sadd.s32 %s50, 1
      %s52 = scalar_select %p49, %s50, %s51
      %p55 = pneg %p49
      %p56 = scmp.eq.s32.totalorder %s26, 1
      %p57 = por %p55, %p56
      %p58 = scmp.ne.s32.totalorder %s50, %s53
      %p59 = scmp.eq.s32.totalorder %s26, 0
      %p60 = por %p58, %p59
      %p61 = scmp.ne.s32.totalorder %s50, %s53
      %p62 = scmp.eq.s32.totalorder %s31, 1
      %p63 = por %p61, %p62
      %p64 = scmp.ne.s32.totalorder %s53, %s54
      %p65 = scmp.eq.s32.totalorder %s31, 0
      %p66 = por %p64, %p65
      %p67 = scmp.ne.s32.totalorder %s53, %s54
      %p68 = scmp.eq.s32.totalorder %s32, 1
      %p69 = por %p67, %p68
      %p71 = scmp.ne.s32.totalorder %s54, %s70
      %p72 = scmp.eq.s32.totalorder %s32, 0
      %p73 = por %p71, %p72
      %s74 = sadd.s32 %s34, 1
      %s75 = smul.u32 %s74, 16
      %p76 = scmp.lt.s32.totalorder %s75, 15
      %s77 = scalar_select %p76, %s75, 15
      %s78 = sadd.s32 %s41, 1
      %s79 = smul.u32 %s78, 16
      %p80 = scmp.lt.s32.totalorder %s79, 15
      %s81 = scalar_select %p80, %s79, 15
      %s82 = ssub.s32 %s33, %s45
      %s83 = ssub.s32 %s77, %s81
      %s84 = sor.u32 %s82, %s83
      %p85 = scmp.eq.s32.totalorder %s84, 0
      %s87 = sadd.s32 %s86, 1
      %s88 = scalar_select %p85, %s86, %s87
      %p91 = pneg %p85
      %p92 = scmp.eq.s32.totalorder %s26, 1
      %p93 = por %p91, %p92
      %p94 = scmp.ne.s32.totalorder %s86, %s89
      %p95 = scmp.eq.s32.totalorder %s26, 0
      %p96 = por %p94, %p95
      %p97 = scmp.ne.s32.totalorder %s86, %s89
      %p98 = scmp.eq.s32.totalorder %s31, 1
      %p99 = por %p97, %p98
      %p100 = scmp.ne.s32.totalorder %s89, %s90
      %p101 = scmp.eq.s32.totalorder %s31, 0
      %p102 = por %p100, %p101
      %p103 = scmp.ne.s32.totalorder %s89, %s90
      %p104 = scmp.eq.s32.totalorder %s32, 1
      %p105 = por %p103, %p104
      %p107 = scmp.ne.s32.totalorder %s90, %s106
      %p108 = scmp.eq.s32.totalorder %s32, 0
      %p109 = por %p107, %p108
      %s111 = sadd.s32 %s110, 1
      %p114 = scmp.eq.s32.totalorder %s26, 1
      %p115 = scmp.ne.s32.totalorder %s110, %s112
      %p116 = scmp.eq.s32.totalorder %s26, 0
      %p117 = por %p115, %p116
      %p118 = scmp.ne.s32.totalorder %s110, %s112
      %p119 = scmp.eq.s32.totalorder %s31, 1
      %p120 = por %p118, %p119
      %p121 = scmp.ne.s32.totalorder %s112, %s113
      %p122 = scmp.eq.s32.totalorder %s31, 0
      %p123 = por %p121, %p122
      %p124 = scmp.ne.s32.totalorder %s112, %s113
      %p125 = scmp.eq.s32.totalorder %s32, 1
      %p126 = por %p124, %p125
      %p128 = scmp.ne.s32.totalorder %s113, %s127
      %p129 = scmp.eq.s32.totalorder %s32, 0
      %p130 = por %p128, %p129
      %s132 = sadd.s32 %s131, 1
      %p135 = scmp.eq.s32.totalorder %s26, 1
      %p136 = scmp.ne.s32.totalorder %s131, %s133
      %p137 = scmp.eq.s32.totalorder %s26, 0
      %p138 = por %p136, %p137
      %p139 = scmp.ne.s32.totalorder %s131, %s133
      %p140 = scmp.eq.s32.totalorder %s31, 1
      %p141 = por %p139, %p140
      %p142 = scmp.ne.s32.totalorder %s133, %s134
      %p143 = scmp.eq.s32.totalorder %s31, 0
      %p144 = por %p142, %p143
      %p145 = scmp.ne.s32.totalorder %s133, %s134
      %p146 = scmp.eq.s32.totalorder %s32, 1
      %p147 = por %p145, %p146
      %p149 = scmp.ne.s32.totalorder %s134, %s148
      %p150 = scmp.eq.s32.totalorder %s32, 0
      %p151 = por %p149, %p150
      %s153 = sadd.s32 %s152, 1
      %p156 = scmp.eq.s32.totalorder %s26, 1
      %p157 = scmp.ne.s32.totalorder %s152, %s154
      %p158 = scmp.eq.s32.totalorder %s26, 0
      %p159 = por %p157, %p158
      %p160 = scmp.ne.s32.totalorder %s152, %s154
      %p161 = scmp.eq.s32.totalorder %s31, 1
      %p162 = por %p160, %p161
      %p163 = scmp.ne.s32.totalorder %s154, %s155
      %p164 = scmp.eq.s32.totalorder %s31, 0
      %p165 = por %p163, %p164
      %p166 = scmp.ne.s32.totalorder %s154, %s155
      %p167 = scmp.eq.s32.totalorder %s32, 1
      %p168 = por %p166, %p167
      %p170 = scmp.ne.s32.totalorder %s155, %s169
      %p171 = scmp.eq.s32.totalorder %s32, 0
      %p172 = por %p170, %p171
      %s174 = sadd.s32 %s173, 1
      %p177 = scmp.eq.s32.totalorder %s26, 1
      %p178 = scmp.ne.s32.totalorder %s173, %s175
      %p179 = scmp.eq.s32.totalorder %s26, 0
      %p180 = por %p178, %p179
      %p181 = scmp.ne.s32.totalorder %s173, %s175
      %p182 = scmp.eq.s32.totalorder %s31, 1
      %p183 = por %p181, %p182
      %p184 = scmp.ne.s32.totalorder %s175, %s176
      %p185 = scmp.eq.s32.totalorder %s31, 0
      %p186 = por %p184, %p185
      %p187 = scmp.ne.s32.totalorder %s175, %s176
      %p188 = scmp.eq.s32.totalorder %s32, 1
      %p189 = por %p187, %p188
      %p191 = scmp.ne.s32.totalorder %s176, %s190
      %p192 = scmp.eq.s32.totalorder %s32, 0
      %p193 = por %p191, %p192
      %s195 = sadd.s32 %s194, 1
      %p198 = scmp.eq.s32.totalorder %s26, 1
      %p199 = scmp.ne.s32.totalorder %s194, %s196
      %p200 = scmp.eq.s32.totalorder %s26, 0
      %p201 = por %p199, %p200
      %p202 = scmp.ne.s32.totalorder %s194, %s196
      %p203 = scmp.eq.s32.totalorder %s31, 1
      %p204 = por %p202, %p203
      %p205 = scmp.ne.s32.totalorder %s196, %s197
      %p206 = scmp.eq.s32.totalorder %s31, 0
      %p207 = por %p205, %p206
      %p208 = scmp.ne.s32.totalorder %s196, %s197
      %p209 = scmp.eq.s32.totalorder %s32, 1
      %p210 = por %p208, %p209
      %p212 = scmp.ne.s32.totalorder %s197, %s211
      %p213 = scmp.eq.s32.totalorder %s32, 0
      %p214 = por %p212, %p213
      %s216 = sadd.s32 %s215, 1
      %p219 = scmp.eq.s32.totalorder %s26, 1
      %p220 = scmp.ne.s32.totalorder %s215, %s217
      %p221 = scmp.eq.s32.totalorder %s26, 0
      %p222 = por %p220, %p221
      %p223 = scmp.ne.s32.totalorder %s215, %s217
      %p224 = scmp.eq.s32.totalorder %s31, 1
      %p225 = por %p223, %p224
      %p226 = scmp.ne.s32.totalorder %s217, %s218
      %p227 = scmp.eq.s32.totalorder %s31, 0
      %p228 = por %p226, %p227
      %p229 = scmp.ne.s32.totalorder %s217, %s218
      %p230 = scmp.eq.s32.totalorder %s32, 1
      %p231 = por %p229, %p230
      %p233 = scmp.ne.s32.totalorder %s218, %s232
      %p234 = scmp.eq.s32.totalorder %s32, 0
      %p235 = por %p233, %p234
      %s237 = sadd.s32 %s236, 1
      %p240 = scmp.eq.s32.totalorder %s26, 1
      %p241 = scmp.ne.s32.totalorder %s236, %s238
      %p242 = scmp.eq.s32.totalorder %s26, 0
      %p243 = por %p241, %p242
      %p244 = scmp.ne.s32.totalorder %s236, %s238
      %p245 = scmp.eq.s32.totalorder %s31, 1
      %p246 = por %p244, %p245
      %p247 = scmp.ne.s32.totalorder %s238, %s239
      %p248 = scmp.eq.s32.totalorder %s31, 0
      %p249 = por %p247, %p248
      %p250 = scmp.ne.s32.totalorder %s238, %s239
      %p251 = scmp.eq.s32.totalorder %s32, 1
      %p252 = por %p250, %p251
      %p254 = scmp.ne.s32.totalorder %s239, %s253
      %p255 = scmp.eq.s32.totalorder %s32, 0
      %p256 = por %p254, %p255
      %s257 = ssub.s32 %s33, %s45
      %s258 = ssub.s32 %s34, %s41
      %s259 = sor.u32 %s257, %s258
      %p260 = scmp.eq.s32.totalorder %s259, 0
      %s262 = sadd.s32 %s261, 1
      %s263 = scalar_select %p260, %s261, %s262
      %p266 = pneg %p260
      %p267 = scmp.eq.s32.totalorder %s26, 1
      %p268 = por %p266, %p267
      %p269 = scmp.ne.s32.totalorder %s261, %s264
      %p270 = scmp.eq.s32.totalorder %s26, 0
      %p271 = por %p269, %p270
      %p272 = scmp.ne.s32.totalorder %s261, %s264
      %p273 = scmp.eq.s32.totalorder %s31, 1
      %p274 = por %p272, %p273
      %p275 = scmp.ne.s32.totalorder %s264, %s265
      %p276 = scmp.eq.s32.totalorder %s31, 0
      %p277 = por %p275, %p276
      %p278 = scmp.ne.s32.totalorder %s264, %s265
      %p279 = scmp.eq.s32.totalorder %s32, 1
      %p280 = por %p278, %p279
      %p282 = scmp.ne.s32.totalorder %s265, %s281
      %p283 = scmp.eq.s32.totalorder %s32, 0
      %p284 = por %p282, %p283
      %p285 = scmp.le.s32.totalorder 1, %s26
      %p286 = scmp.lt.s32.totalorder %s26, 3
      %p287 = pnand %p285, %p286
      %p288 = pneg %p287
      // Predicated region
      $region9: #{tpu_custom_call.1} parent=5 // pred_check
        _
      $region10: #{tpu_custom_call.1} parent=5 // pred_check_branch
        %290 = sbr.rel (%p287) target = $region12
      $region11: #{tpu_custom_call.1} parent=5 // pred_region
        %s291 = ssub.s32 %s26, 1
        // Predicated region
        $region13: #{tpu_custom_call.1} parent=11 // pred_check
          %p292 = pneg %p123
        $region14: #{tpu_custom_call.1} parent=11 // pred_check_branch
          %294 = sbr.rel (%p292) target = $region16
        $region15: #{tpu_custom_call.1} parent=11 // pred_region
          %s296 = ssub.s32 4096, 4096
          %297 = vsyncadd [#allocation6], %s296
          %s298 = sshll.u32 [#allocation7], 4
          %s299 = int_to_ptr.vmem [resolvable:$true] %s298
          %304 = dma.hbm_to_vmem [thread:$0]  %s2, 4096, %s299, [#allocation6], 64, 64, 4
        $region16: #{tpu_custom_call.1} parent=11 // pred_fallthru
          _
        // Predicated region
        $region17: #{tpu_custom_call.1} parent=11 // pred_check
          %p305 = pneg %p144
        $region18: #{tpu_custom_call.1} parent=11 // pred_check_branch
          %307 = sbr.rel (%p305) target = $region20
        $region19: #{tpu_custom_call.1} parent=11 // pred_region
          _
        $region20: #{tpu_custom_call.1} parent=11 // pred_fallthru
          _
        // Predicated region
        $region21: #{tpu_custom_call.1} parent=11 // pred_check
          %p308 = pneg %p165
        $region22: #{tpu_custom_call.1} parent=11 // pred_check_branch
          %310 = sbr.rel (%p308) target = $region24
        $region23: #{tpu_custom_call.1} parent=11 // pred_region
          %s312 = ssub.s32 8192, 8192
          %313 = vsyncadd [#allocation9], %s312
          %s314 = sshll.u32 [#allocation8], 4
          %s315 = int_to_ptr.vmem [resolvable:$true] %s314
          %320 = dma.hbm_to_vmem [thread:$0]  %s4, 8192, %s315, [#allocation9], 256, 256, 16
        $region24: #{tpu_custom_call.1} parent=11 // pred_fallthru
          _
        // Predicated region
        $region25: #{tpu_custom_call.1} parent=11 // pred_check
          %p321 = pneg %p186
        $region26: #{tpu_custom_call.1} parent=11 // pred_check_branch
          %323 = sbr.rel (%p321) target = $region28
        $region27: #{tpu_custom_call.1} parent=11 // pred_region
          %s325 = ssub.s32 4096, 4096
          %326 = vsyncadd [#allocation9], %s325
          %s327 = sshll.u32 [#allocation10], 4
          %s328 = int_to_ptr.vmem [resolvable:$true] %s327
          %333 = dma.hbm_to_vmem [thread:$0]  %s5, 4096, %s328, [#allocation9], 128, 128, 8
        $region28: #{tpu_custom_call.1} parent=11 // pred_fallthru
          _
        // Predicated region
        $region29: #{tpu_custom_call.1} parent=11 // pred_check
          %p334 = pneg %p207
        $region30: #{tpu_custom_call.1} parent=11 // pred_check_branch
          %336 = sbr.rel (%p334) target = $region32
        $region31: #{tpu_custom_call.1} parent=11 // pred_region
          _
        $region32: #{tpu_custom_call.1} parent=11 // pred_fallthru
          _
        // Predicated region
        $region33: #{tpu_custom_call.1} parent=11 // pred_check
          %p337 = pneg %p228
        $region34: #{tpu_custom_call.1} parent=11 // pred_check_branch
          %339 = sbr.rel (%p337) target = $region36
        $region35: #{tpu_custom_call.1} parent=11 // pred_region
          %s341 = ssub.s32 1024, 1024
          %342 = vsyncadd [#allocation12], %s341
          %s343 = sshll.u32 [#allocation11], 4
          %s344 = int_to_ptr.vmem [resolvable:$true] %s343
          %349 = dma.hbm_to_vmem [thread:$0]  %s7, 1024, %s344, [#allocation12], 64, 64, 4
        $region36: #{tpu_custom_call.1} parent=11 // pred_fallthru
          _
        // Predicated region
        $region37: #{tpu_custom_call.1} parent=11 // pred_check
          %p350 = pneg %p249
        $region38: #{tpu_custom_call.1} parent=11 // pred_check_branch
          %352 = sbr.rel (%p350) target = $region40
        $region39: #{tpu_custom_call.1} parent=11 // pred_region
          _
        $region40: #{tpu_custom_call.1} parent=11 // pred_fallthru
          _
      $region12: #{tpu_custom_call.1} parent=5 // pred_fallthru
        _
      %p353 = scmp.lt.s32.totalorder %s26, 2
      // Predicated region
      $region41: #{tpu_custom_call.1} parent=5 // pred_check
        %p354 = pneg %p353
      $region42: #{tpu_custom_call.1} parent=5 // pred_check_branch
        %356 = sbr.rel (%p354) target = $region44
      $region43: #{tpu_custom_call.1} parent=5 // pred_region
        // Predicated region
        $region45: #{tpu_custom_call.1} parent=43 // pred_check
          %p357 = pneg %p60
        $region46: #{tpu_custom_call.1} parent=43 // pred_check_branch
          %359 = sbr.rel (%p357) target = $region48
        $region47: #{tpu_custom_call.1} parent=43 // pred_region
          %s360 = sand.u32 %s50, 1
          %s361 = scalar_lea.sflag [#allocation3], %s360
          %s362 = sand.u32 %s50, 1
          %s363 = smul.addr %s362, 512
          %s364 = scalar_lea.vmem [#allocation2], %s363
          %s365 = smul.u32 16, %s34
          %s367 = ssub.s32 8192, 8192
          %368 = vsyncadd %s361, %s367
          %s369 = smul.addr %s365, 8
          %s370 = smul.addr %s33, 128
          %s371 = sadd.s32 %s369, %s370
          %s372 = smul.addr %s371, 64
          %s373 = scalar_lea.hbm %s0, %s372
          %s374 = sshll.u32 %s364, 4
          %s375 = int_to_ptr.vmem [resolvable:$true] %s374
          %380 = dma.hbm_to_vmem [thread:$0]  %s373, 8192, %s375, %s361, 256, 256, 16
        $region48: #{tpu_custom_call.1} parent=43 // pred_fallthru
          _
        // Predicated region
        $region49: #{tpu_custom_call.1} parent=43 // pred_check
          %p381 = pneg %p96
        $region50: #{tpu_custom_call.1} parent=43 // pred_check_branch
          %383 = sbr.rel (%p381) target = $region52
        $region51: #{tpu_custom_call.1} parent=43 // pred_region
          %s384 = sand.u32 %s26, 1
          %s385 = scalar_lea.sflag [#allocation6], %s384
          %s386 = sand.u32 %s86, 1
          %s387 = smul.addr %s386, 32
          %s388 = scalar_lea.vmem [#allocation5], %s387
          %s389 = sadd.s32 %s34, 1
          %s390 = smul.u32 %s389, 16
          %p391 = scmp.lt.s32.totalorder %s390, 15
          %s392 = scalar_select %p391, %s390, 15
          %s394 = ssub.s32 512, 512
          %395 = vsyncadd %s385, %s394
          %s396 = smul.addr %s392, 8
          %s397 = smul.addr %s33, 128
          %s398 = sadd.s32 %s396, %s397
          %s399 = smul.addr %s398, 64
          %s400 = scalar_lea.hbm %s1, %s399
          %s401 = sshll.u32 %s388, 4
          %s402 = int_to_ptr.vmem [resolvable:$true] %s401
          %407 = dma.hbm_to_vmem [thread:$0]  %s400, 512, %s402, %s385, 256, 256, 16
        $region52: #{tpu_custom_call.1} parent=43 // pred_fallthru
          _
      $region44: #{tpu_custom_call.1} parent=5 // pred_fallthru
        _
      %p408 = scmp.le.s32.totalorder 1, %s26
      %p409 = scmp.lt.s32.totalorder %s26, 3
      %p410 = pnand %p408, %p409
      %p411 = pneg %p410
      // Predicated region
      $region53: #{tpu_custom_call.1} parent=5 // pred_check
        _
      $region54: #{tpu_custom_call.1} parent=5 // pred_check_branch
        %413 = sbr.rel (%p410) target = $region56
      $region55: #{tpu_custom_call.1} parent=5 // pred_region
        %s414 = ssub.s32 %s26, 1
        %s415 = sand.u32 %s53, 1
        %s416 = scalar_lea.sflag [#allocation3], %s415
        %s417 = sand.u32 %s53, 1
        %s418 = smul.addr %s417, 512
        %s419 = scalar_lea.vmem [#allocation2], %s418
        // Predicated region
        $region57: #{tpu_custom_call.1} parent=55 // pred_check
          %p420 = pneg %p66
        $region58: #{tpu_custom_call.1} parent=55 // pred_check_branch
          %422 = sbr.rel (%p420) target = $region60
        $region59: #{tpu_custom_call.1} parent=55 // pred_region
          %423 = dma.done %s416, 8192
        $region60: #{tpu_custom_call.1} parent=55 // pred_fallthru
          _
        %s424 = sand.u32 %s31, 1
        %s425 = scalar_lea.sflag [#allocation6], %s424
        %s426 = sand.u32 %s89, 1
        %s427 = smul.addr %s426, 32
        %s428 = scalar_lea.vmem [#allocation5], %s427
        // Predicated region
        $region61: #{tpu_custom_call.1} parent=55 // pred_check
          %p429 = pneg %p102
        $region62: #{tpu_custom_call.1} parent=55 // pred_check_branch
          %431 = sbr.rel (%p429) target = $region64
        $region63: #{tpu_custom_call.1} parent=55 // pred_region
          %432 = dma.done %s425, 512
        $region64: #{tpu_custom_call.1} parent=55 // pred_fallthru
          _
        // Predicated region
        $region65: #{tpu_custom_call.1} parent=55 // pred_check
          %p433 = pneg %p123
        $region66: #{tpu_custom_call.1} parent=55 // pred_check_branch
          %435 = sbr.rel (%p433) target = $region68
        $region67: #{tpu_custom_call.1} parent=55 // pred_region
          %436 = dma.done [#allocation6], 4096
        $region68: #{tpu_custom_call.1} parent=55 // pred_fallthru
          _
        // Predicated region
        $region69: #{tpu_custom_call.1} parent=55 // pred_check
          %p437 = pneg %p165
        $region70: #{tpu_custom_call.1} parent=55 // pred_check_branch
          %439 = sbr.rel (%p437) target = $region72
        $region71: #{tpu_custom_call.1} parent=55 // pred_region
          %440 = dma.done [#allocation9], 8192
        $region72: #{tpu_custom_call.1} parent=55 // pred_fallthru
          _
        // Predicated region
        $region73: #{tpu_custom_call.1} parent=55 // pred_check
          %p441 = pneg %p186
        $region74: #{tpu_custom_call.1} parent=55 // pred_check_branch
          %443 = sbr.rel (%p441) target = $region76
        $region75: #{tpu_custom_call.1} parent=55 // pred_region
          %444 = dma.done [#allocation9], 4096
        $region76: #{tpu_custom_call.1} parent=55 // pred_fallthru
          _
        // Predicated region
        $region77: #{tpu_custom_call.1} parent=55 // pred_check
          %p445 = pneg %p228
        $region78: #{tpu_custom_call.1} parent=55 // pred_check_branch
          %447 = sbr.rel (%p445) target = $region80
        $region79: #{tpu_custom_call.1} parent=55 // pred_region
          %448 = dma.done [#allocation12], 1024
        $region80: #{tpu_custom_call.1} parent=55 // pred_fallthru
          _
        %s449 = sand.u32 %s53, 1
        %s450 = scalar_lea.sflag [#allocation3], %s449
        %s451 = sand.u32 %s53, 1
        %s452 = smul.addr %s451, 512
        %s453 = scalar_lea.vmem [#allocation2], %s452
        %p454 = pneg %p66
        %p455 = pneg %p63
        %s456 = sand.u32 %s31, 1
        %s457 = scalar_lea.sflag [#allocation6], %s456
        %s458 = sand.u32 %s89, 1
        %s459 = smul.addr %s458, 32
        %s460 = scalar_lea.vmem [#allocation5], %s459
        %p461 = pneg %p102
        %p462 = pneg %p99
        %p463 = pneg %p123
        %p464 = pneg %p120
        %p465 = pneg %p144
        %p466 = pneg %p141
        %p467 = pneg %p165
        %p468 = pneg %p162
        %p469 = pneg %p186
        %p470 = pneg %p183
        %p471 = pneg %p207
        %p472 = pneg %p204
        %p473 = pneg %p228
        %p474 = pneg %p225
        %p475 = pneg %p249
        %p476 = pneg %p246
        %p477 = pneg %p277
        %p478 = pneg %p274
        %s479 = sand.u32 %s264, 1
        %s480 = scalar_lea.sflag [#allocation4], %s479
        %s481 = sand.u32 %s264, 1
        %s482 = smul.addr %s481, 512
        %s483 = scalar_lea.vmem [#allocation13], %s482
        %s484 = smul.u32 16, %s36
        %s485 = sadd.s32 %s36, 1
        %s486 = smul.u32 %s485, 16
        %p487 = scmp.lt.s32.totalorder %s486, 15
        %s488 = scalar_select %p487, %s486, 15
        %s489 = smul.u32 16, %s36
        %v491 = vld [vmem:[#allocation7] sm:$0xf]
        %v492 = vld [vmem:[#allocation7 + $0x4] sm:$0xf]
        %v493 = vld [vmem:[#allocation7 + $0x8] sm:$0xf]
        %v494 = vld [vmem:[#allocation7 + $0xc] sm:$0xf]
        %v495 = vld [vmem:[#allocation7 + $0x10] sm:$0xf]
        %v496 = vld [vmem:[#allocation7 + $0x14] sm:$0xf]
        %v497 = vld [vmem:[#allocation7 + $0x18] sm:$0xf]
        %v498 = vld [vmem:[#allocation7 + $0x1c] sm:$0xf]
        %v499 = vld [vmem:[#allocation7 + $0x20] sm:$0xf]
        %v500 = vld [vmem:[#allocation7 + $0x24] sm:$0xf]
        %v501 = vld [vmem:[#allocation7 + $0x28] sm:$0xf]
        %v502 = vld [vmem:[#allocation7 + $0x2c] sm:$0xf]
        %v503 = vld [vmem:[#allocation7 + $0x30] sm:$0xf]
        %v504 = vld [vmem:[#allocation7 + $0x34] sm:$0xf]
        %v505 = vld [vmem:[#allocation7 + $0x38] sm:$0xf]
        %v506 = vld [vmem:[#allocation7 + $0x3c] sm:$0xf]
        %v507 = vld [vmem:[#allocation7 + $0x40] sm:$0xf]
        %v508 = vld [vmem:[#allocation7 + $0x44] sm:$0xf]
        %v509 = vld [vmem:[#allocation7 + $0x48] sm:$0xf]
        %v510 = vld [vmem:[#allocation7 + $0x4c] sm:$0xf]
        %v511 = vld [vmem:[#allocation7 + $0x50] sm:$0xf]
        %v512 = vld [vmem:[#allocation7 + $0x54] sm:$0xf]
        %v513 = vld [vmem:[#allocation7 + $0x58] sm:$0xf]
        %v514 = vld [vmem:[#allocation7 + $0x5c] sm:$0xf]
        %v515 = vld [vmem:[#allocation7 + $0x60] sm:$0xf]
        %v516 = vld [vmem:[#allocation7 + $0x64] sm:$0xf]
        %v517 = vld [vmem:[#allocation7 + $0x68] sm:$0xf]
        %v518 = vld [vmem:[#allocation7 + $0x6c] sm:$0xf]
        %v519 = vld [vmem:[#allocation7 + $0x70] sm:$0xf]
        %v520 = vld [vmem:[#allocation7 + $0x74] sm:$0xf]
        %v521 = vld [vmem:[#allocation7 + $0x78] sm:$0xf]
        %v522 = vld [vmem:[#allocation7 + $0x7c] sm:$0xf]
        %v523 = vld [vmem:[#allocation7 + $0x80] sm:$0xf]
        %v524 = vld [vmem:[#allocation7 + $0x84] sm:$0xf]
        %v525 = vld [vmem:[#allocation7 + $0x88] sm:$0xf]
        %v526 = vld [vmem:[#allocation7 + $0x8c] sm:$0xf]
        %v527 = vld [vmem:[#allocation7 + $0x90] sm:$0xf]
        %v528 = vld [vmem:[#allocation7 + $0x94] sm:$0xf]
        %v529 = vld [vmem:[#allocation7 + $0x98] sm:$0xf]
        %v530 = vld [vmem:[#allocation7 + $0x9c] sm:$0xf]
        %v531 = vld [vmem:[#allocation7 + $0xa0] sm:$0xf]
        %v532 = vld [vmem:[#allocation7 + $0xa4] sm:$0xf]
        %v533 = vld [vmem:[#allocation7 + $0xa8] sm:$0xf]
        %v534 = vld [vmem:[#allocation7 + $0xac] sm:$0xf]
        %v535 = vld [vmem:[#allocation7 + $0xb0] sm:$0xf]
        %v536 = vld [vmem:[#allocation7 + $0xb4] sm:$0xf]
        %v537 = vld [vmem:[#allocation7 + $0xb8] sm:$0xf]
        %v538 = vld [vmem:[#allocation7 + $0xbc] sm:$0xf]
        %v539 = vld [vmem:[#allocation7 + $0xc0] sm:$0xf]
        %v540 = vld [vmem:[#allocation7 + $0xc4] sm:$0xf]
        %v541 = vld [vmem:[#allocation7 + $0xc8] sm:$0xf]
        %v542 = vld [vmem:[#allocation7 + $0xcc] sm:$0xf]
        %v543 = vld [vmem:[#allocation7 + $0xd0] sm:$0xf]
        %v544 = vld [vmem:[#allocation7 + $0xd4] sm:$0xf]
        %v545 = vld [vmem:[#allocation7 + $0xd8] sm:$0xf]
        %v546 = vld [vmem:[#allocation7 + $0xdc] sm:$0xf]
        %v547 = vld [vmem:[#allocation7 + $0xe0] sm:$0xf]
        %v548 = vld [vmem:[#allocation7 + $0xe4] sm:$0xf]
        %v549 = vld [vmem:[#allocation7 + $0xe8] sm:$0xf]
        %v550 = vld [vmem:[#allocation7 + $0xec] sm:$0xf]
        %v551 = vld [vmem:[#allocation7 + $0xf0] sm:$0xf]
        %v552 = vld [vmem:[#allocation7 + $0xf4] sm:$0xf]
        %v553 = vld [vmem:[#allocation7 + $0xf8] sm:$0xf]
        %v554 = vld [vmem:[#allocation7 + $0xfc] sm:$0xf]
        %v555 = vld [vmem:[%s3] sm:$0x1]
        %v556 = vld [vmem:[%s419] sm:$0xff]
        %v557 = vld [vmem:[%s419 + $0x8] sm:$0xff]
        %v558 = vld [vmem:[%s419 + $0x10] sm:$0xff]
        %v559 = vld [vmem:[%s419 + $0x18] sm:$0xff]
        %v560 = vld [vmem:[%s419 + $0x20] sm:$0xff]
        %v561 = vld [vmem:[%s419 + $0x28] sm:$0xff]
        %v562 = vld [vmem:[%s419 + $0x30] sm:$0xff]
        %v563 = vld [vmem:[%s419 + $0x38] sm:$0xff]
        %v564 = vld [vmem:[%s419 + $0x40] sm:$0xff]
        %v565 = vld [vmem:[%s419 + $0x48] sm:$0xff]
        %v566 = vld [vmem:[%s419 + $0x50] sm:$0xff]
        %v567 = vld [vmem:[%s419 + $0x58] sm:$0xff]
        %v568 = vld [vmem:[%s419 + $0x60] sm:$0xff]
        %v569 = vld [vmem:[%s419 + $0x68] sm:$0xff]
        %v570 = vld [vmem:[%s419 + $0x70] sm:$0xff]
        %v571 = vld [vmem:[%s419 + $0x78] sm:$0xff]
        %v572 = vld [vmem:[%s419 + $0x80] sm:$0xff]
        %v573 = vld [vmem:[%s419 + $0x88] sm:$0xff]
        %v574 = vld [vmem:[%s419 + $0x90] sm:$0xff]
        %v575 = vld [vmem:[%s419 + $0x98] sm:$0xff]
        %v576 = vld [vmem:[%s419 + $0xa0] sm:$0xff]
        %v577 = vld [vmem:[%s419 + $0xa8] sm:$0xff]
        %v578 = vld [vmem:[%s419 + $0xb0] sm:$0xff]
        %v579 = vld [vmem:[%s419 + $0xb8] sm:$0xff]
        %v580 = vld [vmem:[%s419 + $0xc0] sm:$0xff]
        %v581 = vld [vmem:[%s419 + $0xc8] sm:$0xff]
        %v582 = vld [vmem:[%s419 + $0xd0] sm:$0xff]
        %v583 = vld [vmem:[%s419 + $0xd8] sm:$0xff]
        %v584 = vld [vmem:[%s419 + $0xe0] sm:$0xff]
        %v585 = vld [vmem:[%s419 + $0xe8] sm:$0xff]
        %v586 = vld [vmem:[%s419 + $0xf0] sm:$0xff]
        %v587 = vld [vmem:[%s419 + $0xf8] sm:$0xff]
        %v588 = vld [vmem:[%s419 + $0x100] sm:$0xff]
        %v589 = vld [vmem:[%s419 + $0x108] sm:$0xff]
        %v590 = vld [vmem:[%s419 + $0x110] sm:$0xff]
        %v591 = vld [vmem:[%s419 + $0x118] sm:$0xff]
        %v592 = vld [vmem:[%s419 + $0x120] sm:$0xff]
        %v593 = vld [vmem:[%s419 + $0x128] sm:$0xff]
        %v594 = vld [vmem:[%s419 + $0x130] sm:$0xff]
        %v595 = vld [vmem:[%s419 + $0x138] sm:$0xff]
        %v596 = vld [vmem:[%s419 + $0x140] sm:$0xff]
        %v597 = vld [vmem:[%s419 + $0x148] sm:$0xff]
        %v598 = vld [vmem:[%s419 + $0x150] sm:$0xff]
        %v599 = vld [vmem:[%s419 + $0x158] sm:$0xff]
        %v600 = vld [vmem:[%s419 + $0x160] sm:$0xff]
        %v601 = vld [vmem:[%s419 + $0x168] sm:$0xff]
        %v602 = vld [vmem:[%s419 + $0x170] sm:$0xff]
        %v603 = vld [vmem:[%s419 + $0x178] sm:$0xff]
        %v604 = vld [vmem:[%s419 + $0x180] sm:$0xff]
        %v605 = vld [vmem:[%s419 + $0x188] sm:$0xff]
        %v606 = vld [vmem:[%s419 + $0x190] sm:$0xff]
        %v607 = vld [vmem:[%s419 + $0x198] sm:$0xff]
        %v608 = vld [vmem:[%s419 + $0x1a0] sm:$0xff]
        %v609 = vld [vmem:[%s419 + $0x1a8] sm:$0xff]
        %v610 = vld [vmem:[%s419 + $0x1b0] sm:$0xff]
        %v611 = vld [vmem:[%s419 + $0x1b8] sm:$0xff]
        %v612 = vld [vmem:[%s419 + $0x1c0] sm:$0xff]
        %v613 = vld [vmem:[%s419 + $0x1c8] sm:$0xff]
        %v614 = vld [vmem:[%s419 + $0x1d0] sm:$0xff]
        %v615 = vld [vmem:[%s419 + $0x1d8] sm:$0xff]
        %v616 = vld [vmem:[%s419 + $0x1e0] sm:$0xff]
        %v617 = vld [vmem:[%s419 + $0x1e8] sm:$0xff]
        %v618 = vld [vmem:[%s419 + $0x1f0] sm:$0xff]
        %v619 = vld [vmem:[%s419 + $0x1f8] sm:$0xff]
        %v621 = vlaneseq
        %v622 = vshrl.u32 %v621, 7
        %v623 = vsub.s32 0, %v622
        %v624 = vrot.slane %v555, %v623
        %v690 = vunpack.c.l.b16 %v556
        %v691 = vunpack.c.h.b16 %v556
        %v692 = vunpack.c.l.b16 %v557
        %v693 = vunpack.c.h.b16 %v557
        %v694 = vunpack.c.l.b16 %v558
        %v695 = vunpack.c.h.b16 %v558
        %v696 = vunpack.c.l.b16 %v559
        %v697 = vunpack.c.h.b16 %v559
        %v698 = vunpack.c.l.b16 %v560
        %v699 = vunpack.c.h.b16 %v560
        %v700 = vunpack.c.l.b16 %v561
        %v701 = vunpack.c.h.b16 %v561
        %v702 = vunpack.c.l.b16 %v562
        %v703 = vunpack.c.h.b16 %v562
        %v704 = vunpack.c.l.b16 %v563
        %v705 = vunpack.c.h.b16 %v563
        %v706 = vunpack.c.l.b16 %v564
        %v707 = vunpack.c.h.b16 %v564
        %v708 = vunpack.c.l.b16 %v565
        %v709 = vunpack.c.h.b16 %v565
        %v710 = vunpack.c.l.b16 %v566
        %v711 = vunpack.c.h.b16 %v566
        %v712 = vunpack.c.l.b16 %v567
        %v713 = vunpack.c.h.b16 %v567
        %v714 = vunpack.c.l.b16 %v568
        %v715 = vunpack.c.h.b16 %v568
        %v716 = vunpack.c.l.b16 %v569
        %v717 = vunpack.c.h.b16 %v569
        %v718 = vunpack.c.l.b16 %v570
        %v719 = vunpack.c.h.b16 %v570
        %v720 = vunpack.c.l.b16 %v571
        %v721 = vunpack.c.h.b16 %v571
        %v722 = vunpack.c.l.b16 %v572
        %v723 = vunpack.c.h.b16 %v572
        %v724 = vunpack.c.l.b16 %v573
        %v725 = vunpack.c.h.b16 %v573
        %v726 = vunpack.c.l.b16 %v574
        %v727 = vunpack.c.h.b16 %v574
        %v728 = vunpack.c.l.b16 %v575
        %v729 = vunpack.c.h.b16 %v575
        %v730 = vunpack.c.l.b16 %v576
        %v731 = vunpack.c.h.b16 %v576
        %v732 = vunpack.c.l.b16 %v577
        %v733 = vunpack.c.h.b16 %v577
        %v734 = vunpack.c.l.b16 %v578
        %v735 = vunpack.c.h.b16 %v578
        %v736 = vunpack.c.l.b16 %v579
        %v737 = vunpack.c.h.b16 %v579
        %v738 = vunpack.c.l.b16 %v580
        %v739 = vunpack.c.h.b16 %v580
        %v740 = vunpack.c.l.b16 %v581
        %v741 = vunpack.c.h.b16 %v581
        %v742 = vunpack.c.l.b16 %v582
        %v743 = vunpack.c.h.b16 %v582
        %v744 = vunpack.c.l.b16 %v583
        %v745 = vunpack.c.h.b16 %v583
        %v746 = vunpack.c.l.b16 %v584
        %v747 = vunpack.c.h.b16 %v584
        %v748 = vunpack.c.l.b16 %v585
        %v749 = vunpack.c.h.b16 %v585
        %v750 = vunpack.c.l.b16 %v586
        %v751 = vunpack.c.h.b16 %v586
        %v752 = vunpack.c.l.b16 %v587
        %v753 = vunpack.c.h.b16 %v587
        %v754 = vunpack.c.l.b16 %v588
        %v755 = vunpack.c.h.b16 %v588
        %v756 = vunpack.c.l.b16 %v589
        %v757 = vunpack.c.h.b16 %v589
        %v758 = vunpack.c.l.b16 %v590
        %v759 = vunpack.c.h.b16 %v590
        %v760 = vunpack.c.l.b16 %v591
        %v761 = vunpack.c.h.b16 %v591
        %v762 = vunpack.c.l.b16 %v592
        %v763 = vunpack.c.h.b16 %v592
        %v764 = vunpack.c.l.b16 %v593
        %v765 = vunpack.c.h.b16 %v593
        %v766 = vunpack.c.l.b16 %v594
        %v767 = vunpack.c.h.b16 %v594
        %v768 = vunpack.c.l.b16 %v595
        %v769 = vunpack.c.h.b16 %v595
        %v770 = vunpack.c.l.b16 %v596
        %v771 = vunpack.c.h.b16 %v596
        %v772 = vunpack.c.l.b16 %v597
        %v773 = vunpack.c.h.b16 %v597
        %v774 = vunpack.c.l.b16 %v598
        %v775 = vunpack.c.h.b16 %v598
        %v776 = vunpack.c.l.b16 %v599
        %v777 = vunpack.c.h.b16 %v599
        %v778 = vunpack.c.l.b16 %v600
        %v779 = vunpack.c.h.b16 %v600
        %v780 = vunpack.c.l.b16 %v601
        %v781 = vunpack.c.h.b16 %v601
        %v782 = vunpack.c.l.b16 %v602
        %v783 = vunpack.c.h.b16 %v602
        %v784 = vunpack.c.l.b16 %v603
        %v785 = vunpack.c.h.b16 %v603
        %v786 = vunpack.c.l.b16 %v604
        %v787 = vunpack.c.h.b16 %v604
        %v788 = vunpack.c.l.b16 %v605
        %v789 = vunpack.c.h.b16 %v605
        %v790 = vunpack.c.l.b16 %v606
        %v791 = vunpack.c.h.b16 %v606
        %v792 = vunpack.c.l.b16 %v607
        %v793 = vunpack.c.h.b16 %v607
        %v794 = vunpack.c.l.b16 %v608
        %v795 = vunpack.c.h.b16 %v608
        %v796 = vunpack.c.l.b16 %v609
        %v797 = vunpack.c.h.b16 %v609
        %v798 = vunpack.c.l.b16 %v610
        %v799 = vunpack.c.h.b16 %v610
        %v800 = vunpack.c.l.b16 %v611
        %v801 = vunpack.c.h.b16 %v611
        %v802 = vunpack.c.l.b16 %v612
        %v803 = vunpack.c.h.b16 %v612
        %v804 = vunpack.c.l.b16 %v613
        %v805 = vunpack.c.h.b16 %v613
        %v806 = vunpack.c.l.b16 %v614
        %v807 = vunpack.c.h.b16 %v614
        %v808 = vunpack.c.l.b16 %v615
        %v809 = vunpack.c.h.b16 %v615
        %v810 = vunpack.c.l.b16 %v616
        %v811 = vunpack.c.h.b16 %v616
        %v812 = vunpack.c.l.b16 %v617
        %v813 = vunpack.c.h.b16 %v617
        %v814 = vunpack.c.l.b16 %v618
        %v815 = vunpack.c.h.b16 %v618
        %v816 = vunpack.c.l.b16 %v619
        %v817 = vunpack.c.h.b16 %v619
        %v818 = vpack.c.b16 %v694, %v690
        %v819 = vpack.c.b16 %v695, %v691
        %v820 = vpack.c.b16 %v696, %v692
        %v821 = vpack.c.b16 %v697, %v693
        %v822 = vpack.c.b16 %v702, %v698
        %v823 = vpack.c.b16 %v703, %v699
        %v824 = vpack.c.b16 %v704, %v700
        %v825 = vpack.c.b16 %v705, %v701
        %v826 = vpack.c.b16 %v710, %v706
        %v827 = vpack.c.b16 %v711, %v707
        %v828 = vpack.c.b16 %v712, %v708
        %v829 = vpack.c.b16 %v713, %v709
        %v830 = vpack.c.b16 %v718, %v714
        %v831 = vpack.c.b16 %v719, %v715
        %v832 = vpack.c.b16 %v720, %v716
        %v833 = vpack.c.b16 %v721, %v717
        %v834 = vpack.c.b16 %v726, %v722
        %v835 = vpack.c.b16 %v727, %v723
        %v836 = vpack.c.b16 %v728, %v724
        %v837 = vpack.c.b16 %v729, %v725
        %v838 = vpack.c.b16 %v734, %v730
        %v839 = vpack.c.b16 %v735, %v731
        %v840 = vpack.c.b16 %v736, %v732
        %v841 = vpack.c.b16 %v737, %v733
        %v842 = vpack.c.b16 %v742, %v738
        %v843 = vpack.c.b16 %v743, %v739
        %v844 = vpack.c.b16 %v744, %v740
        %v845 = vpack.c.b16 %v745, %v741
        %v846 = vpack.c.b16 %v750, %v746
        %v847 = vpack.c.b16 %v751, %v747
        %v848 = vpack.c.b16 %v752, %v748
        %v849 = vpack.c.b16 %v753, %v749
        %v850 = vpack.c.b16 %v758, %v754
        %v851 = vpack.c.b16 %v759, %v755
        %v852 = vpack.c.b16 %v760, %v756
        %v853 = vpack.c.b16 %v761, %v757
        %v854 = vpack.c.b16 %v766, %v762
        %v855 = vpack.c.b16 %v767, %v763
        %v856 = vpack.c.b16 %v768, %v764
        %v857 = vpack.c.b16 %v769, %v765
        %v858 = vpack.c.b16 %v774, %v770
        %v859 = vpack.c.b16 %v775, %v771
        %v860 = vpack.c.b16 %v776, %v772
        %v861 = vpack.c.b16 %v777, %v773
        %v862 = vpack.c.b16 %v782, %v778
        %v863 = vpack.c.b16 %v783, %v779
        %v864 = vpack.c.b16 %v784, %v780
        %v865 = vpack.c.b16 %v785, %v781
        %v866 = vpack.c.b16 %v790, %v786
        %v867 = vpack.c.b16 %v791, %v787
        %v868 = vpack.c.b16 %v792, %v788
        %v869 = vpack.c.b16 %v793, %v789
        %v870 = vpack.c.b16 %v798, %v794
        %v871 = vpack.c.b16 %v799, %v795
        %v872 = vpack.c.b16 %v800, %v796
        %v873 = vpack.c.b16 %v801, %v797
        %v874 = vpack.c.b16 %v806, %v802
        %v875 = vpack.c.b16 %v807, %v803
        %v876 = vpack.c.b16 %v808, %v804
        %v877 = vpack.c.b16 %v809, %v805
        %v878 = vpack.c.b16 %v814, %v810
        %v879 = vpack.c.b16 %v815, %v811
        %v880 = vpack.c.b16 %v816, %v812
        %v881 = vpack.c.b16 %v817, %v813
        %v1010 = vunpack.c.l.b16 %v491
        %v1011 = vunpack.c.l.b16 %v492
        %v1012 = vunpack.c.l.b16 %v493
        %v1013 = vunpack.c.l.b16 %v494
        %v1014 = vunpack.c.l.b16 %v495
        %v1015 = vunpack.c.l.b16 %v496
        %v1016 = vunpack.c.l.b16 %v497
        %v1017 = vunpack.c.l.b16 %v498
        %v1018 = vunpack.c.l.b16 %v499
        %v1019 = vunpack.c.l.b16 %v500
        %v1020 = vunpack.c.l.b16 %v501
        %v1021 = vunpack.c.l.b16 %v502
        %v1022 = vunpack.c.l.b16 %v503
        %v1023 = vunpack.c.l.b16 %v504
        %v1024 = vunpack.c.l.b16 %v505
        %v1025 = vunpack.c.l.b16 %v506
        %v1026 = vunpack.c.l.b16 %v507
        %v1027 = vunpack.c.l.b16 %v508
        %v1028 = vunpack.c.l.b16 %v509
        %v1029 = vunpack.c.l.b16 %v510
        %v1030 = vunpack.c.l.b16 %v511
        %v1031 = vunpack.c.l.b16 %v512
        %v1032 = vunpack.c.l.b16 %v513
        %v1033 = vunpack.c.l.b16 %v514
        %v1034 = vunpack.c.l.b16 %v515
        %v1035 = vunpack.c.l.b16 %v516
        %v1036 = vunpack.c.l.b16 %v517
        %v1037 = vunpack.c.l.b16 %v518
        %v1038 = vunpack.c.l.b16 %v519
        %v1039 = vunpack.c.l.b16 %v520
        %v1040 = vunpack.c.l.b16 %v521
        %v1041 = vunpack.c.l.b16 %v522
        %v1042 = vunpack.c.l.b16 %v523
        %v1043 = vunpack.c.l.b16 %v524
        %v1044 = vunpack.c.l.b16 %v525
        %v1045 = vunpack.c.l.b16 %v526
        %v1046 = vunpack.c.l.b16 %v527
        %v1047 = vunpack.c.l.b16 %v528
        %v1048 = vunpack.c.l.b16 %v529
        %v1049 = vunpack.c.l.b16 %v530
        %v1050 = vunpack.c.l.b16 %v531
        %v1051 = vunpack.c.l.b16 %v532
        %v1052 = vunpack.c.l.b16 %v533
        %v1053 = vunpack.c.l.b16 %v534
        %v1054 = vunpack.c.l.b16 %v535
        %v1055 = vunpack.c.l.b16 %v536
        %v1056 = vunpack.c.l.b16 %v537
        %v1057 = vunpack.c.l.b16 %v538
        %v1058 = vunpack.c.l.b16 %v539
        %v1059 = vunpack.c.l.b16 %v540
        %v1060 = vunpack.c.l.b16 %v541
        %v1061 = vunpack.c.l.b16 %v542
        %v1062 = vunpack.c.l.b16 %v543
        %v1063 = vunpack.c.l.b16 %v544
        %v1064 = vunpack.c.l.b16 %v545
        %v1065 = vunpack.c.l.b16 %v546
        %v1066 = vunpack.c.l.b16 %v547
        %v1067 = vunpack.c.l.b16 %v548
        %v1068 = vunpack.c.l.b16 %v549
        %v1069 = vunpack.c.l.b16 %v550
        %v1070 = vunpack.c.l.b16 %v551
        %v1071 = vunpack.c.l.b16 %v552
        %v1072 = vunpack.c.l.b16 %v553
        %v1073 = vunpack.c.l.b16 %v554
        %v1074 = vpack.c.b16 %v1011, %v1010
        %v1075 = vpack.c.b16 %v1013, %v1012
        %v1076 = vpack.c.b16 %v1015, %v1014
        %v1077 = vpack.c.b16 %v1017, %v1016
        %v1078 = vpack.c.b16 %v1019, %v1018
        %v1079 = vpack.c.b16 %v1021, %v1020
        %v1080 = vpack.c.b16 %v1023, %v1022
        %v1081 = vpack.c.b16 %v1025, %v1024
        %v1082 = vpack.c.b16 %v1027, %v1026
        %v1083 = vpack.c.b16 %v1029, %v1028
        %v1084 = vpack.c.b16 %v1031, %v1030
        %v1085 = vpack.c.b16 %v1033, %v1032
        %v1086 = vpack.c.b16 %v1035, %v1034
        %v1087 = vpack.c.b16 %v1037, %v1036
        %v1088 = vpack.c.b16 %v1039, %v1038
        %v1089 = vpack.c.b16 %v1041, %v1040
        %v1090 = vpack.c.b16 %v1043, %v1042
        %v1091 = vpack.c.b16 %v1045, %v1044
        %v1092 = vpack.c.b16 %v1047, %v1046
        %v1093 = vpack.c.b16 %v1049, %v1048
        %v1094 = vpack.c.b16 %v1051, %v1050
        %v1095 = vpack.c.b16 %v1053, %v1052
        %v1096 = vpack.c.b16 %v1055, %v1054
        %v1097 = vpack.c.b16 %v1057, %v1056
        %v1098 = vpack.c.b16 %v1059, %v1058
        %v1099 = vpack.c.b16 %v1061, %v1060
        %v1100 = vpack.c.b16 %v1063, %v1062
        %v1101 = vpack.c.b16 %v1065, %v1064
        %v1102 = vpack.c.b16 %v1067, %v1066
        %v1103 = vpack.c.b16 %v1069, %v1068
        %v1104 = vpack.c.b16 %v1071, %v1070
        %v1105 = vpack.c.b16 %v1073, %v1072
        %1138 = vmatprep.subr.bf16.mxu0 0
        %1139 = vmatpush1.bf16.msra.mxu0 %v1081
        %1140 = vmatprep.subr.bf16.mxu0 0
        %1141 = vmatpush1.bf16.msra.mxu0 %v1080
        %1142 = vmatprep.subr.bf16.mxu0 0
        %1143 = vmatpush1.bf16.msra.mxu0 %v1079
        %1144 = vmatprep.subr.bf16.mxu0 0
        %1145 = vmatpush1.bf16.msra.mxu0 %v1078
        %1146 = vmatprep.subr.bf16.mxu0 0
        %1147 = vmatpush1.bf16.msra.mxu0 %v1077
        %1148 = vmatprep.subr.bf16.mxu0 0
        %1149 = vmatpush1.bf16.msra.mxu0 %v1076
        %1150 = vmatprep.subr.bf16.mxu0 0
        %1151 = vmatpush1.bf16.msra.mxu0 %v1075
        %1152 = vmatprep.subr.bf16.mxu0 0
        %1153 = vmatpush1.bf16.msra.mxu0 %v1074
        %1154 = vmatprep.subr.bf16.mxu0 0
        %1155 = vmatpush2.bf16.msra.mxu0 %v1089
        %1156 = vmatprep.subr.bf16.mxu0 0
        %1157 = vmatpush2.bf16.msra.mxu0 %v1088
        %1158 = vmatprep.subr.bf16.mxu0 0
        %1159 = vmatpush2.bf16.msra.mxu0 %v1087
        %1160 = vmatprep.subr.bf16.mxu0 0
        %1161 = vmatpush2.bf16.msra.mxu0 %v1086
        %1162 = vmatprep.subr.bf16.mxu0 0
        %1163 = vmatpush2.bf16.msra.mxu0 %v1085
        %1164 = vmatprep.subr.bf16.mxu0 0
        %1165 = vmatpush2.bf16.msra.mxu0 %v1084
        %1166 = vmatprep.subr.bf16.mxu0 0
        %1167 = vmatpush2.bf16.msra.mxu0 %v1083
        %1168 = vmatprep.subr.bf16.mxu0 0
        %1169 = vmatpush2.bf16.msra.mxu0 %v1082
        %1170 = vmatprep.mubr.bf16.mxu0 %v819
        %1171 = vmatmul.mubr.bf16.gmra.mxu0 %v818
        %v1172 = vpop.f32.mrf.mxu0
        %v1173 = vadd.f32 %v624, %v1172
        %v1174 = vpop.f32.mrf.mxu0
        %v1175 = vpop.f32.mrf.mxu0
        %v1176 = vadd.f32 %v624, %v1175
        %v1177 = vpop.f32.mrf.mxu0
        %1178 = vmatprep.mubr.bf16.mxu0 %v823
        %1179 = vmatmul.mubr.bf16.gmra.mxu0 %v822
        %v1180 = vpop.f32.mrf.mxu0
        %v1181 = vadd.f32 %v624, %v1180
        %v1182 = vpop.f32.mrf.mxu0
        %v1183 = vpop.f32.mrf.mxu0
        %v1184 = vadd.f32 %v624, %v1183
        %v1185 = vpop.f32.mrf.mxu0
        %1186 = vmatprep.mubr.bf16.mxu0 %v827
        %1187 = vmatmul.mubr.bf16.gmra.mxu0 %v826
        %v1188 = vpop.f32.mrf.mxu0
        %v1189 = vadd.f32 %v624, %v1188
        %v1190 = vpop.f32.mrf.mxu0
        %v1191 = vpop.f32.mrf.mxu0
        %v1192 = vadd.f32 %v624, %v1191
        %v1193 = vpop.f32.mrf.mxu0
        %1194 = vmatprep.mubr.bf16.mxu0 %v831
        %1195 = vmatmul.mubr.bf16.gmra.mxu0 %v830
        %v1196 = vpop.f32.mrf.mxu0
        %v1197 = vadd.f32 %v624, %v1196
        %v1198 = vpop.f32.mrf.mxu0
        %v1199 = vpop.f32.mrf.mxu0
        %v1200 = vadd.f32 %v624, %v1199
        %v1201 = vpop.f32.mrf.mxu0
        %1202 = vmatprep.mubr.bf16.mxu0 %v835
        %1203 = vmatmul.mubr.bf16.gmra.mxu0 %v834
        %v1204 = vpop.f32.mrf.mxu0
        %v1205 = vadd.f32 %v624, %v1204
        %v1206 = vpop.f32.mrf.mxu0
        %v1207 = vpop.f32.mrf.mxu0
        %v1208 = vadd.f32 %v624, %v1207
        %v1209 = vpop.f32.mrf.mxu0
        %1210 = vmatprep.mubr.bf16.mxu0 %v839
        %1211 = vmatmul.mubr.bf16.gmra.mxu0 %v838
        %v1212 = vpop.f32.mrf.mxu0
        %v1213 = vadd.f32 %v624, %v1212
        %v1214 = vpop.f32.mrf.mxu0
        %v1215 = vpop.f32.mrf.mxu0
        %v1216 = vadd.f32 %v624, %v1215
        %v1217 = vpop.f32.mrf.mxu0
        %1218 = vmatprep.mubr.bf16.mxu0 %v843
        %1219 = vmatmul.mubr.bf16.gmra.mxu0 %v842
        %v1220 = vpop.f32.mrf.mxu0
        %v1221 = vadd.f32 %v624, %v1220
        %v1222 = vpop.f32.mrf.mxu0
        %v1223 = vpop.f32.mrf.mxu0
        %v1224 = vadd.f32 %v624, %v1223
        %v1225 = vpop.f32.mrf.mxu0
        %1226 = vmatprep.mubr.bf16.mxu0 %v847
        %1227 = vmatmul.mubr.bf16.gmra.mxu0 %v846
        %v1228 = vpop.f32.mrf.mxu0
        %v1229 = vadd.f32 %v624, %v1228
        %v1230 = vpop.f32.mrf.mxu0
        %v1231 = vpop.f32.mrf.mxu0
        %v1232 = vadd.f32 %v624, %v1231
        %v1233 = vpop.f32.mrf.mxu0
        %1234 = vmatprep.mubr.bf16.mxu0 %v851
        %1235 = vmatmul.mubr.bf16.gmra.mxu0 %v850
        %v1236 = vpop.f32.mrf.mxu0
        %v1237 = vadd.f32 %v624, %v1236
        %v1238 = vpop.f32.mrf.mxu0
        %v1239 = vpop.f32.mrf.mxu0
        %v1240 = vadd.f32 %v624, %v1239
        %v1241 = vpop.f32.mrf.mxu0
        %1242 = vmatprep.mubr.bf16.mxu0 %v855
        %1243 = vmatmul.mubr.bf16.gmra.mxu0 %v854
        %v1244 = vpop.f32.mrf.mxu0
        %v1245 = vadd.f32 %v624, %v1244
        %v1246 = vpop.f32.mrf.mxu0
        %v1247 = vpop.f32.mrf.mxu0
        %v1248 = vadd.f32 %v624, %v1247
        %v1249 = vpop.f32.mrf.mxu0
        %1250 = vmatprep.mubr.bf16.mxu0 %v859
        %1251 = vmatmul.mubr.bf16.gmra.mxu0 %v858
        %v1252 = vpop.f32.mrf.mxu0
        %v1253 = vadd.f32 %v624, %v1252
        %v1254 = vpop.f32.mrf.mxu0
        %v1255 = vpop.f32.mrf.mxu0
        %v1256 = vadd.f32 %v624, %v1255
        %v1257 = vpop.f32.mrf.mxu0
        %1258 = vmatprep.mubr.bf16.mxu0 %v863
        %1259 = vmatmul.mubr.bf16.gmra.mxu0 %v862
        %v1260 = vpop.f32.mrf.mxu0
        %v1261 = vadd.f32 %v624, %v1260
        %v1262 = vpop.f32.mrf.mxu0
        %v1263 = vpop.f32.mrf.mxu0
        %v1264 = vadd.f32 %v624, %v1263
        %v1265 = vpop.f32.mrf.mxu0
        %1266 = vmatprep.mubr.bf16.mxu0 %v867
        %1267 = vmatmul.mubr.bf16.gmra.mxu0 %v866
        %v1268 = vpop.f32.mrf.mxu0
        %v1269 = vadd.f32 %v624, %v1268
        %v1270 = vpop.f32.mrf.mxu0
        %v1271 = vpop.f32.mrf.mxu0
        %v1272 = vadd.f32 %v624, %v1271
        %v1273 = vpop.f32.mrf.mxu0
        %1274 = vmatprep.mubr.bf16.mxu0 %v871
        %1275 = vmatmul.mubr.bf16.gmra.mxu0 %v870
        %v1276 = vpop.f32.mrf.mxu0
        %v1277 = vadd.f32 %v624, %v1276
        %v1278 = vpop.f32.mrf.mxu0
        %v1279 = vpop.f32.mrf.mxu0
        %v1280 = vadd.f32 %v624, %v1279
        %v1281 = vpop.f32.mrf.mxu0
        %1282 = vmatprep.mubr.bf16.mxu0 %v875
        %1283 = vmatmul.mubr.bf16.gmra.mxu0 %v874
        %v1284 = vpop.f32.mrf.mxu0
        %v1285 = vadd.f32 %v624, %v1284
        %v1286 = vpop.f32.mrf.mxu0
        %v1287 = vpop.f32.mrf.mxu0
        %v1288 = vadd.f32 %v624, %v1287
        %v1289 = vpop.f32.mrf.mxu0
        %1290 = vmatprep.mubr.bf16.mxu0 %v879
        %1291 = vmatmul.mubr.bf16.gmra.mxu0 %v878
        %v1292 = vpop.f32.mrf.mxu0
        %v1293 = vadd.f32 %v624, %v1292
        %v1294 = vpop.f32.mrf.mxu0
        %v1295 = vpop.f32.mrf.mxu0
        %v1296 = vadd.f32 %v624, %v1295
        %v1297 = vpop.f32.mrf.mxu0
        %1298 = vdwg.mxu0
        %1299 = vmatprep.subr.bf16.mxu0 0
        %1300 = vmatpush1.bf16.msra.mxu0 %v1097
        %1301 = vmatprep.subr.bf16.mxu0 0
        %1302 = vmatpush1.bf16.msra.mxu0 %v1096
        %1303 = vmatprep.subr.bf16.mxu0 0
        %1304 = vmatpush1.bf16.msra.mxu0 %v1095
        %1305 = vmatprep.subr.bf16.mxu0 0
        %1306 = vmatpush1.bf16.msra.mxu0 %v1094
        %1307 = vmatprep.subr.bf16.mxu0 0
        %1308 = vmatpush1.bf16.msra.mxu0 %v1093
        %1309 = vmatprep.subr.bf16.mxu0 0
        %1310 = vmatpush1.bf16.msra.mxu0 %v1092
        %1311 = vmatprep.subr.bf16.mxu0 0
        %1312 = vmatpush1.bf16.msra.mxu0 %v1091
        %1313 = vmatprep.subr.bf16.mxu0 0
        %1314 = vmatpush1.bf16.msra.mxu0 %v1090
        %1315 = vmatprep.subr.bf16.mxu0 0
        %1316 = vmatpush2.bf16.msra.mxu0 %v1105
        %1317 = vmatprep.subr.bf16.mxu0 0
        %1318 = vmatpush2.bf16.msra.mxu0 %v1104
        %1319 = vmatprep.subr.bf16.mxu0 0
        %1320 = vmatpush2.bf16.msra.mxu0 %v1103
        %1321 = vmatprep.subr.bf16.mxu0 0
        %1322 = vmatpush2.bf16.msra.mxu0 %v1102
        %1323 = vmatprep.subr.bf16.mxu0 0
        %1324 = vmatpush2.bf16.msra.mxu0 %v1101
        %1325 = vmatprep.subr.bf16.mxu0 0
        %1326 = vmatpush2.bf16.msra.mxu0 %v1100
        %1327 = vmatprep.subr.bf16.mxu0 0
        %1328 = vmatpush2.bf16.msra.mxu0 %v1099
        %1329 = vmatprep.subr.bf16.mxu0 0
        %1330 = vmatpush2.bf16.msra.mxu0 %v1098
        %1331 = vmatprep.mubr.bf16.mxu0 %v821
        %1332 = vmatmul.mubr.bf16.gmra.mxu0 %v820
        %v1333 = vpop.f32.mrf.mxu0
        %v1334 = vadd.f32 %v1173, %v1333
        %v1335 = vpop.f32.mrf.mxu0
        %v1336 = vpop.f32.mrf.mxu0
        %v1337 = vadd.f32 %v1176, %v1336
        %v1338 = vpop.f32.mrf.mxu0
        %1339 = vmatprep.mubr.bf16.mxu0 %v825
        %1340 = vmatmul.mubr.bf16.gmra.mxu0 %v824
        %v1341 = vpop.f32.mrf.mxu0
        %v1342 = vadd.f32 %v1181, %v1341
        %v1343 = vpop.f32.mrf.mxu0
        %v1344 = vpop.f32.mrf.mxu0
        %v1345 = vadd.f32 %v1184, %v1344
        %v1346 = vpop.f32.mrf.mxu0
        %1347 = vmatprep.mubr.bf16.mxu0 %v829
        %1348 = vmatmul.mubr.bf16.gmra.mxu0 %v828
        %v1349 = vpop.f32.mrf.mxu0
        %v1350 = vadd.f32 %v1189, %v1349
        %v1351 = vpop.f32.mrf.mxu0
        %v1352 = vpop.f32.mrf.mxu0
        %v1353 = vadd.f32 %v1192, %v1352
        %v1354 = vpop.f32.mrf.mxu0
        %1355 = vmatprep.mubr.bf16.mxu0 %v833
        %1356 = vmatmul.mubr.bf16.gmra.mxu0 %v832
        %v1357 = vpop.f32.mrf.mxu0
        %v1358 = vadd.f32 %v1197, %v1357
        %v1359 = vpop.f32.mrf.mxu0
        %v1360 = vpop.f32.mrf.mxu0
        %v1361 = vadd.f32 %v1200, %v1360
        %v1362 = vpop.f32.mrf.mxu0
        %1363 = vmatprep.mubr.bf16.mxu0 %v837
        %1364 = vmatmul.mubr.bf16.gmra.mxu0 %v836
        %v1365 = vpop.f32.mrf.mxu0
        %v1366 = vadd.f32 %v1205, %v1365
        %v1367 = vpop.f32.mrf.mxu0
        %v1368 = vpop.f32.mrf.mxu0
        %v1369 = vadd.f32 %v1208, %v1368
        %v1370 = vpop.f32.mrf.mxu0
        %1371 = vmatprep.mubr.bf16.mxu0 %v841
        %1372 = vmatmul.mubr.bf16.gmra.mxu0 %v840
        %v1373 = vpop.f32.mrf.mxu0
        %v1374 = vadd.f32 %v1213, %v1373
        %v1375 = vpop.f32.mrf.mxu0
        %v1376 = vpop.f32.mrf.mxu0
        %v1377 = vadd.f32 %v1216, %v1376
        %v1378 = vpop.f32.mrf.mxu0
        %1379 = vmatprep.mubr.bf16.mxu0 %v845
        %1380 = vmatmul.mubr.bf16.gmra.mxu0 %v844
        %v1381 = vpop.f32.mrf.mxu0
        %v1382 = vadd.f32 %v1221, %v1381
        %v1383 = vpop.f32.mrf.mxu0
        %v1384 = vpop.f32.mrf.mxu0
        %v1385 = vadd.f32 %v1224, %v1384
        %v1386 = vpop.f32.mrf.mxu0
        %1387 = vmatprep.mubr.bf16.mxu0 %v849
        %1388 = vmatmul.mubr.bf16.gmra.mxu0 %v848
        %v1389 = vpop.f32.mrf.mxu0
        %v1390 = vadd.f32 %v1229, %v1389
        %v1391 = vpop.f32.mrf.mxu0
        %v1392 = vpop.f32.mrf.mxu0
        %v1393 = vadd.f32 %v1232, %v1392
        %v1394 = vpop.f32.mrf.mxu0
        %1395 = vmatprep.mubr.bf16.mxu0 %v853
        %1396 = vmatmul.mubr.bf16.gmra.mxu0 %v852
        %v1397 = vpop.f32.mrf.mxu0
        %v1398 = vadd.f32 %v1237, %v1397
        %v1399 = vpop.f32.mrf.mxu0
        %v1400 = vpop.f32.mrf.mxu0
        %v1401 = vadd.f32 %v1240, %v1400
        %v1402 = vpop.f32.mrf.mxu0
        %1403 = vmatprep.mubr.bf16.mxu0 %v857
        %1404 = vmatmul.mubr.bf16.gmra.mxu0 %v856
        %v1405 = vpop.f32.mrf.mxu0
        %v1406 = vadd.f32 %v1245, %v1405
        %v1407 = vpop.f32.mrf.mxu0
        %v1408 = vpop.f32.mrf.mxu0
        %v1409 = vadd.f32 %v1248, %v1408
        %v1410 = vpop.f32.mrf.mxu0
        %1411 = vmatprep.mubr.bf16.mxu0 %v861
        %1412 = vmatmul.mubr.bf16.gmra.mxu0 %v860
        %v1413 = vpop.f32.mrf.mxu0
        %v1414 = vadd.f32 %v1253, %v1413
        %v1415 = vpop.f32.mrf.mxu0
        %v1416 = vpop.f32.mrf.mxu0
        %v1417 = vadd.f32 %v1256, %v1416
        %v1418 = vpop.f32.mrf.mxu0
        %1419 = vmatprep.mubr.bf16.mxu0 %v865
        %1420 = vmatmul.mubr.bf16.gmra.mxu0 %v864
        %v1421 = vpop.f32.mrf.mxu0
        %v1422 = vadd.f32 %v1261, %v1421
        %v1423 = vpop.f32.mrf.mxu0
        %v1424 = vpop.f32.mrf.mxu0
        %v1425 = vadd.f32 %v1264, %v1424
        %v1426 = vpop.f32.mrf.mxu0
        %1427 = vmatprep.mubr.bf16.mxu0 %v869
        %1428 = vmatmul.mubr.bf16.gmra.mxu0 %v868
        %v1429 = vpop.f32.mrf.mxu0
        %v1430 = vadd.f32 %v1269, %v1429
        %v1431 = vpop.f32.mrf.mxu0
        %v1432 = vpop.f32.mrf.mxu0
        %v1433 = vadd.f32 %v1272, %v1432
        %v1434 = vpop.f32.mrf.mxu0
        %1435 = vmatprep.mubr.bf16.mxu0 %v873
        %1436 = vmatmul.mubr.bf16.gmra.mxu0 %v872
        %v1437 = vpop.f32.mrf.mxu0
        %v1438 = vadd.f32 %v1277, %v1437
        %v1439 = vpop.f32.mrf.mxu0
        %v1440 = vpop.f32.mrf.mxu0
        %v1441 = vadd.f32 %v1280, %v1440
        %v1442 = vpop.f32.mrf.mxu0
        %1443 = vmatprep.mubr.bf16.mxu0 %v877
        %1444 = vmatmul.mubr.bf16.gmra.mxu0 %v876
        %v1445 = vpop.f32.mrf.mxu0
        %v1446 = vadd.f32 %v1285, %v1445
        %v1447 = vpop.f32.mrf.mxu0
        %v1448 = vpop.f32.mrf.mxu0
        %v1449 = vadd.f32 %v1288, %v1448
        %v1450 = vpop.f32.mrf.mxu0
        %1451 = vmatprep.mubr.bf16.mxu0 %v881
        %1452 = vmatmul.mubr.bf16.gmra.mxu0 %v880
        %v1453 = vpop.f32.mrf.mxu0
        %v1454 = vadd.f32 %v1293, %v1453
        %v1455 = vpop.f32.mrf.mxu0
        %v1456 = vpop.f32.mrf.mxu0
        %v1457 = vadd.f32 %v1296, %v1456
        %v1458 = vpop.f32.mrf.mxu0
        %1459 = vdwg.mxu0
        %v1460 = vmax.f32 %v1334, 0.0
        %v1461 = vmax.f32 %v1337, 0.0
        %v1462 = vmax.f32 %v1342, 0.0
        %v1463 = vmax.f32 %v1345, 0.0
        %v1464 = vmax.f32 %v1350, 0.0
        %v1465 = vmax.f32 %v1353, 0.0
        %v1466 = vmax.f32 %v1358, 0.0
        %v1467 = vmax.f32 %v1361, 0.0
        %v1468 = vmax.f32 %v1366, 0.0
        %v1469 = vmax.f32 %v1369, 0.0
        %v1470 = vmax.f32 %v1374, 0.0
        %v1471 = vmax.f32 %v1377, 0.0
        %v1472 = vmax.f32 %v1382, 0.0
        %v1473 = vmax.f32 %v1385, 0.0
        %v1474 = vmax.f32 %v1390, 0.0
        %v1475 = vmax.f32 %v1393, 0.0
        %v1476 = vmax.f32 %v1398, 0.0
        %v1477 = vmax.f32 %v1401, 0.0
        %v1478 = vmax.f32 %v1406, 0.0
        %v1479 = vmax.f32 %v1409, 0.0
        %v1480 = vmax.f32 %v1414, 0.0
        %v1481 = vmax.f32 %v1417, 0.0
        %v1482 = vmax.f32 %v1422, 0.0
        %v1483 = vmax.f32 %v1425, 0.0
        %v1484 = vmax.f32 %v1430, 0.0
        %v1485 = vmax.f32 %v1433, 0.0
        %v1486 = vmax.f32 %v1438, 0.0
        %v1487 = vmax.f32 %v1441, 0.0
        %v1488 = vmax.f32 %v1446, 0.0
        %v1489 = vmax.f32 %v1449, 0.0
        %v1490 = vmax.f32 %v1454, 0.0
        %v1491 = vmax.f32 %v1457, 0.0
        %v1492 = vld [vmem:[%s428] sm:$0xff]
        %v1493 = vld [vmem:[%s428 + $0x8] sm:$0xff]
        %v1494 = vld [vmem:[%s428 + $0x10] sm:$0xff]
        %v1495 = vld [vmem:[%s428 + $0x18] sm:$0xff]
        %v1500 = vunpack.c.l.b16 %v1492
        %v1501 = vunpack.c.h.b16 %v1492
        %v1502 = vunpack.c.l.b16 %v1493
        %v1503 = vunpack.c.h.b16 %v1493
        %v1504 = vunpack.c.l.b16 %v1494
        %v1505 = vunpack.c.h.b16 %v1494
        %v1506 = vunpack.c.l.b16 %v1495
        %v1507 = vunpack.c.h.b16 %v1495
        %v1508 = vpack.c.b16 %v1504, %v1500
        %v1509 = vpack.c.b16 %v1505, %v1501
        %v1510 = vpack.c.b16 %v1506, %v1502
        %v1511 = vpack.c.b16 %v1507, %v1503
        %1516 = vmatprep.subr.bf16.mxu0 0
        %1517 = vmatpush1.bf16.msra.mxu0 %v1081
        %1518 = vmatprep.subr.bf16.mxu0 0
        %1519 = vmatpush1.bf16.msra.mxu0 %v1080
        %1520 = vmatprep.subr.bf16.mxu0 0
        %1521 = vmatpush1.bf16.msra.mxu0 %v1079
        %1522 = vmatprep.subr.bf16.mxu0 0
        %1523 = vmatpush1.bf16.msra.mxu0 %v1078
        %1524 = vmatprep.subr.bf16.mxu0 0
        %1525 = vmatpush1.bf16.msra.mxu0 %v1077
        %1526 = vmatprep.subr.bf16.mxu0 0
        %1527 = vmatpush1.bf16.msra.mxu0 %v1076
        %1528 = vmatprep.subr.bf16.mxu0 0
        %1529 = vmatpush1.bf16.msra.mxu0 %v1075
        %1530 = vmatprep.subr.bf16.mxu0 0
        %1531 = vmatpush1.bf16.msra.mxu0 %v1074
        %1532 = vmatprep.subr.bf16.mxu0 0
        %1533 = vmatpush2.bf16.msra.mxu0 %v1089
        %1534 = vmatprep.subr.bf16.mxu0 0
        %1535 = vmatpush2.bf16.msra.mxu0 %v1088
        %1536 = vmatprep.subr.bf16.mxu0 0
        %1537 = vmatpush2.bf16.msra.mxu0 %v1087
        %1538 = vmatprep.subr.bf16.mxu0 0
        %1539 = vmatpush2.bf16.msra.mxu0 %v1086
        %1540 = vmatprep.subr.bf16.mxu0 0
        %1541 = vmatpush2.bf16.msra.mxu0 %v1085
        %1542 = vmatprep.subr.bf16.mxu0 0
        %1543 = vmatpush2.bf16.msra.mxu0 %v1084
        %1544 = vmatprep.subr.bf16.mxu0 0
        %1545 = vmatpush2.bf16.msra.mxu0 %v1083
        %1546 = vmatprep.subr.bf16.mxu0 0
        %1547 = vmatpush2.bf16.msra.mxu0 %v1082
        %1548 = vmatprep.mubr.bf16.mxu0 %v1509
        %1549 = vmatmul.mubr.bf16.gmra.mxu0 %v1508
        %v1550 = vpop.f32.mrf.mxu0
        %v1551 = vadd.f32 %v624, %v1550
        %v1552 = vpop.f32.mrf.mxu0
        %v1553 = vpop.f32.mrf.mxu0
        %v1554 = vadd.f32 %v624, %v1553
        %v1555 = vpop.f32.mrf.mxu0
        %1556 = vdwg.mxu0
        %1557 = vmatprep.subr.bf16.mxu0 0
        %1558 = vmatpush1.bf16.msra.mxu0 %v1097
        %1559 = vmatprep.subr.bf16.mxu0 0
        %1560 = vmatpush1.bf16.msra.mxu0 %v1096
        %1561 = vmatprep.subr.bf16.mxu0 0
        %1562 = vmatpush1.bf16.msra.mxu0 %v1095
        %1563 = vmatprep.subr.bf16.mxu0 0
        %1564 = vmatpush1.bf16.msra.mxu0 %v1094
        %1565 = vmatprep.subr.bf16.mxu0 0
        %1566 = vmatpush1.bf16.msra.mxu0 %v1093
        %1567 = vmatprep.subr.bf16.mxu0 0
        %1568 = vmatpush1.bf16.msra.mxu0 %v1092
        %1569 = vmatprep.subr.bf16.mxu0 0
        %1570 = vmatpush1.bf16.msra.mxu0 %v1091
        %1571 = vmatprep.subr.bf16.mxu0 0
        %1572 = vmatpush1.bf16.msra.mxu0 %v1090
        %1573 = vmatprep.subr.bf16.mxu0 0
        %1574 = vmatpush2.bf16.msra.mxu0 %v1105
        %1575 = vmatprep.subr.bf16.mxu0 0
        %1576 = vmatpush2.bf16.msra.mxu0 %v1104
        %1577 = vmatprep.subr.bf16.mxu0 0
        %1578 = vmatpush2.bf16.msra.mxu0 %v1103
        %1579 = vmatprep.subr.bf16.mxu0 0
        %1580 = vmatpush2.bf16.msra.mxu0 %v1102
        %1581 = vmatprep.subr.bf16.mxu0 0
        %1582 = vmatpush2.bf16.msra.mxu0 %v1101
        %1583 = vmatprep.subr.bf16.mxu0 0
        %1584 = vmatpush2.bf16.msra.mxu0 %v1100
        %1585 = vmatprep.subr.bf16.mxu0 0
        %1586 = vmatpush2.bf16.msra.mxu0 %v1099
        %1587 = vmatprep.subr.bf16.mxu0 0
        %1588 = vmatpush2.bf16.msra.mxu0 %v1098
        %1589 = vmatprep.mubr.bf16.mxu0 %v1511
        %1590 = vmatmul.mubr.bf16.gmra.mxu0 %v1510
        %v1591 = vpop.f32.mrf.mxu0
        %v1592 = vadd.f32 %v1551, %v1591
        %v1593 = vpop.f32.mrf.mxu0
        %v1594 = vpop.f32.mrf.mxu0
        %v1595 = vadd.f32 %v1554, %v1594
        %v1596 = vpop.f32.mrf.mxu0
        %1597 = vdwg.mxu0
        %v1598 = vmax.f32 %v1592, 0.0
        %v1599 = vmax.f32 %v1595, 0.0
        %p1600 = scmp.eq.s32.totalorder %s36, 0
        %s1601 = scalar_select %p1600, 0.0, 1.0
        %v1602 = vpack.c.bf16 %v1461, %v1460
        %v1603 = vpack.c.bf16 %v1463, %v1462
        %v1604 = vpack.c.bf16 %v1465, %v1464
        %v1605 = vpack.c.bf16 %v1467, %v1466
        %v1606 = vpack.c.bf16 %v1469, %v1468
        %v1607 = vpack.c.bf16 %v1471, %v1470
        %v1608 = vpack.c.bf16 %v1473, %v1472
        %v1609 = vpack.c.bf16 %v1475, %v1474
        %v1610 = vpack.c.bf16 %v1477, %v1476
        %v1611 = vpack.c.bf16 %v1479, %v1478
        %v1612 = vpack.c.bf16 %v1481, %v1480
        %v1613 = vpack.c.bf16 %v1483, %v1482
        %v1614 = vpack.c.bf16 %v1485, %v1484
        %v1615 = vpack.c.bf16 %v1487, %v1486
        %v1616 = vpack.c.bf16 %v1489, %v1488
        %v1617 = vpack.c.bf16 %v1491, %v1490
        %v1618 = vstv %s1601
        %v1619 = vmul.f32 %v1598, %v1618
        %v1620 = vmul.f32 %v1599, %v1618
        %v1621 = vpack.c.bf16 %v1620, %v1619
        %v1622 = vlaneseq
        %v1623 = vshrl.u32 %v1622, 7
        %v1624 = vadd.s32 %v1623, 8
        %v1625 = vadd.s32 %v1623, 16
        %v1626 = vadd.s32 %v1623, 24
        %v1627 = vadd.s32 %v1623, 32
        %v1628 = vadd.s32 %v1623, 40
        %v1629 = vadd.s32 %v1623, 48
        %v1630 = vadd.s32 %v1623, 56
        %v1631 = vadd.s32 %v1623, 64
        %v1632 = vadd.s32 %v1623, 72
        %v1633 = vadd.s32 %v1623, 80
        %v1634 = vadd.s32 %v1623, 88
        %v1635 = vadd.s32 %v1623, 96
        %v1636 = vadd.s32 %v1623, 104
        %v1637 = vadd.s32 %v1623, 112
        %v1638 = vadd.s32 %v1623, 120
        %v1639 = vadd.s32 %v1623, 128
        %v1640 = vadd.s32 %v1623, 136
        %v1641 = vadd.s32 %v1623, 144
        %v1642 = vadd.s32 %v1623, 152
        %v1643 = vadd.s32 %v1623, 160
        %v1644 = vadd.s32 %v1623, 168
        %v1645 = vadd.s32 %v1623, 176
        %v1646 = vadd.s32 %v1623, 184
        %v1647 = vadd.s32 %v1623, 192
        %v1648 = vadd.s32 %v1623, 200
        %v1649 = vadd.s32 %v1623, 208
        %v1650 = vadd.s32 %v1623, 216
        %v1651 = vadd.s32 %v1623, 224
        %v1652 = vadd.s32 %v1623, 232
        %v1653 = vadd.s32 %v1623, 240
        %v1654 = vadd.s32 %v1623, 248
        %v1655 = vadd.s32 %v1623, 256
        %v1656 = vadd.s32 %v1623, 264
        %vm1657 = vcmp.lt.s32.totalorder %v1623, 0
        %v1658 = vsub.s32 0, %v1623
        %v1659 = vsel %vm1657, %v1658, %v1623
        %v1660 = vshrl.u32 %v1659, 4
        %v1661 = vand.u32 %v1659, 15
        %v1662 = vsub.s32 0, %v1661
        %v1663 = vsel %vm1657, %v1662, %v1661
        %vm1664 = vcmp.lt.s32.totalorder %v1624, 0
        %v1665 = vsub.s32 0, %v1624
        %v1666 = vsel %vm1664, %v1665, %v1624
        %v1667 = vshrl.u32 %v1666, 4
        %v1668 = vand.u32 %v1666, 15
        %v1669 = vsub.s32 0, %v1668
        %v1670 = vsel %vm1664, %v1669, %v1668
        %vm1671 = vcmp.lt.s32.totalorder %v1625, 0
        %v1672 = vsub.s32 0, %v1625
        %v1673 = vsel %vm1671, %v1672, %v1625
        %v1674 = vshrl.u32 %v1673, 4
        %v1675 = vand.u32 %v1673, 15
        %v1676 = vsub.s32 0, %v1675
        %v1677 = vsel %vm1671, %v1676, %v1675
        %vm1678 = vcmp.lt.s32.totalorder %v1626, 0
        %v1679 = vsub.s32 0, %v1626
        %v1680 = vsel %vm1678, %v1679, %v1626
        %v1681 = vshrl.u32 %v1680, 4
        %v1682 = vand.u32 %v1680, 15
        %v1683 = vsub.s32 0, %v1682
        %v1684 = vsel %vm1678, %v1683, %v1682
        %vm1685 = vcmp.lt.s32.totalorder %v1627, 0
        %v1686 = vsub.s32 0, %v1627
        %v1687 = vsel %vm1685, %v1686, %v1627
        %v1688 = vshrl.u32 %v1687, 4
        %v1689 = vand.u32 %v1687, 15
        %v1690 = vsub.s32 0, %v1689
        %v1691 = vsel %vm1685, %v1690, %v1689
        %vm1692 = vcmp.lt.s32.totalorder %v1628, 0
        %v1693 = vsub.s32 0, %v1628
        %v1694 = vsel %vm1692, %v1693, %v1628
        %v1695 = vshrl.u32 %v1694, 4
        %v1696 = vand.u32 %v1694, 15
        %v1697 = vsub.s32 0, %v1696
        %v1698 = vsel %vm1692, %v1697, %v1696
        %vm1699 = vcmp.lt.s32.totalorder %v1629, 0
        %v1700 = vsub.s32 0, %v1629
        %v1701 = vsel %vm1699, %v1700, %v1629
        %v1702 = vshrl.u32 %v1701, 4
        %v1703 = vand.u32 %v1701, 15
        %v1704 = vsub.s32 0, %v1703
        %v1705 = vsel %vm1699, %v1704, %v1703
        %vm1706 = vcmp.lt.s32.totalorder %v1630, 0
        %v1707 = vsub.s32 0, %v1630
        %v1708 = vsel %vm1706, %v1707, %v1630
        %v1709 = vshrl.u32 %v1708, 4
        %v1710 = vand.u32 %v1708, 15
        %v1711 = vsub.s32 0, %v1710
        %v1712 = vsel %vm1706, %v1711, %v1710
        %vm1713 = vcmp.lt.s32.totalorder %v1631, 0
        %v1714 = vsub.s32 0, %v1631
        %v1715 = vsel %vm1713, %v1714, %v1631
        %v1716 = vshrl.u32 %v1715, 4
        %v1717 = vand.u32 %v1715, 15
        %v1718 = vsub.s32 0, %v1717
        %v1719 = vsel %vm1713, %v1718, %v1717
        %vm1720 = vcmp.lt.s32.totalorder %v1632, 0
        %v1721 = vsub.s32 0, %v1632
        %v1722 = vsel %vm1720, %v1721, %v1632
        %v1723 = vshrl.u32 %v1722, 4
        %v1724 = vand.u32 %v1722, 15
        %v1725 = vsub.s32 0, %v1724
        %v1726 = vsel %vm1720, %v1725, %v1724
        %vm1727 = vcmp.lt.s32.totalorder %v1633, 0
        %v1728 = vsub.s32 0, %v1633
        %v1729 = vsel %vm1727, %v1728, %v1633
        %v1730 = vshrl.u32 %v1729, 4
        %v1731 = vand.u32 %v1729, 15
        %v1732 = vsub.s32 0, %v1731
        %v1733 = vsel %vm1727, %v1732, %v1731
        %vm1734 = vcmp.lt.s32.totalorder %v1634, 0
        %v1735 = vsub.s32 0, %v1634
        %v1736 = vsel %vm1734, %v1735, %v1634
        %v1737 = vshrl.u32 %v1736, 4
        %v1738 = vand.u32 %v1736, 15
        %v1739 = vsub.s32 0, %v1738
        %v1740 = vsel %vm1734, %v1739, %v1738
        %vm1741 = vcmp.lt.s32.totalorder %v1635, 0
        %v1742 = vsub.s32 0, %v1635
        %v1743 = vsel %vm1741, %v1742, %v1635
        %v1744 = vshrl.u32 %v1743, 4
        %v1745 = vand.u32 %v1743, 15
        %v1746 = vsub.s32 0, %v1745
        %v1747 = vsel %vm1741, %v1746, %v1745
        %vm1748 = vcmp.lt.s32.totalorder %v1636, 0
        %v1749 = vsub.s32 0, %v1636
        %v1750 = vsel %vm1748, %v1749, %v1636
        %v1751 = vshrl.u32 %v1750, 4
        %v1752 = vand.u32 %v1750, 15
        %v1753 = vsub.s32 0, %v1752
        %v1754 = vsel %vm1748, %v1753, %v1752
        %vm1755 = vcmp.lt.s32.totalorder %v1637, 0
        %v1756 = vsub.s32 0, %v1637
        %v1757 = vsel %vm1755, %v1756, %v1637
        %v1758 = vshrl.u32 %v1757, 4
        %v1759 = vand.u32 %v1757, 15
        %v1760 = vsub.s32 0, %v1759
        %v1761 = vsel %vm1755, %v1760, %v1759
        %vm1762 = vcmp.lt.s32.totalorder %v1638, 0
        %v1763 = vsub.s32 0, %v1638
        %v1764 = vsel %vm1762, %v1763, %v1638
        %v1765 = vshrl.u32 %v1764, 4
        %v1766 = vand.u32 %v1764, 15
        %v1767 = vsub.s32 0, %v1766
        %v1768 = vsel %vm1762, %v1767, %v1766
        %vm1769 = vcmp.lt.s32.totalorder %v1639, 0
        %v1770 = vsub.s32 0, %v1639
        %v1771 = vsel %vm1769, %v1770, %v1639
        %v1772 = vshrl.u32 %v1771, 4
        %v1773 = vand.u32 %v1771, 15
        %v1774 = vsub.s32 0, %v1773
        %v1775 = vsel %vm1769, %v1774, %v1773
        %vm1776 = vcmp.lt.s32.totalorder %v1640, 0
        %v1777 = vsub.s32 0, %v1640
        %v1778 = vsel %vm1776, %v1777, %v1640
        %v1779 = vshrl.u32 %v1778, 4
        %v1780 = vand.u32 %v1778, 15
        %v1781 = vsub.s32 0, %v1780
        %v1782 = vsel %vm1776, %v1781, %v1780
        %vm1783 = vcmp.lt.s32.totalorder %v1641, 0
        %v1784 = vsub.s32 0, %v1641
        %v1785 = vsel %vm1783, %v1784, %v1641
        %v1786 = vshrl.u32 %v1785, 4
        %v1787 = vand.u32 %v1785, 15
        %v1788 = vsub.s32 0, %v1787
        %v1789 = vsel %vm1783, %v1788, %v1787
        %vm1790 = vcmp.lt.s32.totalorder %v1642, 0
        %v1791 = vsub.s32 0, %v1642
        %v1792 = vsel %vm1790, %v1791, %v1642
        %v1793 = vshrl.u32 %v1792, 4
        %v1794 = vand.u32 %v1792, 15
        %v1795 = vsub.s32 0, %v1794
        %v1796 = vsel %vm1790, %v1795, %v1794
        %vm1797 = vcmp.lt.s32.totalorder %v1643, 0
        %v1798 = vsub.s32 0, %v1643
        %v1799 = vsel %vm1797, %v1798, %v1643
        %v1800 = vshrl.u32 %v1799, 4
        %v1801 = vand.u32 %v1799, 15
        %v1802 = vsub.s32 0, %v1801
        %v1803 = vsel %vm1797, %v1802, %v1801
        %vm1804 = vcmp.lt.s32.totalorder %v1644, 0
        %v1805 = vsub.s32 0, %v1644
        %v1806 = vsel %vm1804, %v1805, %v1644
        %v1807 = vshrl.u32 %v1806, 4
        %v1808 = vand.u32 %v1806, 15
        %v1809 = vsub.s32 0, %v1808
        %v1810 = vsel %vm1804, %v1809, %v1808
        %vm1811 = vcmp.lt.s32.totalorder %v1645, 0
        %v1812 = vsub.s32 0, %v1645
        %v1813 = vsel %vm1811, %v1812, %v1645
        %v1814 = vshrl.u32 %v1813, 4
        %v1815 = vand.u32 %v1813, 15
        %v1816 = vsub.s32 0, %v1815
        %v1817 = vsel %vm1811, %v1816, %v1815
        %vm1818 = vcmp.lt.s32.totalorder %v1646, 0
        %v1819 = vsub.s32 0, %v1646
        %v1820 = vsel %vm1818, %v1819, %v1646
        %v1821 = vshrl.u32 %v1820, 4
        %v1822 = vand.u32 %v1820, 15
        %v1823 = vsub.s32 0, %v1822
        %v1824 = vsel %vm1818, %v1823, %v1822
        %vm1825 = vcmp.lt.s32.totalorder %v1647, 0
        %v1826 = vsub.s32 0, %v1647
        %v1827 = vsel %vm1825, %v1826, %v1647
        %v1828 = vshrl.u32 %v1827, 4
        %v1829 = vand.u32 %v1827, 15
        %v1830 = vsub.s32 0, %v1829
        %v1831 = vsel %vm1825, %v1830, %v1829
        %vm1832 = vcmp.lt.s32.totalorder %v1648, 0
        %v1833 = vsub.s32 0, %v1648
        %v1834 = vsel %vm1832, %v1833, %v1648
        %v1835 = vshrl.u32 %v1834, 4
        %v1836 = vand.u32 %v1834, 15
        %v1837 = vsub.s32 0, %v1836
        %v1838 = vsel %vm1832, %v1837, %v1836
        %vm1839 = vcmp.lt.s32.totalorder %v1649, 0
        %v1840 = vsub.s32 0, %v1649
        %v1841 = vsel %vm1839, %v1840, %v1649
        %v1842 = vshrl.u32 %v1841, 4
        %v1843 = vand.u32 %v1841, 15
        %v1844 = vsub.s32 0, %v1843
        %v1845 = vsel %vm1839, %v1844, %v1843
        %vm1846 = vcmp.lt.s32.totalorder %v1650, 0
        %v1847 = vsub.s32 0, %v1650
        %v1848 = vsel %vm1846, %v1847, %v1650
        %v1849 = vshrl.u32 %v1848, 4
        %v1850 = vand.u32 %v1848, 15
        %v1851 = vsub.s32 0, %v1850
        %v1852 = vsel %vm1846, %v1851, %v1850
        %vm1853 = vcmp.lt.s32.totalorder %v1651, 0
        %v1854 = vsub.s32 0, %v1651
        %v1855 = vsel %vm1853, %v1854, %v1651
        %v1856 = vshrl.u32 %v1855, 4
        %v1857 = vand.u32 %v1855, 15
        %v1858 = vsub.s32 0, %v1857
        %v1859 = vsel %vm1853, %v1858, %v1857
        %vm1860 = vcmp.lt.s32.totalorder %v1652, 0
        %v1861 = vsub.s32 0, %v1652
        %v1862 = vsel %vm1860, %v1861, %v1652
        %v1863 = vshrl.u32 %v1862, 4
        %v1864 = vand.u32 %v1862, 15
        %v1865 = vsub.s32 0, %v1864
        %v1866 = vsel %vm1860, %v1865, %v1864
        %vm1867 = vcmp.lt.s32.totalorder %v1653, 0
        %v1868 = vsub.s32 0, %v1653
        %v1869 = vsel %vm1867, %v1868, %v1653
        %v1870 = vshrl.u32 %v1869, 4
        %v1871 = vand.u32 %v1869, 15
        %v1872 = vsub.s32 0, %v1871
        %v1873 = vsel %vm1867, %v1872, %v1871
        %vm1874 = vcmp.lt.s32.totalorder %v1654, 0
        %v1875 = vsub.s32 0, %v1654
        %v1876 = vsel %vm1874, %v1875, %v1654
        %v1877 = vshrl.u32 %v1876, 4
        %v1878 = vand.u32 %v1876, 15
        %v1879 = vsub.s32 0, %v1878
        %v1880 = vsel %vm1874, %v1879, %v1878
        %vm1881 = vcmp.lt.s32.totalorder %v1655, 0
        %v1882 = vsub.s32 0, %v1655
        %v1883 = vsel %vm1881, %v1882, %v1655
        %v1884 = vshrl.u32 %v1883, 4
        %v1885 = vand.u32 %v1883, 15
        %v1886 = vsub.s32 0, %v1885
        %v1887 = vsel %vm1881, %v1886, %v1885
        %vm1888 = vcmp.lt.s32.totalorder %v1656, 0
        %v1889 = vsub.s32 0, %v1656
        %v1890 = vsel %vm1888, %v1889, %v1656
        %v1891 = vshrl.u32 %v1890, 4
        %v1892 = vand.u32 %v1890, 15
        %v1893 = vsub.s32 0, %v1892
        %v1894 = vsel %vm1888, %v1893, %v1892
        %vm1895 = vcmp.ne.s32.totalorder %v1663, 0
        %vm1896 = vcmp.ne.s32.totalorder %v1670, 0
        %vm1897 = vcmp.ne.s32.totalorder %v1677, 0
        %vm1898 = vcmp.ne.s32.totalorder %v1684, 0
        %vm1899 = vcmp.ne.s32.totalorder %v1691, 0
        %vm1900 = vcmp.ne.s32.totalorder %v1698, 0
        %vm1901 = vcmp.ne.s32.totalorder %v1705, 0
        %vm1902 = vcmp.ne.s32.totalorder %v1712, 0
        %vm1903 = vcmp.ne.s32.totalorder %v1719, 0
        %vm1904 = vcmp.ne.s32.totalorder %v1726, 0
        %vm1905 = vcmp.ne.s32.totalorder %v1733, 0
        %vm1906 = vcmp.ne.s32.totalorder %v1740, 0
        %vm1907 = vcmp.ne.s32.totalorder %v1747, 0
        %vm1908 = vcmp.ne.s32.totalorder %v1754, 0
        %vm1909 = vcmp.ne.s32.totalorder %v1761, 0
        %vm1910 = vcmp.ne.s32.totalorder %v1768, 0
        %vm1911 = vcmp.ne.s32.totalorder %v1775, 0
        %vm1912 = vcmp.ne.s32.totalorder %v1782, 0
        %vm1913 = vcmp.ne.s32.totalorder %v1789, 0
        %vm1914 = vcmp.ne.s32.totalorder %v1796, 0
        %vm1915 = vcmp.ne.s32.totalorder %v1803, 0
        %vm1916 = vcmp.ne.s32.totalorder %v1810, 0
        %vm1917 = vcmp.ne.s32.totalorder %v1817, 0
        %vm1918 = vcmp.ne.s32.totalorder %v1824, 0
        %vm1919 = vcmp.ne.s32.totalorder %v1831, 0
        %vm1920 = vcmp.ne.s32.totalorder %v1838, 0
        %vm1921 = vcmp.ne.s32.totalorder %v1845, 0
        %vm1922 = vcmp.ne.s32.totalorder %v1852, 0
        %vm1923 = vcmp.ne.s32.totalorder %v1859, 0
        %vm1924 = vcmp.ne.s32.totalorder %v1866, 0
        %vm1925 = vcmp.ne.s32.totalorder %v1873, 0
        %vm1926 = vcmp.ne.s32.totalorder %v1880, 0
        %vm1927 = vcmp.ne.s32.totalorder %v1887, 0
        %vm1928 = vcmp.ne.s32.totalorder %v1894, 0
        %vm1929 = vcmp.lt.s32.totalorder %v1663, 0
        %vm1930 = vcmp.lt.s32.totalorder %v1670, 0
        %vm1931 = vcmp.lt.s32.totalorder %v1677, 0
        %vm1932 = vcmp.lt.s32.totalorder %v1684, 0
        %vm1933 = vcmp.lt.s32.totalorder %v1691, 0
        %vm1934 = vcmp.lt.s32.totalorder %v1698, 0
        %vm1935 = vcmp.lt.s32.totalorder %v1705, 0
        %vm1936 = vcmp.lt.s32.totalorder %v1712, 0
        %vm1937 = vcmp.lt.s32.totalorder %v1719, 0
        %vm1938 = vcmp.lt.s32.totalorder %v1726, 0
        %vm1939 = vcmp.lt.s32.totalorder %v1733, 0
        %vm1940 = vcmp.lt.s32.totalorder %v1740, 0
        %vm1941 = vcmp.lt.s32.totalorder %v1747, 0
        %vm1942 = vcmp.lt.s32.totalorder %v1754, 0
        %vm1943 = vcmp.lt.s32.totalorder %v1761, 0
        %vm1944 = vcmp.lt.s32.totalorder %v1768, 0
        %vm1945 = vcmp.lt.s32.totalorder %v1775, 0
        %vm1946 = vcmp.lt.s32.totalorder %v1782, 0
        %vm1947 = vcmp.lt.s32.totalorder %v1789, 0
        %vm1948 = vcmp.lt.s32.totalorder %v1796, 0
        %vm1949 = vcmp.lt.s32.totalorder %v1803, 0
        %vm1950 = vcmp.lt.s32.totalorder %v1810, 0
        %vm1951 = vcmp.lt.s32.totalorder %v1817, 0
        %vm1952 = vcmp.lt.s32.totalorder %v1824, 0
        %vm1953 = vcmp.lt.s32.totalorder %v1831, 0
        %vm1954 = vcmp.lt.s32.totalorder %v1838, 0
        %vm1955 = vcmp.lt.s32.totalorder %v1845, 0
        %vm1956 = vcmp.lt.s32.totalorder %v1852, 0
        %vm1957 = vcmp.lt.s32.totalorder %v1859, 0
        %vm1958 = vcmp.lt.s32.totalorder %v1866, 0
        %vm1959 = vcmp.lt.s32.totalorder %v1873, 0
        %vm1960 = vcmp.lt.s32.totalorder %v1880, 0
        %vm1961 = vcmp.lt.s32.totalorder %v1887, 0
        %vm1962 = vcmp.lt.s32.totalorder %v1894, 0
        %vm1963 = vmand %vm1929, %vm1895
        %vm1964 = vmand %vm1930, %vm1896
        %vm1965 = vmand %vm1931, %vm1897
        %vm1966 = vmand %vm1932, %vm1898
        %vm1967 = vmand %vm1933, %vm1899
        %vm1968 = vmand %vm1934, %vm1900
        %vm1969 = vmand %vm1935, %vm1901
        %vm1970 = vmand %vm1936, %vm1902
        %vm1971 = vmand %vm1937, %vm1903
        %vm1972 = vmand %vm1938, %vm1904
        %vm1973 = vmand %vm1939, %vm1905
        %vm1974 = vmand %vm1940, %vm1906
        %vm1975 = vmand %vm1941, %vm1907
        %vm1976 = vmand %vm1942, %vm1908
        %vm1977 = vmand %vm1943, %vm1909
        %vm1978 = vmand %vm1944, %vm1910
        %vm1979 = vmand %vm1945, %vm1911
        %vm1980 = vmand %vm1946, %vm1912
        %vm1981 = vmand %vm1947, %vm1913
        %vm1982 = vmand %vm1948, %vm1914
        %vm1983 = vmand %vm1949, %vm1915
        %vm1984 = vmand %vm1950, %vm1916
        %vm1985 = vmand %vm1951, %vm1917
        %vm1986 = vmand %vm1952, %vm1918
        %vm1987 = vmand %vm1953, %vm1919
        %vm1988 = vmand %vm1954, %vm1920
        %vm1989 = vmand %vm1955, %vm1921
        %vm1990 = vmand %vm1956, %vm1922
        %vm1991 = vmand %vm1957, %vm1923
        %vm1992 = vmand %vm1958, %vm1924
        %vm1993 = vmand %vm1959, %vm1925
        %vm1994 = vmand %vm1960, %vm1926
        %vm1995 = vmand %vm1961, %vm1927
        %vm1996 = vmand %vm1962, %vm1928
        %v1997 = vadd.s32 %v1663, 16
        %v1998 = vadd.s32 %v1670, 16
        %v1999 = vadd.s32 %v1677, 16
        %v2000 = vadd.s32 %v1684, 16
        %v2001 = vadd.s32 %v1691, 16
        %v2002 = vadd.s32 %v1698, 16
        %v2003 = vadd.s32 %v1705, 16
        %v2004 = vadd.s32 %v1712, 16
        %v2005 = vadd.s32 %v1719, 16
        %v2006 = vadd.s32 %v1726, 16
        %v2007 = vadd.s32 %v1733, 16
        %v2008 = vadd.s32 %v1740, 16
        %v2009 = vadd.s32 %v1747, 16
        %v2010 = vadd.s32 %v1754, 16
        %v2011 = vadd.s32 %v1761, 16
        %v2012 = vadd.s32 %v1768, 16
        %v2013 = vadd.s32 %v1775, 16
        %v2014 = vadd.s32 %v1782, 16
        %v2015 = vadd.s32 %v1789, 16
        %v2016 = vadd.s32 %v1796, 16
        %v2017 = vadd.s32 %v1803, 16
        %v2018 = vadd.s32 %v1810, 16
        %v2019 = vadd.s32 %v1817, 16
        %v2020 = vadd.s32 %v1824, 16
        %v2021 = vadd.s32 %v1831, 16
        %v2022 = vadd.s32 %v1838, 16
        %v2023 = vadd.s32 %v1845, 16
        %v2024 = vadd.s32 %v1852, 16
        %v2025 = vadd.s32 %v1859, 16
        %v2026 = vadd.s32 %v1866, 16
        %v2027 = vadd.s32 %v1873, 16
        %v2028 = vadd.s32 %v1880, 16
        %v2029 = vadd.s32 %v1887, 16
        %v2030 = vadd.s32 %v1894, 16
        %v2031 = vsel %vm1963, %v1997, %v1663
        %v2032 = vsel %vm1964, %v1998, %v1670
        %v2033 = vsel %vm1965, %v1999, %v1677
        %v2034 = vsel %vm1966, %v2000, %v1684
        %v2035 = vsel %vm1967, %v2001, %v1691
        %v2036 = vsel %vm1968, %v2002, %v1698
        %v2037 = vsel %vm1969, %v2003, %v1705
        %v2038 = vsel %vm1970, %v2004, %v1712
        %v2039 = vsel %vm1971, %v2005, %v1719
        %v2040 = vsel %vm1972, %v2006, %v1726
        %v2041 = vsel %vm1973, %v2007, %v1733
        %v2042 = vsel %vm1974, %v2008, %v1740
        %v2043 = vsel %vm1975, %v2009, %v1747
        %v2044 = vsel %vm1976, %v2010, %v1754
        %v2045 = vsel %vm1977, %v2011, %v1761
        %v2046 = vsel %vm1978, %v2012, %v1768
        %v2047 = vsel %vm1979, %v2013, %v1775
        %v2048 = vsel %vm1980, %v2014, %v1782
        %v2049 = vsel %vm1981, %v2015, %v1789
        %v2050 = vsel %vm1982, %v2016, %v1796
        %v2051 = vsel %vm1983, %v2017, %v1803
        %v2052 = vsel %vm1984, %v2018, %v1810
        %v2053 = vsel %vm1985, %v2019, %v1817
        %v2054 = vsel %vm1986, %v2020, %v1824
        %v2055 = vsel %vm1987, %v2021, %v1831
        %v2056 = vsel %vm1988, %v2022, %v1838
        %v2057 = vsel %vm1989, %v2023, %v1845
        %v2058 = vsel %vm1990, %v2024, %v1852
        %v2059 = vsel %vm1991, %v2025, %v1859
        %v2060 = vsel %vm1992, %v2026, %v1866
        %v2061 = vsel %vm1993, %v2027, %v1873
        %v2062 = vsel %vm1994, %v2028, %v1880
        %v2063 = vsel %vm1995, %v2029, %v1887
        %v2064 = vsel %vm1996, %v2030, %v1894
        %vm2065 = vcmp.ne.s32.totalorder %v2031, 15
        %vm2066 = vcmp.ne.s32.totalorder %v2032, 15
        %vm2067 = vcmp.ne.s32.totalorder %v2033, 15
        %vm2068 = vcmp.ne.s32.totalorder %v2034, 15
        %vm2069 = vcmp.ne.s32.totalorder %v2035, 15
        %vm2070 = vcmp.ne.s32.totalorder %v2036, 15
        %vm2071 = vcmp.ne.s32.totalorder %v2037, 15
        %vm2072 = vcmp.ne.s32.totalorder %v2038, 15
        %vm2073 = vcmp.ne.s32.totalorder %v2039, 15
        %vm2074 = vcmp.ne.s32.totalorder %v2040, 15
        %vm2075 = vcmp.ne.s32.totalorder %v2041, 15
        %vm2076 = vcmp.ne.s32.totalorder %v2042, 15
        %vm2077 = vcmp.ne.s32.totalorder %v2043, 15
        %vm2078 = vcmp.ne.s32.totalorder %v2044, 15
        %vm2079 = vcmp.ne.s32.totalorder %v2045, 15
        %vm2080 = vcmp.ne.s32.totalorder %v2046, 15
        %vm2081 = vcmp.ne.s32.totalorder %v2047, 15
        %vm2082 = vcmp.ne.s32.totalorder %v2048, 15
        %vm2083 = vcmp.ne.s32.totalorder %v2049, 15
        %vm2084 = vcmp.ne.s32.totalorder %v2050, 15
        %vm2085 = vcmp.ne.s32.totalorder %v2051, 15
        %vm2086 = vcmp.ne.s32.totalorder %v2052, 15
        %vm2087 = vcmp.ne.s32.totalorder %v2053, 15
        %vm2088 = vcmp.ne.s32.totalorder %v2054, 15
        %vm2089 = vcmp.ne.s32.totalorder %v2055, 15
        %vm2090 = vcmp.ne.s32.totalorder %v2056, 15
        %vm2091 = vcmp.ne.s32.totalorder %v2057, 15
        %vm2092 = vcmp.ne.s32.totalorder %v2058, 15
        %vm2093 = vcmp.ne.s32.totalorder %v2059, 15
        %vm2094 = vcmp.ne.s32.totalorder %v2060, 15
        %vm2095 = vcmp.ne.s32.totalorder %v2061, 15
        %vm2096 = vcmp.ne.s32.totalorder %v2062, 15
        %vm2097 = vcmp.ne.s32.totalorder %v2063, 15
        %vm2098 = vcmp.ne.s32.totalorder %v2064, 15
        %v2099 = vsel %vm2065, 1, 0
        %v2100 = vsel %vm2066, 1, 0
        %v2101 = vsel %vm2067, 1, 0
        %v2102 = vsel %vm2068, 1, 0
        %v2103 = vsel %vm2069, 1, 0
        %v2104 = vsel %vm2070, 1, 0
        %v2105 = vsel %vm2071, 1, 0
        %v2106 = vsel %vm2072, 1, 0
        %v2107 = vsel %vm2073, 1, 0
        %v2108 = vsel %vm2074, 1, 0
        %v2109 = vsel %vm2075, 1, 0
        %v2110 = vsel %vm2076, 1, 0
        %v2111 = vsel %vm2077, 1, 0
        %v2112 = vsel %vm2078, 1, 0
        %v2113 = vsel %vm2079, 1, 0
        %v2114 = vsel %vm2080, 1, 0
        %v2115 = vsel %vm2081, 1, 0
        %v2116 = vsel %vm2082, 1, 0
        %v2117 = vsel %vm2083, 1, 0
        %v2118 = vsel %vm2084, 1, 0
        %v2119 = vsel %vm2085, 1, 0
        %v2120 = vsel %vm2086, 1, 0
        %v2121 = vsel %vm2087, 1, 0
        %v2122 = vsel %vm2088, 1, 0
        %v2123 = vsel %vm2089, 1, 0
        %v2124 = vsel %vm2090, 1, 0
        %v2125 = vsel %vm2091, 1, 0
        %v2126 = vsel %vm2092, 1, 0
        %v2127 = vsel %vm2093, 1, 0
        %v2128 = vsel %vm2094, 1, 0
        %v2129 = vsel %vm2095, 1, 0
        %v2130 = vsel %vm2096, 1, 0
        %v2131 = vsel %vm2097, 1, 0
        %v2132 = vsel %vm2098, 1, 0
        %v2133 = vcvt.s32.f32 %v2099
        %v2134 = vcvt.s32.f32 %v2100
        %v2135 = vcvt.s32.f32 %v2101
        %v2136 = vcvt.s32.f32 %v2102
        %v2137 = vcvt.s32.f32 %v2103
        %v2138 = vcvt.s32.f32 %v2104
        %v2139 = vcvt.s32.f32 %v2105
        %v2140 = vcvt.s32.f32 %v2106
        %v2141 = vcvt.s32.f32 %v2107
        %v2142 = vcvt.s32.f32 %v2108
        %v2143 = vcvt.s32.f32 %v2109
        %v2144 = vcvt.s32.f32 %v2110
        %v2145 = vcvt.s32.f32 %v2111
        %v2146 = vcvt.s32.f32 %v2112
        %v2147 = vcvt.s32.f32 %v2113
        %v2148 = vcvt.s32.f32 %v2114
        %v2149 = vcvt.s32.f32 %v2115
        %v2150 = vcvt.s32.f32 %v2116
        %v2151 = vcvt.s32.f32 %v2117
        %v2152 = vcvt.s32.f32 %v2118
        %v2153 = vcvt.s32.f32 %v2119
        %v2154 = vcvt.s32.f32 %v2120
        %v2155 = vcvt.s32.f32 %v2121
        %v2156 = vcvt.s32.f32 %v2122
        %v2157 = vcvt.s32.f32 %v2123
        %v2158 = vcvt.s32.f32 %v2124
        %v2159 = vcvt.s32.f32 %v2125
        %v2160 = vcvt.s32.f32 %v2126
        %v2161 = vcvt.s32.f32 %v2127
        %v2162 = vcvt.s32.f32 %v2128
        %v2163 = vcvt.s32.f32 %v2129
        %v2164 = vcvt.s32.f32 %v2130
        %v2165 = vcvt.s32.f32 %v2131
        %v2166 = vcvt.s32.f32 %v2132
        %v2167 = vpack.c.bf16 %v2134, %v2133
        %v2168 = vpack.c.bf16 %v2136, %v2135
        %v2169 = vpack.c.bf16 %v2138, %v2137
        %v2170 = vpack.c.bf16 %v2140, %v2139
        %v2171 = vpack.c.bf16 %v2142, %v2141
        %v2172 = vpack.c.bf16 %v2144, %v2143
        %v2173 = vpack.c.bf16 %v2146, %v2145
        %v2174 = vpack.c.bf16 %v2148, %v2147
        %v2175 = vpack.c.bf16 %v2150, %v2149
        %v2176 = vpack.c.bf16 %v2152, %v2151
        %v2177 = vpack.c.bf16 %v2154, %v2153
        %v2178 = vpack.c.bf16 %v2156, %v2155
        %v2179 = vpack.c.bf16 %v2158, %v2157
        %v2180 = vpack.c.bf16 %v2160, %v2159
        %v2181 = vpack.c.bf16 %v2162, %v2161
        %v2182 = vpack.c.bf16 %v2164, %v2163
        %v2183 = vpack.c.bf16 %v2166, %v2165
        %vm2184 = vsmask.f32 7424
        %v2186 = vshrl.u32 %v1602, 16
        %v2188 = vshll.u32 %v1602, 16
        %v2190 = vrot.slane %v2188, 1
        %v2191 = vor.u32 %v2186, %v2190
        %v2193 = vshll.u32 %v1603, 16
        %v2195 = vrot.slane %v2193, 1
        %v2196 = vsel %vm2184, %v2191, %v2195
        %v2197 = vshrl.u32 %v1603, 16
        %v2199 = vor.u32 %v2197, %v2195
        %v2201 = vshll.u32 %v1604, 16
        %v2203 = vrot.slane %v2201, 1
        %v2204 = vsel %vm2184, %v2199, %v2203
        %v2205 = vshrl.u32 %v1604, 16
        %v2207 = vor.u32 %v2205, %v2203
        %v2209 = vshll.u32 %v1605, 16
        %v2211 = vrot.slane %v2209, 1
        %v2212 = vsel %vm2184, %v2207, %v2211
        %v2213 = vshrl.u32 %v1605, 16
        %v2215 = vor.u32 %v2213, %v2211
        %v2217 = vshll.u32 %v1606, 16
        %v2219 = vrot.slane %v2217, 1
        %v2220 = vsel %vm2184, %v2215, %v2219
        %v2221 = vshrl.u32 %v1606, 16
        %v2223 = vor.u32 %v2221, %v2219
        %v2225 = vshll.u32 %v1607, 16
        %v2227 = vrot.slane %v2225, 1
        %v2228 = vsel %vm2184, %v2223, %v2227
        %v2229 = vshrl.u32 %v1607, 16
        %v2231 = vor.u32 %v2229, %v2227
        %v2233 = vshll.u32 %v1608, 16
        %v2235 = vrot.slane %v2233, 1
        %v2236 = vsel %vm2184, %v2231, %v2235
        %v2237 = vshrl.u32 %v1608, 16
        %v2239 = vor.u32 %v2237, %v2235
        %v2241 = vshll.u32 %v1609, 16
        %v2243 = vrot.slane %v2241, 1
        %v2244 = vsel %vm2184, %v2239, %v2243
        %v2245 = vshrl.u32 %v1609, 16
        %v2247 = vor.u32 %v2245, %v2243
        %v2249 = vshll.u32 %v1610, 16
        %v2251 = vrot.slane %v2249, 1
        %v2252 = vsel %vm2184, %v2247, %v2251
        %v2253 = vshrl.u32 %v1610, 16
        %v2255 = vor.u32 %v2253, %v2251
        %v2257 = vshll.u32 %v1611, 16
        %v2259 = vrot.slane %v2257, 1
        %v2260 = vsel %vm2184, %v2255, %v2259
        %v2261 = vshrl.u32 %v1611, 16
        %v2263 = vor.u32 %v2261, %v2259
        %v2265 = vshll.u32 %v1612, 16
        %v2267 = vrot.slane %v2265, 1
        %v2268 = vsel %vm2184, %v2263, %v2267
        %v2269 = vshrl.u32 %v1612, 16
        %v2271 = vor.u32 %v2269, %v2267
        %v2273 = vshll.u32 %v1613, 16
        %v2275 = vrot.slane %v2273, 1
        %v2276 = vsel %vm2184, %v2271, %v2275
        %v2277 = vshrl.u32 %v1613, 16
        %v2279 = vor.u32 %v2277, %v2275
        %v2281 = vshll.u32 %v1614, 16
        %v2283 = vrot.slane %v2281, 1
        %v2284 = vsel %vm2184, %v2279, %v2283
        %v2285 = vshrl.u32 %v1614, 16
        %v2287 = vor.u32 %v2285, %v2283
        %v2289 = vshll.u32 %v1615, 16
        %v2291 = vrot.slane %v2289, 1
        %v2292 = vsel %vm2184, %v2287, %v2291
        %v2293 = vshrl.u32 %v1615, 16
        %v2295 = vor.u32 %v2293, %v2291
        %v2297 = vshll.u32 %v1616, 16
        %v2299 = vrot.slane %v2297, 1
        %v2300 = vsel %vm2184, %v2295, %v2299
        %v2301 = vshrl.u32 %v1616, 16
        %v2303 = vor.u32 %v2301, %v2299
        %v2305 = vshll.u32 %v1617, 16
        %v2307 = vrot.slane %v2305, 1
        %v2308 = vsel %vm2184, %v2303, %v2307
        %v2309 = vshrl.u32 %v1617, 16
        %v2311 = vor.u32 %v2309, %v2307
        %v2313 = vshll.u32 %v1621, 16
        %v2315 = vrot.slane %v2313, 1
        %v2316 = vsel %vm2184, %v2311, %v2315
        %v2317 = vshrl.u32 %v1621, 16
        %v2319 = vor.u32 %v2317, %v2315
        %vm2337 = vcmask 1047552
        %vm2338 = vmand %vm2337, %vm2184
        %v2339 = vsel %vm2338, %v2319, 0
        %v2340 = vmul.bf16 %v2196, %v2167
        %v2341 = vmul.bf16 %v2204, %v2168
        %v2342 = vmul.bf16 %v2212, %v2169
        %v2343 = vmul.bf16 %v2220, %v2170
        %v2344 = vmul.bf16 %v2228, %v2171
        %v2345 = vmul.bf16 %v2236, %v2172
        %v2346 = vmul.bf16 %v2244, %v2173
        %v2347 = vmul.bf16 %v2252, %v2174
        %v2348 = vmul.bf16 %v2260, %v2175
        %v2349 = vmul.bf16 %v2268, %v2176
        %v2350 = vmul.bf16 %v2276, %v2177
        %v2351 = vmul.bf16 %v2284, %v2178
        %v2352 = vmul.bf16 %v2292, %v2179
        %v2353 = vmul.bf16 %v2300, %v2180
        %v2354 = vmul.bf16 %v2308, %v2181
        %v2355 = vmul.bf16 %v2316, %v2182
        %v2356 = vmul.bf16 %v2339, %v2183
        %v2357 = vld [vmem:[#allocation8] sm:$0xff]
        %v2358 = vld [vmem:[#allocation8 + $0x8] sm:$0xff]
        %v2359 = vld [vmem:[#allocation8 + $0x10] sm:$0xff]
        %v2360 = vld [vmem:[#allocation8 + $0x18] sm:$0xff]
        %v2361 = vld [vmem:[#allocation8 + $0x20] sm:$0xff]
        %v2362 = vld [vmem:[#allocation8 + $0x28] sm:$0xff]
        %v2363 = vld [vmem:[#allocation8 + $0x30] sm:$0xff]
        %v2364 = vld [vmem:[#allocation8 + $0x38] sm:$0xff]
        %v2365 = vld [vmem:[#allocation8 + $0x40] sm:$0xff]
        %v2366 = vld [vmem:[#allocation8 + $0x48] sm:$0xff]
        %v2367 = vld [vmem:[#allocation8 + $0x50] sm:$0xff]
        %v2368 = vld [vmem:[#allocation8 + $0x58] sm:$0xff]
        %v2369 = vld [vmem:[#allocation8 + $0x60] sm:$0xff]
        %v2370 = vld [vmem:[#allocation8 + $0x68] sm:$0xff]
        %v2371 = vld [vmem:[#allocation8 + $0x70] sm:$0xff]
        %v2372 = vld [vmem:[#allocation8 + $0x78] sm:$0xff]
        %v2373 = vld [vmem:[#allocation8 + $0x80] sm:$0xff]
        %v2374 = vld [vmem:[#allocation8 + $0x88] sm:$0xff]
        %v2375 = vld [vmem:[#allocation8 + $0x90] sm:$0xff]
        %v2376 = vld [vmem:[#allocation8 + $0x98] sm:$0xff]
        %v2377 = vld [vmem:[#allocation8 + $0xa0] sm:$0xff]
        %v2378 = vld [vmem:[#allocation8 + $0xa8] sm:$0xff]
        %v2379 = vld [vmem:[#allocation8 + $0xb0] sm:$0xff]
        %v2380 = vld [vmem:[#allocation8 + $0xb8] sm:$0xff]
        %v2381 = vld [vmem:[#allocation8 + $0xc0] sm:$0xff]
        %v2382 = vld [vmem:[#allocation8 + $0xc8] sm:$0xff]
        %v2383 = vld [vmem:[#allocation8 + $0xd0] sm:$0xff]
        %v2384 = vld [vmem:[#allocation8 + $0xd8] sm:$0xff]
        %v2385 = vld [vmem:[#allocation8 + $0xe0] sm:$0xff]
        %v2386 = vld [vmem:[#allocation8 + $0xe8] sm:$0xff]
        %v2387 = vld [vmem:[#allocation8 + $0xf0] sm:$0xff]
        %v2388 = vld [vmem:[#allocation8 + $0xf8] sm:$0xff]
        %v2389 = vld [vmem:[#allocation8 + $0x100] sm:$0xff]
        %v2390 = vld [vmem:[#allocation8 + $0x108] sm:$0xff]
        %v2391 = vld [vmem:[#allocation8 + $0x110] sm:$0xff]
        %v2392 = vld [vmem:[#allocation8 + $0x118] sm:$0xff]
        %v2393 = vld [vmem:[#allocation8 + $0x120] sm:$0xff]
        %v2394 = vld [vmem:[#allocation8 + $0x128] sm:$0xff]
        %v2395 = vld [vmem:[#allocation8 + $0x130] sm:$0xff]
        %v2396 = vld [vmem:[#allocation8 + $0x138] sm:$0xff]
        %v2397 = vld [vmem:[#allocation8 + $0x140] sm:$0xff]
        %v2398 = vld [vmem:[#allocation8 + $0x148] sm:$0xff]
        %v2399 = vld [vmem:[#allocation8 + $0x150] sm:$0xff]
        %v2400 = vld [vmem:[#allocation8 + $0x158] sm:$0xff]
        %v2401 = vld [vmem:[#allocation8 + $0x160] sm:$0xff]
        %v2402 = vld [vmem:[#allocation8 + $0x168] sm:$0xff]
        %v2403 = vld [vmem:[#allocation8 + $0x170] sm:$0xff]
        %v2404 = vld [vmem:[#allocation8 + $0x178] sm:$0xff]
        %v2405 = vld [vmem:[#allocation8 + $0x180] sm:$0xff]
        %v2406 = vld [vmem:[#allocation8 + $0x188] sm:$0xff]
        %v2407 = vld [vmem:[#allocation8 + $0x190] sm:$0xff]
        %v2408 = vld [vmem:[#allocation8 + $0x198] sm:$0xff]
        %v2409 = vld [vmem:[#allocation8 + $0x1a0] sm:$0xff]
        %v2410 = vld [vmem:[#allocation8 + $0x1a8] sm:$0xff]
        %v2411 = vld [vmem:[#allocation8 + $0x1b0] sm:$0xff]
        %v2412 = vld [vmem:[#allocation8 + $0x1b8] sm:$0xff]
        %v2413 = vld [vmem:[#allocation8 + $0x1c0] sm:$0xff]
        %v2414 = vld [vmem:[#allocation8 + $0x1c8] sm:$0xff]
        %v2415 = vld [vmem:[#allocation8 + $0x1d0] sm:$0xff]
        %v2416 = vld [vmem:[#allocation8 + $0x1d8] sm:$0xff]
        %v2417 = vld [vmem:[#allocation8 + $0x1e0] sm:$0xff]
        %v2418 = vld [vmem:[#allocation8 + $0x1e8] sm:$0xff]
        %v2419 = vld [vmem:[#allocation8 + $0x1f0] sm:$0xff]
        %v2420 = vld [vmem:[#allocation8 + $0x1f8] sm:$0xff]
        %v2485 = vunpack.c.l.b16 %v2357
        %v2486 = vunpack.c.h.b16 %v2357
        %v2487 = vunpack.c.l.b16 %v2358
        %v2488 = vunpack.c.h.b16 %v2358
        %v2489 = vunpack.c.l.b16 %v2359
        %v2490 = vunpack.c.h.b16 %v2359
        %v2491 = vunpack.c.l.b16 %v2360
        %v2492 = vunpack.c.h.b16 %v2360
        %v2493 = vunpack.c.l.b16 %v2361
        %v2494 = vunpack.c.h.b16 %v2361
        %v2495 = vunpack.c.l.b16 %v2362
        %v2496 = vunpack.c.h.b16 %v2362
        %v2497 = vunpack.c.l.b16 %v2363
        %v2498 = vunpack.c.h.b16 %v2363
        %v2499 = vunpack.c.l.b16 %v2364
        %v2500 = vunpack.c.h.b16 %v2364
        %v2501 = vunpack.c.l.b16 %v2365
        %v2502 = vunpack.c.h.b16 %v2365
        %v2503 = vunpack.c.l.b16 %v2366
        %v2504 = vunpack.c.h.b16 %v2366
        %v2505 = vunpack.c.l.b16 %v2367
        %v2506 = vunpack.c.h.b16 %v2367
        %v2507 = vunpack.c.l.b16 %v2368
        %v2508 = vunpack.c.h.b16 %v2368
        %v2509 = vunpack.c.l.b16 %v2369
        %v2510 = vunpack.c.h.b16 %v2369
        %v2511 = vunpack.c.l.b16 %v2370
        %v2512 = vunpack.c.h.b16 %v2370
        %v2513 = vunpack.c.l.b16 %v2371
        %v2514 = vunpack.c.h.b16 %v2371
        %v2515 = vunpack.c.l.b16 %v2372
        %v2516 = vunpack.c.h.b16 %v2372
        %v2517 = vunpack.c.l.b16 %v2373
        %v2518 = vunpack.c.h.b16 %v2373
        %v2519 = vunpack.c.l.b16 %v2374
        %v2520 = vunpack.c.h.b16 %v2374
        %v2521 = vunpack.c.l.b16 %v2375
        %v2522 = vunpack.c.h.b16 %v2375
        %v2523 = vunpack.c.l.b16 %v2376
        %v2524 = vunpack.c.h.b16 %v2376
        %v2525 = vunpack.c.l.b16 %v2377
        %v2526 = vunpack.c.h.b16 %v2377
        %v2527 = vunpack.c.l.b16 %v2378
        %v2528 = vunpack.c.h.b16 %v2378
        %v2529 = vunpack.c.l.b16 %v2379
        %v2530 = vunpack.c.h.b16 %v2379
        %v2531 = vunpack.c.l.b16 %v2380
        %v2532 = vunpack.c.h.b16 %v2380
        %v2533 = vunpack.c.l.b16 %v2381
        %v2534 = vunpack.c.h.b16 %v2381
        %v2535 = vunpack.c.l.b16 %v2382
        %v2536 = vunpack.c.h.b16 %v2382
        %v2537 = vunpack.c.l.b16 %v2383
        %v2538 = vunpack.c.h.b16 %v2383
        %v2539 = vunpack.c.l.b16 %v2384
        %v2540 = vunpack.c.h.b16 %v2384
        %v2541 = vunpack.c.l.b16 %v2385
        %v2542 = vunpack.c.h.b16 %v2385
        %v2543 = vunpack.c.l.b16 %v2386
        %v2544 = vunpack.c.h.b16 %v2386
        %v2545 = vunpack.c.l.b16 %v2387
        %v2546 = vunpack.c.h.b16 %v2387
        %v2547 = vunpack.c.l.b16 %v2388
        %v2548 = vunpack.c.h.b16 %v2388
        %v2549 = vunpack.c.l.b16 %v2389
        %v2550 = vunpack.c.h.b16 %v2389
        %v2551 = vunpack.c.l.b16 %v2390
        %v2552 = vunpack.c.h.b16 %v2390
        %v2553 = vunpack.c.l.b16 %v2391
        %v2554 = vunpack.c.h.b16 %v2391
        %v2555 = vunpack.c.l.b16 %v2392
        %v2556 = vunpack.c.h.b16 %v2392
        %v2557 = vunpack.c.l.b16 %v2393
        %v2558 = vunpack.c.h.b16 %v2393
        %v2559 = vunpack.c.l.b16 %v2394
        %v2560 = vunpack.c.h.b16 %v2394
        %v2561 = vunpack.c.l.b16 %v2395
        %v2562 = vunpack.c.h.b16 %v2395
        %v2563 = vunpack.c.l.b16 %v2396
        %v2564 = vunpack.c.h.b16 %v2396
        %v2565 = vunpack.c.l.b16 %v2397
        %v2566 = vunpack.c.h.b16 %v2397
        %v2567 = vunpack.c.l.b16 %v2398
        %v2568 = vunpack.c.h.b16 %v2398
        %v2569 = vunpack.c.l.b16 %v2399
        %v2570 = vunpack.c.h.b16 %v2399
        %v2571 = vunpack.c.l.b16 %v2400
        %v2572 = vunpack.c.h.b16 %v2400
        %v2573 = vunpack.c.l.b16 %v2401
        %v2574 = vunpack.c.h.b16 %v2401
        %v2575 = vunpack.c.l.b16 %v2402
        %v2576 = vunpack.c.h.b16 %v2402
        %v2577 = vunpack.c.l.b16 %v2403
        %v2578 = vunpack.c.h.b16 %v2403
        %v2579 = vunpack.c.l.b16 %v2404
        %v2580 = vunpack.c.h.b16 %v2404
        %v2581 = vunpack.c.l.b16 %v2405
        %v2582 = vunpack.c.h.b16 %v2405
        %v2583 = vunpack.c.l.b16 %v2406
        %v2584 = vunpack.c.h.b16 %v2406
        %v2585 = vunpack.c.l.b16 %v2407
        %v2586 = vunpack.c.h.b16 %v2407
        %v2587 = vunpack.c.l.b16 %v2408
        %v2588 = vunpack.c.h.b16 %v2408
        %v2589 = vunpack.c.l.b16 %v2409
        %v2590 = vunpack.c.h.b16 %v2409
        %v2591 = vunpack.c.l.b16 %v2410
        %v2592 = vunpack.c.h.b16 %v2410
        %v2593 = vunpack.c.l.b16 %v2411
        %v2594 = vunpack.c.h.b16 %v2411
        %v2595 = vunpack.c.l.b16 %v2412
        %v2596 = vunpack.c.h.b16 %v2412
        %v2597 = vunpack.c.l.b16 %v2413
        %v2598 = vunpack.c.h.b16 %v2413
        %v2599 = vunpack.c.l.b16 %v2414
        %v2600 = vunpack.c.h.b16 %v2414
        %v2601 = vunpack.c.l.b16 %v2415
        %v2602 = vunpack.c.h.b16 %v2415
        %v2603 = vunpack.c.l.b16 %v2416
        %v2604 = vunpack.c.h.b16 %v2416
        %v2605 = vunpack.c.l.b16 %v2417
        %v2606 = vunpack.c.h.b16 %v2417
        %v2607 = vunpack.c.l.b16 %v2418
        %v2608 = vunpack.c.h.b16 %v2418
        %v2609 = vunpack.c.l.b16 %v2419
        %v2610 = vunpack.c.h.b16 %v2419
        %v2611 = vunpack.c.l.b16 %v2420
        %v2612 = vunpack.c.h.b16 %v2420
        %v2613 = vpack.c.b16 %v2489, %v2485
        %v2614 = vpack.c.b16 %v2490, %v2486
        %v2615 = vpack.c.b16 %v2491, %v2487
        %v2616 = vpack.c.b16 %v2492, %v2488
        %v2617 = vpack.c.b16 %v2497, %v2493
        %v2618 = vpack.c.b16 %v2498, %v2494
        %v2619 = vpack.c.b16 %v2499, %v2495
        %v2620 = vpack.c.b16 %v2500, %v2496
        %v2621 = vpack.c.b16 %v2505, %v2501
        %v2622 = vpack.c.b16 %v2506, %v2502
        %v2623 = vpack.c.b16 %v2507, %v2503
        %v2624 = vpack.c.b16 %v2508, %v2504
        %v2625 = vpack.c.b16 %v2513, %v2509
        %v2626 = vpack.c.b16 %v2514, %v2510
        %v2627 = vpack.c.b16 %v2515, %v2511
        %v2628 = vpack.c.b16 %v2516, %v2512
        %v2629 = vpack.c.b16 %v2521, %v2517
        %v2630 = vpack.c.b16 %v2522, %v2518
        %v2631 = vpack.c.b16 %v2523, %v2519
        %v2632 = vpack.c.b16 %v2524, %v2520
        %v2633 = vpack.c.b16 %v2529, %v2525
        %v2634 = vpack.c.b16 %v2530, %v2526
        %v2635 = vpack.c.b16 %v2531, %v2527
        %v2636 = vpack.c.b16 %v2532, %v2528
        %v2637 = vpack.c.b16 %v2537, %v2533
        %v2638 = vpack.c.b16 %v2538, %v2534
        %v2639 = vpack.c.b16 %v2539, %v2535
        %v2640 = vpack.c.b16 %v2540, %v2536
        %v2641 = vpack.c.b16 %v2545, %v2541
        %v2642 = vpack.c.b16 %v2546, %v2542
        %v2643 = vpack.c.b16 %v2547, %v2543
        %v2644 = vpack.c.b16 %v2548, %v2544
        %v2645 = vpack.c.b16 %v2553, %v2549
        %v2646 = vpack.c.b16 %v2554, %v2550
        %v2647 = vpack.c.b16 %v2555, %v2551
        %v2648 = vpack.c.b16 %v2556, %v2552
        %v2649 = vpack.c.b16 %v2561, %v2557
        %v2650 = vpack.c.b16 %v2562, %v2558
        %v2651 = vpack.c.b16 %v2563, %v2559
        %v2652 = vpack.c.b16 %v2564, %v2560
        %v2653 = vpack.c.b16 %v2569, %v2565
        %v2654 = vpack.c.b16 %v2570, %v2566
        %v2655 = vpack.c.b16 %v2571, %v2567
        %v2656 = vpack.c.b16 %v2572, %v2568
        %v2657 = vpack.c.b16 %v2577, %v2573
        %v2658 = vpack.c.b16 %v2578, %v2574
        %v2659 = vpack.c.b16 %v2579, %v2575
        %v2660 = vpack.c.b16 %v2580, %v2576
        %v2661 = vpack.c.b16 %v2585, %v2581
        %v2662 = vpack.c.b16 %v2586, %v2582
        %v2663 = vpack.c.b16 %v2587, %v2583
        %v2664 = vpack.c.b16 %v2588, %v2584
        %v2665 = vpack.c.b16 %v2593, %v2589
        %v2666 = vpack.c.b16 %v2594, %v2590
        %v2667 = vpack.c.b16 %v2595, %v2591
        %v2668 = vpack.c.b16 %v2596, %v2592
        %v2669 = vpack.c.b16 %v2601, %v2597
        %v2670 = vpack.c.b16 %v2602, %v2598
        %v2671 = vpack.c.b16 %v2603, %v2599
        %v2672 = vpack.c.b16 %v2604, %v2600
        %v2673 = vpack.c.b16 %v2609, %v2605
        %v2674 = vpack.c.b16 %v2610, %v2606
        %v2675 = vpack.c.b16 %v2611, %v2607
        %v2676 = vpack.c.b16 %v2612, %v2608
        %2741 = vmatprep.subr.bf16.mxu0 %v2642
        %2742 = vmatpush1.bf16.msra.mxu0 %v2641
        %2743 = vmatprep.subr.bf16.mxu0 %v2638
        %2744 = vmatpush1.bf16.msra.mxu0 %v2637
        %2745 = vmatprep.subr.bf16.mxu0 %v2634
        %2746 = vmatpush1.bf16.msra.mxu0 %v2633
        %2747 = vmatprep.subr.bf16.mxu0 %v2630
        %2748 = vmatpush1.bf16.msra.mxu0 %v2629
        %2749 = vmatprep.subr.bf16.mxu0 %v2626
        %2750 = vmatpush1.bf16.msra.mxu0 %v2625
        %2751 = vmatprep.subr.bf16.mxu0 %v2622
        %2752 = vmatpush1.bf16.msra.mxu0 %v2621
        %2753 = vmatprep.subr.bf16.mxu0 %v2618
        %2754 = vmatpush1.bf16.msra.mxu0 %v2617
        %2755 = vmatprep.subr.bf16.mxu0 %v2614
        %2756 = vmatpush1.bf16.msra.mxu0 %v2613
        %2757 = vmatprep.subr.bf16.mxu0 %v2674
        %2758 = vmatpush2.bf16.msra.mxu0 %v2673
        %2759 = vmatprep.subr.bf16.mxu0 %v2670
        %2760 = vmatpush2.bf16.msra.mxu0 %v2669
        %2761 = vmatprep.subr.bf16.mxu0 %v2666
        %2762 = vmatpush2.bf16.msra.mxu0 %v2665
        %2763 = vmatprep.subr.bf16.mxu0 %v2662
        %2764 = vmatpush2.bf16.msra.mxu0 %v2661
        %2765 = vmatprep.subr.bf16.mxu0 %v2658
        %2766 = vmatpush2.bf16.msra.mxu0 %v2657
        %2767 = vmatprep.subr.bf16.mxu0 %v2654
        %2768 = vmatpush2.bf16.msra.mxu0 %v2653
        %2769 = vmatprep.subr.bf16.mxu0 %v2650
        %2770 = vmatpush2.bf16.msra.mxu0 %v2649
        %2771 = vmatprep.subr.bf16.mxu0 %v2646
        %2772 = vmatpush2.bf16.msra.mxu0 %v2645
        %2773 = vmatprep.mubr.bf16.mxu0 %v2340
        %2774 = vmatmul.mubr.bf16.gmra.mxu0 %v1602
        %v2775 = vpop.f32.mrf.mxu0
        %v2776 = vadd.f32 0.0, %v2775
        %v2777 = vpop.f32.mrf.mxu0
        %v2778 = vadd.f32 0.0, %v2777
        %v2779 = vpop.f32.mrf.mxu0
        %v2780 = vadd.f32 0.0, %v2779
        %v2781 = vpop.f32.mrf.mxu0
        %v2782 = vadd.f32 0.0, %v2781
        %2783 = vmatprep.mubr.bf16.mxu0 %v2341
        %2784 = vmatmul.mubr.bf16.gmra.mxu0 %v1603
        %v2785 = vpop.f32.mrf.mxu0
        %v2786 = vadd.f32 0.0, %v2785
        %v2787 = vpop.f32.mrf.mxu0
        %v2788 = vadd.f32 0.0, %v2787
        %v2789 = vpop.f32.mrf.mxu0
        %v2790 = vadd.f32 0.0, %v2789
        %v2791 = vpop.f32.mrf.mxu0
        %v2792 = vadd.f32 0.0, %v2791
        %2793 = vmatprep.mubr.bf16.mxu0 %v2342
        %2794 = vmatmul.mubr.bf16.gmra.mxu0 %v1604
        %v2795 = vpop.f32.mrf.mxu0
        %v2796 = vadd.f32 0.0, %v2795
        %v2797 = vpop.f32.mrf.mxu0
        %v2798 = vadd.f32 0.0, %v2797
        %v2799 = vpop.f32.mrf.mxu0
        %v2800 = vadd.f32 0.0, %v2799
        %v2801 = vpop.f32.mrf.mxu0
        %v2802 = vadd.f32 0.0, %v2801
        %2803 = vmatprep.mubr.bf16.mxu0 %v2343
        %2804 = vmatmul.mubr.bf16.gmra.mxu0 %v1605
        %v2805 = vpop.f32.mrf.mxu0
        %v2806 = vadd.f32 0.0, %v2805
        %v2807 = vpop.f32.mrf.mxu0
        %v2808 = vadd.f32 0.0, %v2807
        %v2809 = vpop.f32.mrf.mxu0
        %v2810 = vadd.f32 0.0, %v2809
        %v2811 = vpop.f32.mrf.mxu0
        %v2812 = vadd.f32 0.0, %v2811
        %2813 = vmatprep.mubr.bf16.mxu0 %v2344
        %2814 = vmatmul.mubr.bf16.gmra.mxu0 %v1606
        %v2815 = vpop.f32.mrf.mxu0
        %v2816 = vadd.f32 0.0, %v2815
        %v2817 = vpop.f32.mrf.mxu0
        %v2818 = vadd.f32 0.0, %v2817
        %v2819 = vpop.f32.mrf.mxu0
        %v2820 = vadd.f32 0.0, %v2819
        %v2821 = vpop.f32.mrf.mxu0
        %v2822 = vadd.f32 0.0, %v2821
        %2823 = vmatprep.mubr.bf16.mxu0 %v2345
        %2824 = vmatmul.mubr.bf16.gmra.mxu0 %v1607
        %v2825 = vpop.f32.mrf.mxu0
        %v2826 = vadd.f32 0.0, %v2825
        %v2827 = vpop.f32.mrf.mxu0
        %v2828 = vadd.f32 0.0, %v2827
        %v2829 = vpop.f32.mrf.mxu0
        %v2830 = vadd.f32 0.0, %v2829
        %v2831 = vpop.f32.mrf.mxu0
        %v2832 = vadd.f32 0.0, %v2831
        %2833 = vmatprep.mubr.bf16.mxu0 %v2346
        %2834 = vmatmul.mubr.bf16.gmra.mxu0 %v1608
        %v2835 = vpop.f32.mrf.mxu0
        %v2836 = vadd.f32 0.0, %v2835
        %v2837 = vpop.f32.mrf.mxu0
        %v2838 = vadd.f32 0.0, %v2837
        %v2839 = vpop.f32.mrf.mxu0
        %v2840 = vadd.f32 0.0, %v2839
        %v2841 = vpop.f32.mrf.mxu0
        %v2842 = vadd.f32 0.0, %v2841
        %2843 = vmatprep.mubr.bf16.mxu0 %v2347
        %2844 = vmatmul.mubr.bf16.gmra.mxu0 %v1609
        %v2845 = vpop.f32.mrf.mxu0
        %v2846 = vadd.f32 0.0, %v2845
        %v2847 = vpop.f32.mrf.mxu0
        %v2848 = vadd.f32 0.0, %v2847
        %v2849 = vpop.f32.mrf.mxu0
        %v2850 = vadd.f32 0.0, %v2849
        %v2851 = vpop.f32.mrf.mxu0
        %v2852 = vadd.f32 0.0, %v2851
        %2853 = vmatprep.mubr.bf16.mxu0 %v2348
        %2854 = vmatmul.mubr.bf16.gmra.mxu0 %v1610
        %v2855 = vpop.f32.mrf.mxu0
        %v2856 = vadd.f32 0.0, %v2855
        %v2857 = vpop.f32.mrf.mxu0
        %v2858 = vadd.f32 0.0, %v2857
        %v2859 = vpop.f32.mrf.mxu0
        %v2860 = vadd.f32 0.0, %v2859
        %v2861 = vpop.f32.mrf.mxu0
        %v2862 = vadd.f32 0.0, %v2861
        %2863 = vmatprep.mubr.bf16.mxu0 %v2349
        %2864 = vmatmul.mubr.bf16.gmra.mxu0 %v1611
        %v2865 = vpop.f32.mrf.mxu0
        %v2866 = vadd.f32 0.0, %v2865
        %v2867 = vpop.f32.mrf.mxu0
        %v2868 = vadd.f32 0.0, %v2867
        %v2869 = vpop.f32.mrf.mxu0
        %v2870 = vadd.f32 0.0, %v2869
        %v2871 = vpop.f32.mrf.mxu0
        %v2872 = vadd.f32 0.0, %v2871
        %2873 = vmatprep.mubr.bf16.mxu0 %v2350
        %2874 = vmatmul.mubr.bf16.gmra.mxu0 %v1612
        %v2875 = vpop.f32.mrf.mxu0
        %v2876 = vadd.f32 0.0, %v2875
        %v2877 = vpop.f32.mrf.mxu0
        %v2878 = vadd.f32 0.0, %v2877
        %v2879 = vpop.f32.mrf.mxu0
        %v2880 = vadd.f32 0.0, %v2879
        %v2881 = vpop.f32.mrf.mxu0
        %v2882 = vadd.f32 0.0, %v2881
        %2883 = vmatprep.mubr.bf16.mxu0 %v2351
        %2884 = vmatmul.mubr.bf16.gmra.mxu0 %v1613
        %v2885 = vpop.f32.mrf.mxu0
        %v2886 = vadd.f32 0.0, %v2885
        %v2887 = vpop.f32.mrf.mxu0
        %v2888 = vadd.f32 0.0, %v2887
        %v2889 = vpop.f32.mrf.mxu0
        %v2890 = vadd.f32 0.0, %v2889
        %v2891 = vpop.f32.mrf.mxu0
        %v2892 = vadd.f32 0.0, %v2891
        %2893 = vmatprep.mubr.bf16.mxu0 %v2352
        %2894 = vmatmul.mubr.bf16.gmra.mxu0 %v1614
        %v2895 = vpop.f32.mrf.mxu0
        %v2896 = vadd.f32 0.0, %v2895
        %v2897 = vpop.f32.mrf.mxu0
        %v2898 = vadd.f32 0.0, %v2897
        %v2899 = vpop.f32.mrf.mxu0
        %v2900 = vadd.f32 0.0, %v2899
        %v2901 = vpop.f32.mrf.mxu0
        %v2902 = vadd.f32 0.0, %v2901
        %2903 = vmatprep.mubr.bf16.mxu0 %v2353
        %2904 = vmatmul.mubr.bf16.gmra.mxu0 %v1615
        %v2905 = vpop.f32.mrf.mxu0
        %v2906 = vadd.f32 0.0, %v2905
        %v2907 = vpop.f32.mrf.mxu0
        %v2908 = vadd.f32 0.0, %v2907
        %v2909 = vpop.f32.mrf.mxu0
        %v2910 = vadd.f32 0.0, %v2909
        %v2911 = vpop.f32.mrf.mxu0
        %v2912 = vadd.f32 0.0, %v2911
        %2913 = vmatprep.mubr.bf16.mxu0 %v2354
        %2914 = vmatmul.mubr.bf16.gmra.mxu0 %v1616
        %v2915 = vpop.f32.mrf.mxu0
        %v2916 = vadd.f32 0.0, %v2915
        %v2917 = vpop.f32.mrf.mxu0
        %v2918 = vadd.f32 0.0, %v2917
        %v2919 = vpop.f32.mrf.mxu0
        %v2920 = vadd.f32 0.0, %v2919
        %v2921 = vpop.f32.mrf.mxu0
        %v2922 = vadd.f32 0.0, %v2921
        %2923 = vmatprep.mubr.bf16.mxu0 %v2355
        %2924 = vmatmul.mubr.bf16.gmra.mxu0 %v1617
        %v2925 = vpop.f32.mrf.mxu0
        %v2926 = vadd.f32 0.0, %v2925
        %v2927 = vpop.f32.mrf.mxu0
        %v2928 = vadd.f32 0.0, %v2927
        %v2929 = vpop.f32.mrf.mxu0
        %v2930 = vadd.f32 0.0, %v2929
        %v2931 = vpop.f32.mrf.mxu0
        %v2932 = vadd.f32 0.0, %v2931
        %2933 = vdwg.mxu0
        %2934 = vmatprep.subr.bf16.mxu0 %v2644
        %2935 = vmatpush1.bf16.msra.mxu0 %v2643
        %2936 = vmatprep.subr.bf16.mxu0 %v2640
        %2937 = vmatpush1.bf16.msra.mxu0 %v2639
        %2938 = vmatprep.subr.bf16.mxu0 %v2636
        %2939 = vmatpush1.bf16.msra.mxu0 %v2635
        %2940 = vmatprep.subr.bf16.mxu0 %v2632
        %2941 = vmatpush1.bf16.msra.mxu0 %v2631
        %2942 = vmatprep.subr.bf16.mxu0 %v2628
        %2943 = vmatpush1.bf16.msra.mxu0 %v2627
        %2944 = vmatprep.subr.bf16.mxu0 %v2624
        %2945 = vmatpush1.bf16.msra.mxu0 %v2623
        %2946 = vmatprep.subr.bf16.mxu0 %v2620
        %2947 = vmatpush1.bf16.msra.mxu0 %v2619
        %2948 = vmatprep.subr.bf16.mxu0 %v2616
        %2949 = vmatpush1.bf16.msra.mxu0 %v2615
        %2950 = vmatprep.subr.bf16.mxu0 %v2676
        %2951 = vmatpush2.bf16.msra.mxu0 %v2675
        %2952 = vmatprep.subr.bf16.mxu0 %v2672
        %2953 = vmatpush2.bf16.msra.mxu0 %v2671
        %2954 = vmatprep.subr.bf16.mxu0 %v2668
        %2955 = vmatpush2.bf16.msra.mxu0 %v2667
        %2956 = vmatprep.subr.bf16.mxu0 %v2664
        %2957 = vmatpush2.bf16.msra.mxu0 %v2663
        %2958 = vmatprep.subr.bf16.mxu0 %v2660
        %2959 = vmatpush2.bf16.msra.mxu0 %v2659
        %2960 = vmatprep.subr.bf16.mxu0 %v2656
        %2961 = vmatpush2.bf16.msra.mxu0 %v2655
        %2962 = vmatprep.subr.bf16.mxu0 %v2652
        %2963 = vmatpush2.bf16.msra.mxu0 %v2651
        %2964 = vmatprep.subr.bf16.mxu0 %v2648
        %2965 = vmatpush2.bf16.msra.mxu0 %v2647
        %2966 = vmatprep.mubr.bf16.mxu0 %v2340
        %2967 = vmatmul.mubr.bf16.gmra.mxu0 %v1602
        %v2968 = vpop.f32.mrf.mxu0
        %v2969 = vadd.f32 0.0, %v2968
        %v2970 = vpop.f32.mrf.mxu0
        %v2971 = vadd.f32 0.0, %v2970
        %v2972 = vpop.f32.mrf.mxu0
        %v2973 = vadd.f32 0.0, %v2972
        %v2974 = vpop.f32.mrf.mxu0
        %v2975 = vadd.f32 0.0, %v2974
        %2976 = vmatprep.mubr.bf16.mxu0 %v2341
        %2977 = vmatmul.mubr.bf16.gmra.mxu0 %v1603
        %v2978 = vpop.f32.mrf.mxu0
        %v2979 = vadd.f32 0.0, %v2978
        %v2980 = vpop.f32.mrf.mxu0
        %v2981 = vadd.f32 0.0, %v2980
        %v2982 = vpop.f32.mrf.mxu0
        %v2983 = vadd.f32 0.0, %v2982
        %v2984 = vpop.f32.mrf.mxu0
        %v2985 = vadd.f32 0.0, %v2984
        %2986 = vmatprep.mubr.bf16.mxu0 %v2342
        %2987 = vmatmul.mubr.bf16.gmra.mxu0 %v1604
        %v2988 = vpop.f32.mrf.mxu0
        %v2989 = vadd.f32 0.0, %v2988
        %v2990 = vpop.f32.mrf.mxu0
        %v2991 = vadd.f32 0.0, %v2990
        %v2992 = vpop.f32.mrf.mxu0
        %v2993 = vadd.f32 0.0, %v2992
        %v2994 = vpop.f32.mrf.mxu0
        %v2995 = vadd.f32 0.0, %v2994
        %2996 = vmatprep.mubr.bf16.mxu0 %v2343
        %2997 = vmatmul.mubr.bf16.gmra.mxu0 %v1605
        %v2998 = vpop.f32.mrf.mxu0
        %v2999 = vadd.f32 0.0, %v2998
        %v3000 = vpop.f32.mrf.mxu0
        %v3001 = vadd.f32 0.0, %v3000
        %v3002 = vpop.f32.mrf.mxu0
        %v3003 = vadd.f32 0.0, %v3002
        %v3004 = vpop.f32.mrf.mxu0
        %v3005 = vadd.f32 0.0, %v3004
        %3006 = vmatprep.mubr.bf16.mxu0 %v2344
        %3007 = vmatmul.mubr.bf16.gmra.mxu0 %v1606
        %v3008 = vpop.f32.mrf.mxu0
        %v3009 = vadd.f32 0.0, %v3008
        %v3010 = vpop.f32.mrf.mxu0
        %v3011 = vadd.f32 0.0, %v3010
        %v3012 = vpop.f32.mrf.mxu0
        %v3013 = vadd.f32 0.0, %v3012
        %v3014 = vpop.f32.mrf.mxu0
        %v3015 = vadd.f32 0.0, %v3014
        %3016 = vmatprep.mubr.bf16.mxu0 %v2345
        %3017 = vmatmul.mubr.bf16.gmra.mxu0 %v1607
        %v3018 = vpop.f32.mrf.mxu0
        %v3019 = vadd.f32 0.0, %v3018
        %v3020 = vpop.f32.mrf.mxu0
        %v3021 = vadd.f32 0.0, %v3020
        %v3022 = vpop.f32.mrf.mxu0
        %v3023 = vadd.f32 0.0, %v3022
        %v3024 = vpop.f32.mrf.mxu0
        %v3025 = vadd.f32 0.0, %v3024
        %3026 = vmatprep.mubr.bf16.mxu0 %v2346
        %3027 = vmatmul.mubr.bf16.gmra.mxu0 %v1608
        %v3028 = vpop.f32.mrf.mxu0
        %v3029 = vadd.f32 0.0, %v3028
        %v3030 = vpop.f32.mrf.mxu0
        %v3031 = vadd.f32 0.0, %v3030
        %v3032 = vpop.f32.mrf.mxu0
        %v3033 = vadd.f32 0.0, %v3032
        %v3034 = vpop.f32.mrf.mxu0
        %v3035 = vadd.f32 0.0, %v3034
        %3036 = vmatprep.mubr.bf16.mxu0 %v2347
        %3037 = vmatmul.mubr.bf16.gmra.mxu0 %v1609
        %v3038 = vpop.f32.mrf.mxu0
        %v3039 = vadd.f32 0.0, %v3038
        %v3040 = vpop.f32.mrf.mxu0
        %v3041 = vadd.f32 0.0, %v3040
        %v3042 = vpop.f32.mrf.mxu0
        %v3043 = vadd.f32 0.0, %v3042
        %v3044 = vpop.f32.mrf.mxu0
        %v3045 = vadd.f32 0.0, %v3044
        %3046 = vmatprep.mubr.bf16.mxu0 %v2348
        %3047 = vmatmul.mubr.bf16.gmra.mxu0 %v1610
        %v3048 = vpop.f32.mrf.mxu0
        %v3049 = vadd.f32 0.0, %v3048
        %v3050 = vpop.f32.mrf.mxu0
        %v3051 = vadd.f32 0.0, %v3050
        %v3052 = vpop.f32.mrf.mxu0
        %v3053 = vadd.f32 0.0, %v3052
        %v3054 = vpop.f32.mrf.mxu0
        %v3055 = vadd.f32 0.0, %v3054
        %3056 = vmatprep.mubr.bf16.mxu0 %v2349
        %3057 = vmatmul.mubr.bf16.gmra.mxu0 %v1611
        %v3058 = vpop.f32.mrf.mxu0
        %v3059 = vadd.f32 0.0, %v3058
        %v3060 = vpop.f32.mrf.mxu0
        %v3061 = vadd.f32 0.0, %v3060
        %v3062 = vpop.f32.mrf.mxu0
        %v3063 = vadd.f32 0.0, %v3062
        %v3064 = vpop.f32.mrf.mxu0
        %v3065 = vadd.f32 0.0, %v3064
        %3066 = vmatprep.mubr.bf16.mxu0 %v2350
        %3067 = vmatmul.mubr.bf16.gmra.mxu0 %v1612
        %v3068 = vpop.f32.mrf.mxu0
        %v3069 = vadd.f32 0.0, %v3068
        %v3070 = vpop.f32.mrf.mxu0
        %v3071 = vadd.f32 0.0, %v3070
        %v3072 = vpop.f32.mrf.mxu0
        %v3073 = vadd.f32 0.0, %v3072
        %v3074 = vpop.f32.mrf.mxu0
        %v3075 = vadd.f32 0.0, %v3074
        %3076 = vmatprep.mubr.bf16.mxu0 %v2351
        %3077 = vmatmul.mubr.bf16.gmra.mxu0 %v1613
        %v3078 = vpop.f32.mrf.mxu0
        %v3079 = vadd.f32 0.0, %v3078
        %v3080 = vpop.f32.mrf.mxu0
        %v3081 = vadd.f32 0.0, %v3080
        %v3082 = vpop.f32.mrf.mxu0
        %v3083 = vadd.f32 0.0, %v3082
        %v3084 = vpop.f32.mrf.mxu0
        %v3085 = vadd.f32 0.0, %v3084
        %3086 = vmatprep.mubr.bf16.mxu0 %v2352
        %3087 = vmatmul.mubr.bf16.gmra.mxu0 %v1614
        %v3088 = vpop.f32.mrf.mxu0
        %v3089 = vadd.f32 0.0, %v3088
        %v3090 = vpop.f32.mrf.mxu0
        %v3091 = vadd.f32 0.0, %v3090
        %v3092 = vpop.f32.mrf.mxu0
        %v3093 = vadd.f32 0.0, %v3092
        %v3094 = vpop.f32.mrf.mxu0
        %v3095 = vadd.f32 0.0, %v3094
        %3096 = vmatprep.mubr.bf16.mxu0 %v2353
        %3097 = vmatmul.mubr.bf16.gmra.mxu0 %v1615
        %v3098 = vpop.f32.mrf.mxu0
        %v3099 = vadd.f32 0.0, %v3098
        %v3100 = vpop.f32.mrf.mxu0
        %v3101 = vadd.f32 0.0, %v3100
        %v3102 = vpop.f32.mrf.mxu0
        %v3103 = vadd.f32 0.0, %v3102
        %v3104 = vpop.f32.mrf.mxu0
        %v3105 = vadd.f32 0.0, %v3104
        %3106 = vmatprep.mubr.bf16.mxu0 %v2354
        %3107 = vmatmul.mubr.bf16.gmra.mxu0 %v1616
        %v3108 = vpop.f32.mrf.mxu0
        %v3109 = vadd.f32 0.0, %v3108
        %v3110 = vpop.f32.mrf.mxu0
        %v3111 = vadd.f32 0.0, %v3110
        %v3112 = vpop.f32.mrf.mxu0
        %v3113 = vadd.f32 0.0, %v3112
        %v3114 = vpop.f32.mrf.mxu0
        %v3115 = vadd.f32 0.0, %v3114
        %3116 = vmatprep.mubr.bf16.mxu0 %v2355
        %3117 = vmatmul.mubr.bf16.gmra.mxu0 %v1617
        %v3118 = vpop.f32.mrf.mxu0
        %v3119 = vadd.f32 0.0, %v3118
        %v3120 = vpop.f32.mrf.mxu0
        %v3121 = vadd.f32 0.0, %v3120
        %v3122 = vpop.f32.mrf.mxu0
        %v3123 = vadd.f32 0.0, %v3122
        %v3124 = vpop.f32.mrf.mxu0
        %v3125 = vadd.f32 0.0, %v3124
        %3126 = vdwg.mxu0
        %v3127 = vld [vmem:[#allocation10] sm:$0xff]
        %v3128 = vld [vmem:[#allocation10 + $0x8] sm:$0xff]
        %v3129 = vld [vmem:[#allocation10 + $0x10] sm:$0xff]
        %v3130 = vld [vmem:[#allocation10 + $0x18] sm:$0xff]
        %v3131 = vld [vmem:[#allocation10 + $0x20] sm:$0xff]
        %v3132 = vld [vmem:[#allocation10 + $0x28] sm:$0xff]
        %v3133 = vld [vmem:[#allocation10 + $0x30] sm:$0xff]
        %v3134 = vld [vmem:[#allocation10 + $0x38] sm:$0xff]
        %v3135 = vld [vmem:[#allocation10 + $0x40] sm:$0xff]
        %v3136 = vld [vmem:[#allocation10 + $0x48] sm:$0xff]
        %v3137 = vld [vmem:[#allocation10 + $0x50] sm:$0xff]
        %v3138 = vld [vmem:[#allocation10 + $0x58] sm:$0xff]
        %v3139 = vld [vmem:[#allocation10 + $0x60] sm:$0xff]
        %v3140 = vld [vmem:[#allocation10 + $0x68] sm:$0xff]
        %v3141 = vld [vmem:[#allocation10 + $0x70] sm:$0xff]
        %v3142 = vld [vmem:[#allocation10 + $0x78] sm:$0xff]
        %v3143 = vld [vmem:[#allocation10 + $0x80] sm:$0xff]
        %v3144 = vld [vmem:[#allocation10 + $0x88] sm:$0xff]
        %v3145 = vld [vmem:[#allocation10 + $0x90] sm:$0xff]
        %v3146 = vld [vmem:[#allocation10 + $0x98] sm:$0xff]
        %v3147 = vld [vmem:[#allocation10 + $0xa0] sm:$0xff]
        %v3148 = vld [vmem:[#allocation10 + $0xa8] sm:$0xff]
        %v3149 = vld [vmem:[#allocation10 + $0xb0] sm:$0xff]
        %v3150 = vld [vmem:[#allocation10 + $0xb8] sm:$0xff]
        %v3151 = vld [vmem:[#allocation10 + $0xc0] sm:$0xff]
        %v3152 = vld [vmem:[#allocation10 + $0xc8] sm:$0xff]
        %v3153 = vld [vmem:[#allocation10 + $0xd0] sm:$0xff]
        %v3154 = vld [vmem:[#allocation10 + $0xd8] sm:$0xff]
        %v3155 = vld [vmem:[#allocation10 + $0xe0] sm:$0xff]
        %v3156 = vld [vmem:[#allocation10 + $0xe8] sm:$0xff]
        %v3157 = vld [vmem:[#allocation10 + $0xf0] sm:$0xff]
        %v3158 = vld [vmem:[#allocation10 + $0xf8] sm:$0xff]
        %v3191 = vunpack.c.l.b16 %v3127
        %v3192 = vunpack.c.h.b16 %v3127
        %v3193 = vunpack.c.l.b16 %v3128
        %v3194 = vunpack.c.h.b16 %v3128
        %v3195 = vunpack.c.l.b16 %v3129
        %v3196 = vunpack.c.h.b16 %v3129
        %v3197 = vunpack.c.l.b16 %v3130
        %v3198 = vunpack.c.h.b16 %v3130
        %v3199 = vunpack.c.l.b16 %v3131
        %v3200 = vunpack.c.h.b16 %v3131
        %v3201 = vunpack.c.l.b16 %v3132
        %v3202 = vunpack.c.h.b16 %v3132
        %v3203 = vunpack.c.l.b16 %v3133
        %v3204 = vunpack.c.h.b16 %v3133
        %v3205 = vunpack.c.l.b16 %v3134
        %v3206 = vunpack.c.h.b16 %v3134
        %v3207 = vunpack.c.l.b16 %v3135
        %v3208 = vunpack.c.h.b16 %v3135
        %v3209 = vunpack.c.l.b16 %v3136
        %v3210 = vunpack.c.h.b16 %v3136
        %v3211 = vunpack.c.l.b16 %v3137
        %v3212 = vunpack.c.h.b16 %v3137
        %v3213 = vunpack.c.l.b16 %v3138
        %v3214 = vunpack.c.h.b16 %v3138
        %v3215 = vunpack.c.l.b16 %v3139
        %v3216 = vunpack.c.h.b16 %v3139
        %v3217 = vunpack.c.l.b16 %v3140
        %v3218 = vunpack.c.h.b16 %v3140
        %v3219 = vunpack.c.l.b16 %v3141
        %v3220 = vunpack.c.h.b16 %v3141
        %v3221 = vunpack.c.l.b16 %v3142
        %v3222 = vunpack.c.h.b16 %v3142
        %v3223 = vunpack.c.l.b16 %v3143
        %v3224 = vunpack.c.h.b16 %v3143
        %v3225 = vunpack.c.l.b16 %v3144
        %v3226 = vunpack.c.h.b16 %v3144
        %v3227 = vunpack.c.l.b16 %v3145
        %v3228 = vunpack.c.h.b16 %v3145
        %v3229 = vunpack.c.l.b16 %v3146
        %v3230 = vunpack.c.h.b16 %v3146
        %v3231 = vunpack.c.l.b16 %v3147
        %v3232 = vunpack.c.h.b16 %v3147
        %v3233 = vunpack.c.l.b16 %v3148
        %v3234 = vunpack.c.h.b16 %v3148
        %v3235 = vunpack.c.l.b16 %v3149
        %v3236 = vunpack.c.h.b16 %v3149
        %v3237 = vunpack.c.l.b16 %v3150
        %v3238 = vunpack.c.h.b16 %v3150
        %v3239 = vunpack.c.l.b16 %v3151
        %v3240 = vunpack.c.h.b16 %v3151
        %v3241 = vunpack.c.l.b16 %v3152
        %v3242 = vunpack.c.h.b16 %v3152
        %v3243 = vunpack.c.l.b16 %v3153
        %v3244 = vunpack.c.h.b16 %v3153
        %v3245 = vunpack.c.l.b16 %v3154
        %v3246 = vunpack.c.h.b16 %v3154
        %v3247 = vunpack.c.l.b16 %v3155
        %v3248 = vunpack.c.h.b16 %v3155
        %v3249 = vunpack.c.l.b16 %v3156
        %v3250 = vunpack.c.h.b16 %v3156
        %v3251 = vunpack.c.l.b16 %v3157
        %v3252 = vunpack.c.h.b16 %v3157
        %v3253 = vunpack.c.l.b16 %v3158
        %v3254 = vunpack.c.h.b16 %v3158
        %v3255 = vpack.c.b16 %v3193, %v3191
        %v3256 = vpack.c.b16 %v3194, %v3192
        %v3257 = vpack.c.b16 %v3197, %v3195
        %v3258 = vpack.c.b16 %v3198, %v3196
        %v3259 = vpack.c.b16 %v3201, %v3199
        %v3260 = vpack.c.b16 %v3202, %v3200
        %v3261 = vpack.c.b16 %v3205, %v3203
        %v3262 = vpack.c.b16 %v3206, %v3204
        %v3263 = vpack.c.b16 %v3209, %v3207
        %v3264 = vpack.c.b16 %v3210, %v3208
        %v3265 = vpack.c.b16 %v3213, %v3211
        %v3266 = vpack.c.b16 %v3214, %v3212
        %v3267 = vpack.c.b16 %v3217, %v3215
        %v3268 = vpack.c.b16 %v3218, %v3216
        %v3269 = vpack.c.b16 %v3221, %v3219
        %v3270 = vpack.c.b16 %v3222, %v3220
        %v3271 = vpack.c.b16 %v3225, %v3223
        %v3272 = vpack.c.b16 %v3226, %v3224
        %v3273 = vpack.c.b16 %v3229, %v3227
        %v3274 = vpack.c.b16 %v3230, %v3228
        %v3275 = vpack.c.b16 %v3233, %v3231
        %v3276 = vpack.c.b16 %v3234, %v3232
        %v3277 = vpack.c.b16 %v3237, %v3235
        %v3278 = vpack.c.b16 %v3238, %v3236
        %v3279 = vpack.c.b16 %v3241, %v3239
        %v3280 = vpack.c.b16 %v3242, %v3240
        %v3281 = vpack.c.b16 %v3245, %v3243
        %v3282 = vpack.c.b16 %v3246, %v3244
        %v3283 = vpack.c.b16 %v3249, %v3247
        %v3284 = vpack.c.b16 %v3250, %v3248
        %v3285 = vpack.c.b16 %v3253, %v3251
        %v3286 = vpack.c.b16 %v3254, %v3252
        %3319 = vmatprep.subr.bf16.mxu0 %v3270
        %3320 = vmatpush1.bf16.msra.mxu0 %v3269
        %3321 = vmatprep.subr.bf16.mxu0 %v3268
        %3322 = vmatpush1.bf16.msra.mxu0 %v3267
        %3323 = vmatprep.subr.bf16.mxu0 %v3266
        %3324 = vmatpush1.bf16.msra.mxu0 %v3265
        %3325 = vmatprep.subr.bf16.mxu0 %v3264
        %3326 = vmatpush1.bf16.msra.mxu0 %v3263
        %3327 = vmatprep.subr.bf16.mxu0 %v3262
        %3328 = vmatpush1.bf16.msra.mxu0 %v3261
        %3329 = vmatprep.subr.bf16.mxu0 %v3260
        %3330 = vmatpush1.bf16.msra.mxu0 %v3259
        %3331 = vmatprep.subr.bf16.mxu0 %v3258
        %3332 = vmatpush1.bf16.msra.mxu0 %v3257
        %3333 = vmatprep.subr.bf16.mxu0 %v3256
        %3334 = vmatpush1.bf16.msra.mxu0 %v3255
        %3335 = vmatprep.subr.bf16.mxu0 %v3286
        %3336 = vmatpush2.bf16.msra.mxu0 %v3285
        %3337 = vmatprep.subr.bf16.mxu0 %v3284
        %3338 = vmatpush2.bf16.msra.mxu0 %v3283
        %3339 = vmatprep.subr.bf16.mxu0 %v3282
        %3340 = vmatpush2.bf16.msra.mxu0 %v3281
        %3341 = vmatprep.subr.bf16.mxu0 %v3280
        %3342 = vmatpush2.bf16.msra.mxu0 %v3279
        %3343 = vmatprep.subr.bf16.mxu0 %v3278
        %3344 = vmatpush2.bf16.msra.mxu0 %v3277
        %3345 = vmatprep.subr.bf16.mxu0 %v3276
        %3346 = vmatpush2.bf16.msra.mxu0 %v3275
        %3347 = vmatprep.subr.bf16.mxu0 %v3274
        %3348 = vmatpush2.bf16.msra.mxu0 %v3273
        %3349 = vmatprep.subr.bf16.mxu0 %v3272
        %3350 = vmatpush2.bf16.msra.mxu0 %v3271
        %3351 = vmatprep.mubr.bf16.mxu0 %v2341
        %3352 = vmatmul.mubr.bf16.gmra.mxu0 %v1603
        %v3353 = vpop.f32.mrf.mxu0
        %v3354 = vadd.f32 0.0, %v3353
        %v3355 = vpop.f32.mrf.mxu0
        %v3356 = vadd.f32 0.0, %v3355
        %v3357 = vpop.f32.mrf.mxu0
        %v3358 = vadd.f32 0.0, %v3357
        %v3359 = vpop.f32.mrf.mxu0
        %v3360 = vadd.f32 0.0, %v3359
        %3361 = vmatprep.mubr.bf16.mxu0 %v2342
        %3362 = vmatmul.mubr.bf16.gmra.mxu0 %v1604
        %v3363 = vpop.f32.mrf.mxu0
        %v3364 = vadd.f32 0.0, %v3363
        %v3365 = vpop.f32.mrf.mxu0
        %v3366 = vadd.f32 0.0, %v3365
        %v3367 = vpop.f32.mrf.mxu0
        %v3368 = vadd.f32 0.0, %v3367
        %v3369 = vpop.f32.mrf.mxu0
        %v3370 = vadd.f32 0.0, %v3369
        %3371 = vmatprep.mubr.bf16.mxu0 %v2343
        %3372 = vmatmul.mubr.bf16.gmra.mxu0 %v1605
        %v3373 = vpop.f32.mrf.mxu0
        %v3374 = vadd.f32 0.0, %v3373
        %v3375 = vpop.f32.mrf.mxu0
        %v3376 = vadd.f32 0.0, %v3375
        %v3377 = vpop.f32.mrf.mxu0
        %v3378 = vadd.f32 0.0, %v3377
        %v3379 = vpop.f32.mrf.mxu0
        %v3380 = vadd.f32 0.0, %v3379
        %3381 = vmatprep.mubr.bf16.mxu0 %v2344
        %3382 = vmatmul.mubr.bf16.gmra.mxu0 %v1606
        %v3383 = vpop.f32.mrf.mxu0
        %v3384 = vadd.f32 0.0, %v3383
        %v3385 = vpop.f32.mrf.mxu0
        %v3386 = vadd.f32 0.0, %v3385
        %v3387 = vpop.f32.mrf.mxu0
        %v3388 = vadd.f32 0.0, %v3387
        %v3389 = vpop.f32.mrf.mxu0
        %v3390 = vadd.f32 0.0, %v3389
        %3391 = vmatprep.mubr.bf16.mxu0 %v2345
        %3392 = vmatmul.mubr.bf16.gmra.mxu0 %v1607
        %v3393 = vpop.f32.mrf.mxu0
        %v3394 = vadd.f32 0.0, %v3393
        %v3395 = vpop.f32.mrf.mxu0
        %v3396 = vadd.f32 0.0, %v3395
        %v3397 = vpop.f32.mrf.mxu0
        %v3398 = vadd.f32 0.0, %v3397
        %v3399 = vpop.f32.mrf.mxu0
        %v3400 = vadd.f32 0.0, %v3399
        %3401 = vmatprep.mubr.bf16.mxu0 %v2346
        %3402 = vmatmul.mubr.bf16.gmra.mxu0 %v1608
        %v3403 = vpop.f32.mrf.mxu0
        %v3404 = vadd.f32 0.0, %v3403
        %v3405 = vpop.f32.mrf.mxu0
        %v3406 = vadd.f32 0.0, %v3405
        %v3407 = vpop.f32.mrf.mxu0
        %v3408 = vadd.f32 0.0, %v3407
        %v3409 = vpop.f32.mrf.mxu0
        %v3410 = vadd.f32 0.0, %v3409
        %3411 = vmatprep.mubr.bf16.mxu0 %v2347
        %3412 = vmatmul.mubr.bf16.gmra.mxu0 %v1609
        %v3413 = vpop.f32.mrf.mxu0
        %v3414 = vadd.f32 0.0, %v3413
        %v3415 = vpop.f32.mrf.mxu0
        %v3416 = vadd.f32 0.0, %v3415
        %v3417 = vpop.f32.mrf.mxu0
        %v3418 = vadd.f32 0.0, %v3417
        %v3419 = vpop.f32.mrf.mxu0
        %v3420 = vadd.f32 0.0, %v3419
        %3421 = vmatprep.mubr.bf16.mxu0 %v2348
        %3422 = vmatmul.mubr.bf16.gmra.mxu0 %v1610
        %v3423 = vpop.f32.mrf.mxu0
        %v3424 = vadd.f32 0.0, %v3423
        %v3425 = vpop.f32.mrf.mxu0
        %v3426 = vadd.f32 0.0, %v3425
        %v3427 = vpop.f32.mrf.mxu0
        %v3428 = vadd.f32 0.0, %v3427
        %v3429 = vpop.f32.mrf.mxu0
        %v3430 = vadd.f32 0.0, %v3429
        %3431 = vmatprep.mubr.bf16.mxu0 %v2349
        %3432 = vmatmul.mubr.bf16.gmra.mxu0 %v1611
        %v3433 = vpop.f32.mrf.mxu0
        %v3434 = vadd.f32 0.0, %v3433
        %v3435 = vpop.f32.mrf.mxu0
        %v3436 = vadd.f32 0.0, %v3435
        %v3437 = vpop.f32.mrf.mxu0
        %v3438 = vadd.f32 0.0, %v3437
        %v3439 = vpop.f32.mrf.mxu0
        %v3440 = vadd.f32 0.0, %v3439
        %3441 = vmatprep.mubr.bf16.mxu0 %v2350
        %3442 = vmatmul.mubr.bf16.gmra.mxu0 %v1612
        %v3443 = vpop.f32.mrf.mxu0
        %v3444 = vadd.f32 0.0, %v3443
        %v3445 = vpop.f32.mrf.mxu0
        %v3446 = vadd.f32 0.0, %v3445
        %v3447 = vpop.f32.mrf.mxu0
        %v3448 = vadd.f32 0.0, %v3447
        %v3449 = vpop.f32.mrf.mxu0
        %v3450 = vadd.f32 0.0, %v3449
        %3451 = vmatprep.mubr.bf16.mxu0 %v2351
        %3452 = vmatmul.mubr.bf16.gmra.mxu0 %v1613
        %v3453 = vpop.f32.mrf.mxu0
        %v3454 = vadd.f32 0.0, %v3453
        %v3455 = vpop.f32.mrf.mxu0
        %v3456 = vadd.f32 0.0, %v3455
        %v3457 = vpop.f32.mrf.mxu0
        %v3458 = vadd.f32 0.0, %v3457
        %v3459 = vpop.f32.mrf.mxu0
        %v3460 = vadd.f32 0.0, %v3459
        %3461 = vmatprep.mubr.bf16.mxu0 %v2352
        %3462 = vmatmul.mubr.bf16.gmra.mxu0 %v1614
        %v3463 = vpop.f32.mrf.mxu0
        %v3464 = vadd.f32 0.0, %v3463
        %v3465 = vpop.f32.mrf.mxu0
        %v3466 = vadd.f32 0.0, %v3465
        %v3467 = vpop.f32.mrf.mxu0
        %v3468 = vadd.f32 0.0, %v3467
        %v3469 = vpop.f32.mrf.mxu0
        %v3470 = vadd.f32 0.0, %v3469
        %3471 = vmatprep.mubr.bf16.mxu0 %v2353
        %3472 = vmatmul.mubr.bf16.gmra.mxu0 %v1615
        %v3473 = vpop.f32.mrf.mxu0
        %v3474 = vadd.f32 0.0, %v3473
        %v3475 = vpop.f32.mrf.mxu0
        %v3476 = vadd.f32 0.0, %v3475
        %v3477 = vpop.f32.mrf.mxu0
        %v3478 = vadd.f32 0.0, %v3477
        %v3479 = vpop.f32.mrf.mxu0
        %v3480 = vadd.f32 0.0, %v3479
        %3481 = vmatprep.mubr.bf16.mxu0 %v2354
        %3482 = vmatmul.mubr.bf16.gmra.mxu0 %v1616
        %v3483 = vpop.f32.mrf.mxu0
        %v3484 = vadd.f32 0.0, %v3483
        %v3485 = vpop.f32.mrf.mxu0
        %v3486 = vadd.f32 0.0, %v3485
        %v3487 = vpop.f32.mrf.mxu0
        %v3488 = vadd.f32 0.0, %v3487
        %v3489 = vpop.f32.mrf.mxu0
        %v3490 = vadd.f32 0.0, %v3489
        %3491 = vmatprep.mubr.bf16.mxu0 %v2355
        %3492 = vmatmul.mubr.bf16.gmra.mxu0 %v1617
        %v3493 = vpop.f32.mrf.mxu0
        %v3494 = vadd.f32 0.0, %v3493
        %v3495 = vpop.f32.mrf.mxu0
        %v3496 = vadd.f32 0.0, %v3495
        %v3497 = vpop.f32.mrf.mxu0
        %v3498 = vadd.f32 0.0, %v3497
        %v3499 = vpop.f32.mrf.mxu0
        %v3500 = vadd.f32 0.0, %v3499
        %3501 = vmatprep.mubr.bf16.mxu0 %v2356
        %3502 = vmatmul.mubr.bf16.gmra.mxu0 %v1621
        %v3503 = vpop.f32.mrf.mxu0
        %v3504 = vadd.f32 0.0, %v3503
        %v3505 = vpop.f32.mrf.mxu0
        %v3506 = vadd.f32 0.0, %v3505
        %v3507 = vpop.f32.mrf.mxu0
        %v3508 = vadd.f32 0.0, %v3507
        %v3509 = vpop.f32.mrf.mxu0
        %v3510 = vadd.f32 0.0, %v3509
        %3511 = vdwg.mxu0
        %v3512 = vadd.f32 %v2969, %v3354
        %v3513 = vadd.f32 %v2973, %v3358
        %v3514 = vadd.f32 %v2979, %v3364
        %v3515 = vadd.f32 %v2983, %v3368
        %v3516 = vadd.f32 %v2989, %v3374
        %v3517 = vadd.f32 %v2993, %v3378
        %v3518 = vadd.f32 %v2999, %v3384
        %v3519 = vadd.f32 %v3003, %v3388
        %v3520 = vadd.f32 %v3009, %v3394
        %v3521 = vadd.f32 %v3013, %v3398
        %v3522 = vadd.f32 %v3019, %v3404
        %v3523 = vadd.f32 %v3023, %v3408
        %v3524 = vadd.f32 %v3029, %v3414
        %v3525 = vadd.f32 %v3033, %v3418
        %v3526 = vadd.f32 %v3039, %v3424
        %v3527 = vadd.f32 %v3043, %v3428
        %v3528 = vadd.f32 %v3049, %v3434
        %v3529 = vadd.f32 %v3053, %v3438
        %v3530 = vadd.f32 %v3059, %v3444
        %v3531 = vadd.f32 %v3063, %v3448
        %v3532 = vadd.f32 %v3069, %v3454
        %v3533 = vadd.f32 %v3073, %v3458
        %v3534 = vadd.f32 %v3079, %v3464
        %v3535 = vadd.f32 %v3083, %v3468
        %v3536 = vadd.f32 %v3089, %v3474
        %v3537 = vadd.f32 %v3093, %v3478
        %v3538 = vadd.f32 %v3099, %v3484
        %v3539 = vadd.f32 %v3103, %v3488
        %v3540 = vadd.f32 %v3109, %v3494
        %v3541 = vadd.f32 %v3113, %v3498
        %v3542 = vadd.f32 %v3119, %v3504
        %v3543 = vadd.f32 %v3123, %v3508
        %v3544 = vadd.f32 %v2971, %v3356
        %v3545 = vadd.f32 %v2975, %v3360
        %v3546 = vadd.f32 %v2981, %v3366
        %v3547 = vadd.f32 %v2985, %v3370
        %v3548 = vadd.f32 %v2991, %v3376
        %v3549 = vadd.f32 %v2995, %v3380
        %v3550 = vadd.f32 %v3001, %v3386
        %v3551 = vadd.f32 %v3005, %v3390
        %v3552 = vadd.f32 %v3011, %v3396
        %v3553 = vadd.f32 %v3015, %v3400
        %v3554 = vadd.f32 %v3021, %v3406
        %v3555 = vadd.f32 %v3025, %v3410
        %v3556 = vadd.f32 %v3031, %v3416
        %v3557 = vadd.f32 %v3035, %v3420
        %v3558 = vadd.f32 %v3041, %v3426
        %v3559 = vadd.f32 %v3045, %v3430
        %v3560 = vadd.f32 %v3051, %v3436
        %v3561 = vadd.f32 %v3055, %v3440
        %v3562 = vadd.f32 %v3061, %v3446
        %v3563 = vadd.f32 %v3065, %v3450
        %v3564 = vadd.f32 %v3071, %v3456
        %v3565 = vadd.f32 %v3075, %v3460
        %v3566 = vadd.f32 %v3081, %v3466
        %v3567 = vadd.f32 %v3085, %v3470
        %v3568 = vadd.f32 %v3091, %v3476
        %v3569 = vadd.f32 %v3095, %v3480
        %v3570 = vadd.f32 %v3101, %v3486
        %v3571 = vadd.f32 %v3105, %v3490
        %v3572 = vadd.f32 %v3111, %v3496
        %v3573 = vadd.f32 %v3115, %v3500
        %v3574 = vadd.f32 %v3121, %v3506
        %v3575 = vadd.f32 %v3125, %v3510
        %v3576 = vld [vmem:[%s6] sm:$0x1]
        %v3577 = vld [vmem:[%s8] sm:$0x1]
        %v3578 = vld [vmem:[#allocation11] sm:$0xf]
        %v3579 = vld [vmem:[#allocation11 + $0x4] sm:$0xf]
        %v3580 = vld [vmem:[#allocation11 + $0x8] sm:$0xf]
        %v3581 = vld [vmem:[#allocation11 + $0xc] sm:$0xf]
        %v3582 = vld [vmem:[#allocation11 + $0x10] sm:$0xf]
        %v3583 = vld [vmem:[#allocation11 + $0x14] sm:$0xf]
        %v3584 = vld [vmem:[#allocation11 + $0x18] sm:$0xf]
        %v3585 = vld [vmem:[#allocation11 + $0x1c] sm:$0xf]
        %v3586 = vld [vmem:[#allocation11 + $0x20] sm:$0xf]
        %v3587 = vld [vmem:[#allocation11 + $0x24] sm:$0xf]
        %v3588 = vld [vmem:[#allocation11 + $0x28] sm:$0xf]
        %v3589 = vld [vmem:[#allocation11 + $0x2c] sm:$0xf]
        %v3590 = vld [vmem:[#allocation11 + $0x30] sm:$0xf]
        %v3591 = vld [vmem:[#allocation11 + $0x34] sm:$0xf]
        %v3592 = vld [vmem:[#allocation11 + $0x38] sm:$0xf]
        %v3593 = vld [vmem:[#allocation11 + $0x3c] sm:$0xf]
        %v3595 = vlaneseq
        %v3596 = vshrl.u32 %v3595, 7
        %v3597 = vsub.s32 0, %v3596
        %v3598 = vrot.slane %v3576, %v3597
        %v3600 = vadd.f32 %v2776, %v3598
        %v3601 = vadd.f32 %v2780, %v3598
        %v3602 = vadd.f32 %v2786, %v3598
        %v3603 = vadd.f32 %v2790, %v3598
        %v3604 = vadd.f32 %v2796, %v3598
        %v3605 = vadd.f32 %v2800, %v3598
        %v3606 = vadd.f32 %v2806, %v3598
        %v3607 = vadd.f32 %v2810, %v3598
        %v3608 = vadd.f32 %v2816, %v3598
        %v3609 = vadd.f32 %v2820, %v3598
        %v3610 = vadd.f32 %v2826, %v3598
        %v3611 = vadd.f32 %v2830, %v3598
        %v3612 = vadd.f32 %v2836, %v3598
        %v3613 = vadd.f32 %v2840, %v3598
        %v3614 = vadd.f32 %v2846, %v3598
        %v3615 = vadd.f32 %v2850, %v3598
        %v3616 = vadd.f32 %v2856, %v3598
        %v3617 = vadd.f32 %v2860, %v3598
        %v3618 = vadd.f32 %v2866, %v3598
        %v3619 = vadd.f32 %v2870, %v3598
        %v3620 = vadd.f32 %v2876, %v3598
        %v3621 = vadd.f32 %v2880, %v3598
        %v3622 = vadd.f32 %v2886, %v3598
        %v3623 = vadd.f32 %v2890, %v3598
        %v3624 = vadd.f32 %v2896, %v3598
        %v3625 = vadd.f32 %v2900, %v3598
        %v3626 = vadd.f32 %v2906, %v3598
        %v3627 = vadd.f32 %v2910, %v3598
        %v3628 = vadd.f32 %v2916, %v3598
        %v3629 = vadd.f32 %v2920, %v3598
        %v3630 = vadd.f32 %v2926, %v3598
        %v3631 = vadd.f32 %v2930, %v3598
        %v3632 = vmax.f32 %v3600, 0.0
        %v3633 = vmax.f32 %v3601, 0.0
        %v3634 = vmax.f32 %v3602, 0.0
        %v3635 = vmax.f32 %v3603, 0.0
        %v3636 = vmax.f32 %v3604, 0.0
        %v3637 = vmax.f32 %v3605, 0.0
        %v3638 = vmax.f32 %v3606, 0.0
        %v3639 = vmax.f32 %v3607, 0.0
        %v3640 = vmax.f32 %v3608, 0.0
        %v3641 = vmax.f32 %v3609, 0.0
        %v3642 = vmax.f32 %v3610, 0.0
        %v3643 = vmax.f32 %v3611, 0.0
        %v3644 = vmax.f32 %v3612, 0.0
        %v3645 = vmax.f32 %v3613, 0.0
        %v3646 = vmax.f32 %v3614, 0.0
        %v3647 = vmax.f32 %v3615, 0.0
        %v3648 = vmax.f32 %v3616, 0.0
        %v3649 = vmax.f32 %v3617, 0.0
        %v3650 = vmax.f32 %v3618, 0.0
        %v3651 = vmax.f32 %v3619, 0.0
        %v3652 = vmax.f32 %v3620, 0.0
        %v3653 = vmax.f32 %v3621, 0.0
        %v3654 = vmax.f32 %v3622, 0.0
        %v3655 = vmax.f32 %v3623, 0.0
        %v3656 = vmax.f32 %v3624, 0.0
        %v3657 = vmax.f32 %v3625, 0.0
        %v3658 = vmax.f32 %v3626, 0.0
        %v3659 = vmax.f32 %v3627, 0.0
        %v3660 = vmax.f32 %v3628, 0.0
        %v3661 = vmax.f32 %v3629, 0.0
        %v3662 = vmax.f32 %v3630, 0.0
        %v3663 = vmax.f32 %v3631, 0.0
        %v3664 = vpack.c.bf16 %v3633, %v3632
        %v3665 = vpack.c.bf16 %v3635, %v3634
        %v3666 = vpack.c.bf16 %v3637, %v3636
        %v3667 = vpack.c.bf16 %v3639, %v3638
        %v3668 = vpack.c.bf16 %v3641, %v3640
        %v3669 = vpack.c.bf16 %v3643, %v3642
        %v3670 = vpack.c.bf16 %v3645, %v3644
        %v3671 = vpack.c.bf16 %v3647, %v3646
        %v3672 = vpack.c.bf16 %v3649, %v3648
        %v3673 = vpack.c.bf16 %v3651, %v3650
        %v3674 = vpack.c.bf16 %v3653, %v3652
        %v3675 = vpack.c.bf16 %v3655, %v3654
        %v3676 = vpack.c.bf16 %v3657, %v3656
        %v3677 = vpack.c.bf16 %v3659, %v3658
        %v3678 = vpack.c.bf16 %v3661, %v3660
        %v3679 = vpack.c.bf16 %v3663, %v3662
        %v3680 = vadd.f32 %v2778, %v3598
        %v3681 = vadd.f32 %v2782, %v3598
        %v3682 = vadd.f32 %v2788, %v3598
        %v3683 = vadd.f32 %v2792, %v3598
        %v3684 = vadd.f32 %v2798, %v3598
        %v3685 = vadd.f32 %v2802, %v3598
        %v3686 = vadd.f32 %v2808, %v3598
        %v3687 = vadd.f32 %v2812, %v3598
        %v3688 = vadd.f32 %v2818, %v3598
        %v3689 = vadd.f32 %v2822, %v3598
        %v3690 = vadd.f32 %v2828, %v3598
        %v3691 = vadd.f32 %v2832, %v3598
        %v3692 = vadd.f32 %v2838, %v3598
        %v3693 = vadd.f32 %v2842, %v3598
        %v3694 = vadd.f32 %v2848, %v3598
        %v3695 = vadd.f32 %v2852, %v3598
        %v3696 = vadd.f32 %v2858, %v3598
        %v3697 = vadd.f32 %v2862, %v3598
        %v3698 = vadd.f32 %v2868, %v3598
        %v3699 = vadd.f32 %v2872, %v3598
        %v3700 = vadd.f32 %v2878, %v3598
        %v3701 = vadd.f32 %v2882, %v3598
        %v3702 = vadd.f32 %v2888, %v3598
        %v3703 = vadd.f32 %v2892, %v3598
        %v3704 = vadd.f32 %v2898, %v3598
        %v3705 = vadd.f32 %v2902, %v3598
        %v3706 = vadd.f32 %v2908, %v3598
        %v3707 = vadd.f32 %v2912, %v3598
        %v3708 = vadd.f32 %v2918, %v3598
        %v3709 = vadd.f32 %v2922, %v3598
        %v3710 = vadd.f32 %v2928, %v3598
        %v3711 = vadd.f32 %v2932, %v3598
        %v3712 = vmax.f32 %v3680, 0.0
        %v3713 = vmax.f32 %v3681, 0.0
        %v3714 = vmax.f32 %v3682, 0.0
        %v3715 = vmax.f32 %v3683, 0.0
        %v3716 = vmax.f32 %v3684, 0.0
        %v3717 = vmax.f32 %v3685, 0.0
        %v3718 = vmax.f32 %v3686, 0.0
        %v3719 = vmax.f32 %v3687, 0.0
        %v3720 = vmax.f32 %v3688, 0.0
        %v3721 = vmax.f32 %v3689, 0.0
        %v3722 = vmax.f32 %v3690, 0.0
        %v3723 = vmax.f32 %v3691, 0.0
        %v3724 = vmax.f32 %v3692, 0.0
        %v3725 = vmax.f32 %v3693, 0.0
        %v3726 = vmax.f32 %v3694, 0.0
        %v3727 = vmax.f32 %v3695, 0.0
        %v3728 = vmax.f32 %v3696, 0.0
        %v3729 = vmax.f32 %v3697, 0.0
        %v3730 = vmax.f32 %v3698, 0.0
        %v3731 = vmax.f32 %v3699, 0.0
        %v3732 = vmax.f32 %v3700, 0.0
        %v3733 = vmax.f32 %v3701, 0.0
        %v3734 = vmax.f32 %v3702, 0.0
        %v3735 = vmax.f32 %v3703, 0.0
        %v3736 = vmax.f32 %v3704, 0.0
        %v3737 = vmax.f32 %v3705, 0.0
        %v3738 = vmax.f32 %v3706, 0.0
        %v3739 = vmax.f32 %v3707, 0.0
        %v3740 = vmax.f32 %v3708, 0.0
        %v3741 = vmax.f32 %v3709, 0.0
        %v3742 = vmax.f32 %v3710, 0.0
        %v3743 = vmax.f32 %v3711, 0.0
        %v3744 = vpack.c.bf16 %v3713, %v3712
        %v3745 = vpack.c.bf16 %v3715, %v3714
        %v3746 = vpack.c.bf16 %v3717, %v3716
        %v3747 = vpack.c.bf16 %v3719, %v3718
        %v3748 = vpack.c.bf16 %v3721, %v3720
        %v3749 = vpack.c.bf16 %v3723, %v3722
        %v3750 = vpack.c.bf16 %v3725, %v3724
        %v3751 = vpack.c.bf16 %v3727, %v3726
        %v3752 = vpack.c.bf16 %v3729, %v3728
        %v3753 = vpack.c.bf16 %v3731, %v3730
        %v3754 = vpack.c.bf16 %v3733, %v3732
        %v3755 = vpack.c.bf16 %v3735, %v3734
        %v3756 = vpack.c.bf16 %v3737, %v3736
        %v3757 = vpack.c.bf16 %v3739, %v3738
        %v3758 = vpack.c.bf16 %v3741, %v3740
        %v3759 = vpack.c.bf16 %v3743, %v3742
        %v3760 = vadd.f32 %v3512, %v3598
        %v3761 = vadd.f32 %v3513, %v3598
        %v3762 = vadd.f32 %v3514, %v3598
        %v3763 = vadd.f32 %v3515, %v3598
        %v3764 = vadd.f32 %v3516, %v3598
        %v3765 = vadd.f32 %v3517, %v3598
        %v3766 = vadd.f32 %v3518, %v3598
        %v3767 = vadd.f32 %v3519, %v3598
        %v3768 = vadd.f32 %v3520, %v3598
        %v3769 = vadd.f32 %v3521, %v3598
        %v3770 = vadd.f32 %v3522, %v3598
        %v3771 = vadd.f32 %v3523, %v3598
        %v3772 = vadd.f32 %v3524, %v3598
        %v3773 = vadd.f32 %v3525, %v3598
        %v3774 = vadd.f32 %v3526, %v3598
        %v3775 = vadd.f32 %v3527, %v3598
        %v3776 = vadd.f32 %v3528, %v3598
        %v3777 = vadd.f32 %v3529, %v3598
        %v3778 = vadd.f32 %v3530, %v3598
        %v3779 = vadd.f32 %v3531, %v3598
        %v3780 = vadd.f32 %v3532, %v3598
        %v3781 = vadd.f32 %v3533, %v3598
        %v3782 = vadd.f32 %v3534, %v3598
        %v3783 = vadd.f32 %v3535, %v3598
        %v3784 = vadd.f32 %v3536, %v3598
        %v3785 = vadd.f32 %v3537, %v3598
        %v3786 = vadd.f32 %v3538, %v3598
        %v3787 = vadd.f32 %v3539, %v3598
        %v3788 = vadd.f32 %v3540, %v3598
        %v3789 = vadd.f32 %v3541, %v3598
        %v3790 = vadd.f32 %v3542, %v3598
        %v3791 = vadd.f32 %v3543, %v3598
        %v3792 = vmax.f32 %v3760, 0.0
        %v3793 = vmax.f32 %v3761, 0.0
        %v3794 = vmax.f32 %v3762, 0.0
        %v3795 = vmax.f32 %v3763, 0.0
        %v3796 = vmax.f32 %v3764, 0.0
        %v3797 = vmax.f32 %v3765, 0.0
        %v3798 = vmax.f32 %v3766, 0.0
        %v3799 = vmax.f32 %v3767, 0.0
        %v3800 = vmax.f32 %v3768, 0.0
        %v3801 = vmax.f32 %v3769, 0.0
        %v3802 = vmax.f32 %v3770, 0.0
        %v3803 = vmax.f32 %v3771, 0.0
        %v3804 = vmax.f32 %v3772, 0.0
        %v3805 = vmax.f32 %v3773, 0.0
        %v3806 = vmax.f32 %v3774, 0.0
        %v3807 = vmax.f32 %v3775, 0.0
        %v3808 = vmax.f32 %v3776, 0.0
        %v3809 = vmax.f32 %v3777, 0.0
        %v3810 = vmax.f32 %v3778, 0.0
        %v3811 = vmax.f32 %v3779, 0.0
        %v3812 = vmax.f32 %v3780, 0.0
        %v3813 = vmax.f32 %v3781, 0.0
        %v3814 = vmax.f32 %v3782, 0.0
        %v3815 = vmax.f32 %v3783, 0.0
        %v3816 = vmax.f32 %v3784, 0.0
        %v3817 = vmax.f32 %v3785, 0.0
        %v3818 = vmax.f32 %v3786, 0.0
        %v3819 = vmax.f32 %v3787, 0.0
        %v3820 = vmax.f32 %v3788, 0.0
        %v3821 = vmax.f32 %v3789, 0.0
        %v3822 = vmax.f32 %v3790, 0.0
        %v3823 = vmax.f32 %v3791, 0.0
        %v3824 = vpack.c.bf16 %v3793, %v3792
        %v3825 = vpack.c.bf16 %v3795, %v3794
        %v3826 = vpack.c.bf16 %v3797, %v3796
        %v3827 = vpack.c.bf16 %v3799, %v3798
        %v3828 = vpack.c.bf16 %v3801, %v3800
        %v3829 = vpack.c.bf16 %v3803, %v3802
        %v3830 = vpack.c.bf16 %v3805, %v3804
        %v3831 = vpack.c.bf16 %v3807, %v3806
        %v3832 = vpack.c.bf16 %v3809, %v3808
        %v3833 = vpack.c.bf16 %v3811, %v3810
        %v3834 = vpack.c.bf16 %v3813, %v3812
        %v3835 = vpack.c.bf16 %v3815, %v3814
        %v3836 = vpack.c.bf16 %v3817, %v3816
        %v3837 = vpack.c.bf16 %v3819, %v3818
        %v3838 = vpack.c.bf16 %v3821, %v3820
        %v3839 = vpack.c.bf16 %v3823, %v3822
        %v3840 = vadd.f32 %v3544, %v3598
        %v3841 = vadd.f32 %v3545, %v3598
        %v3842 = vadd.f32 %v3546, %v3598
        %v3843 = vadd.f32 %v3547, %v3598
        %v3844 = vadd.f32 %v3548, %v3598
        %v3845 = vadd.f32 %v3549, %v3598
        %v3846 = vadd.f32 %v3550, %v3598
        %v3847 = vadd.f32 %v3551, %v3598
        %v3848 = vadd.f32 %v3552, %v3598
        %v3849 = vadd.f32 %v3553, %v3598
        %v3850 = vadd.f32 %v3554, %v3598
        %v3851 = vadd.f32 %v3555, %v3598
        %v3852 = vadd.f32 %v3556, %v3598
        %v3853 = vadd.f32 %v3557, %v3598
        %v3854 = vadd.f32 %v3558, %v3598
        %v3855 = vadd.f32 %v3559, %v3598
        %v3856 = vadd.f32 %v3560, %v3598
        %v3857 = vadd.f32 %v3561, %v3598
        %v3858 = vadd.f32 %v3562, %v3598
        %v3859 = vadd.f32 %v3563, %v3598
        %v3860 = vadd.f32 %v3564, %v3598
        %v3861 = vadd.f32 %v3565, %v3598
        %v3862 = vadd.f32 %v3566, %v3598
        %v3863 = vadd.f32 %v3567, %v3598
        %v3864 = vadd.f32 %v3568, %v3598
        %v3865 = vadd.f32 %v3569, %v3598
        %v3866 = vadd.f32 %v3570, %v3598
        %v3867 = vadd.f32 %v3571, %v3598
        %v3868 = vadd.f32 %v3572, %v3598
        %v3869 = vadd.f32 %v3573, %v3598
        %v3870 = vadd.f32 %v3574, %v3598
        %v3871 = vadd.f32 %v3575, %v3598
        %v3872 = vmax.f32 %v3840, 0.0
        %v3873 = vmax.f32 %v3841, 0.0
        %v3874 = vmax.f32 %v3842, 0.0
        %v3875 = vmax.f32 %v3843, 0.0
        %v3876 = vmax.f32 %v3844, 0.0
        %v3877 = vmax.f32 %v3845, 0.0
        %v3878 = vmax.f32 %v3846, 0.0
        %v3879 = vmax.f32 %v3847, 0.0
        %v3880 = vmax.f32 %v3848, 0.0
        %v3881 = vmax.f32 %v3849, 0.0
        %v3882 = vmax.f32 %v3850, 0.0
        %v3883 = vmax.f32 %v3851, 0.0
        %v3884 = vmax.f32 %v3852, 0.0
        %v3885 = vmax.f32 %v3853, 0.0
        %v3886 = vmax.f32 %v3854, 0.0
        %v3887 = vmax.f32 %v3855, 0.0
        %v3888 = vmax.f32 %v3856, 0.0
        %v3889 = vmax.f32 %v3857, 0.0
        %v3890 = vmax.f32 %v3858, 0.0
        %v3891 = vmax.f32 %v3859, 0.0
        %v3892 = vmax.f32 %v3860, 0.0
        %v3893 = vmax.f32 %v3861, 0.0
        %v3894 = vmax.f32 %v3862, 0.0
        %v3895 = vmax.f32 %v3863, 0.0
        %v3896 = vmax.f32 %v3864, 0.0
        %v3897 = vmax.f32 %v3865, 0.0
        %v3898 = vmax.f32 %v3866, 0.0
        %v3899 = vmax.f32 %v3867, 0.0
        %v3900 = vmax.f32 %v3868, 0.0
        %v3901 = vmax.f32 %v3869, 0.0
        %v3902 = vmax.f32 %v3870, 0.0
        %v3903 = vmax.f32 %v3871, 0.0
        %v3904 = vpack.c.bf16 %v3873, %v3872
        %v3905 = vpack.c.bf16 %v3875, %v3874
        %v3906 = vpack.c.bf16 %v3877, %v3876
        %v3907 = vpack.c.bf16 %v3879, %v3878
        %v3908 = vpack.c.bf16 %v3881, %v3880
        %v3909 = vpack.c.bf16 %v3883, %v3882
        %v3910 = vpack.c.bf16 %v3885, %v3884
        %v3911 = vpack.c.bf16 %v3887, %v3886
        %v3912 = vpack.c.bf16 %v3889, %v3888
        %v3913 = vpack.c.bf16 %v3891, %v3890
        %v3914 = vpack.c.bf16 %v3893, %v3892
        %v3915 = vpack.c.bf16 %v3895, %v3894
        %v3916 = vpack.c.bf16 %v3897, %v3896
        %v3917 = vpack.c.bf16 %v3899, %v3898
        %v3918 = vpack.c.bf16 %v3901, %v3900
        %v3919 = vpack.c.bf16 %v3903, %v3902
        %v3921 = vlaneseq
        %v3922 = vshrl.u32 %v3921, 7
        %v3923 = vsub.s32 0, %v3922
        %v3924 = vrot.slane %v3577, %v3923
        %v3942 = vunpack.c.l.b16 %v3578
        %v3943 = vunpack.c.l.b16 %v3579
        %v3944 = vunpack.c.l.b16 %v3580
        %v3945 = vunpack.c.l.b16 %v3581
        %v3946 = vunpack.c.l.b16 %v3582
        %v3947 = vunpack.c.l.b16 %v3583
        %v3948 = vunpack.c.l.b16 %v3584
        %v3949 = vunpack.c.l.b16 %v3585
        %v3950 = vunpack.c.l.b16 %v3586
        %v3951 = vunpack.c.l.b16 %v3587
        %v3952 = vunpack.c.l.b16 %v3588
        %v3953 = vunpack.c.l.b16 %v3589
        %v3954 = vunpack.c.l.b16 %v3590
        %v3955 = vunpack.c.l.b16 %v3591
        %v3956 = vunpack.c.l.b16 %v3592
        %v3957 = vunpack.c.l.b16 %v3593
        %v3958 = vpack.c.b16 %v3943, %v3942
        %v3959 = vpack.c.b16 %v3945, %v3944
        %v3960 = vpack.c.b16 %v3947, %v3946
        %v3961 = vpack.c.b16 %v3949, %v3948
        %v3962 = vpack.c.b16 %v3951, %v3950
        %v3963 = vpack.c.b16 %v3953, %v3952
        %v3964 = vpack.c.b16 %v3955, %v3954
        %v3965 = vpack.c.b16 %v3957, %v3956
        %3974 = vmatprep.subr.bf16.mxu0 0
        %3975 = vmatpush1.bf16.msra.mxu0 %v3965
        %3976 = vmatprep.subr.bf16.mxu0 0
        %3977 = vmatpush1.bf16.msra.mxu0 %v3964
        %3978 = vmatprep.subr.bf16.mxu0 0
        %3979 = vmatpush1.bf16.msra.mxu0 %v3963
        %3980 = vmatprep.subr.bf16.mxu0 0
        %3981 = vmatpush1.bf16.msra.mxu0 %v3962
        %3982 = vmatprep.subr.bf16.mxu0 0
        %3983 = vmatpush1.bf16.msra.mxu0 %v3961
        %3984 = vmatprep.subr.bf16.mxu0 0
        %3985 = vmatpush1.bf16.msra.mxu0 %v3960
        %3986 = vmatprep.subr.bf16.mxu0 0
        %3987 = vmatpush1.bf16.msra.mxu0 %v3959
        %3988 = vmatprep.subr.bf16.mxu0 0
        %3989 = vmatpush1.bf16.msra.mxu0 %v3958
        %3990 = vmatprep.subr.bf16.mxu0 0
        %3991 = vmatpush2.bf16.msra.mxu0 0
        %3992 = vmatprep.subr.bf16.mxu0 0
        %3993 = vmatpush2.bf16.msra.mxu0 0
        %3994 = vmatprep.subr.bf16.mxu0 0
        %3995 = vmatpush2.bf16.msra.mxu0 0
        %3996 = vmatprep.subr.bf16.mxu0 0
        %3997 = vmatpush2.bf16.msra.mxu0 0
        %3998 = vmatprep.subr.bf16.mxu0 0
        %3999 = vmatpush2.bf16.msra.mxu0 0
        %4000 = vmatprep.subr.bf16.mxu0 0
        %4001 = vmatpush2.bf16.msra.mxu0 0
        %4002 = vmatprep.subr.bf16.mxu0 0
        %4003 = vmatpush2.bf16.msra.mxu0 0
        %4004 = vmatprep.subr.bf16.mxu0 0
        %4005 = vmatpush2.bf16.msra.mxu0 0
        %4006 = vmatprep.mubr.bf16.mxu0 0
        %4007 = vmatmul.mubr.bf16.gmra.mxu0 %v3664
        %v4008 = vpop.f32.mrf.mxu0
        %v4009 = vadd.f32 %v3924, %v4008
        %v4010 = vpop.f32.mrf.mxu0
        %v4011 = vpop.f32.mrf.mxu0
        %v4012 = vadd.f32 %v3924, %v4011
        %v4013 = vpop.f32.mrf.mxu0
        %4014 = vmatprep.mubr.bf16.mxu0 0
        %4015 = vmatmul.mubr.bf16.gmra.mxu0 %v3665
        %v4016 = vpop.f32.mrf.mxu0
        %v4017 = vadd.f32 %v3924, %v4016
        %v4018 = vpop.f32.mrf.mxu0
        %v4019 = vpop.f32.mrf.mxu0
        %v4020 = vadd.f32 %v3924, %v4019
        %v4021 = vpop.f32.mrf.mxu0
        %4022 = vmatprep.mubr.bf16.mxu0 0
        %4023 = vmatmul.mubr.bf16.gmra.mxu0 %v3666
        %v4024 = vpop.f32.mrf.mxu0
        %v4025 = vadd.f32 %v3924, %v4024
        %v4026 = vpop.f32.mrf.mxu0
        %v4027 = vpop.f32.mrf.mxu0
        %v4028 = vadd.f32 %v3924, %v4027
        %v4029 = vpop.f32.mrf.mxu0
        %4030 = vmatprep.mubr.bf16.mxu0 0
        %4031 = vmatmul.mubr.bf16.gmra.mxu0 %v3667
        %v4032 = vpop.f32.mrf.mxu0
        %v4033 = vadd.f32 %v3924, %v4032
        %v4034 = vpop.f32.mrf.mxu0
        %v4035 = vpop.f32.mrf.mxu0
        %v4036 = vadd.f32 %v3924, %v4035
        %v4037 = vpop.f32.mrf.mxu0
        %4038 = vmatprep.mubr.bf16.mxu0 0
        %4039 = vmatmul.mubr.bf16.gmra.mxu0 %v3668
        %v4040 = vpop.f32.mrf.mxu0
        %v4041 = vadd.f32 %v3924, %v4040
        %v4042 = vpop.f32.mrf.mxu0
        %v4043 = vpop.f32.mrf.mxu0
        %v4044 = vadd.f32 %v3924, %v4043
        %v4045 = vpop.f32.mrf.mxu0
        %4046 = vmatprep.mubr.bf16.mxu0 0
        %4047 = vmatmul.mubr.bf16.gmra.mxu0 %v3669
        %v4048 = vpop.f32.mrf.mxu0
        %v4049 = vadd.f32 %v3924, %v4048
        %v4050 = vpop.f32.mrf.mxu0
        %v4051 = vpop.f32.mrf.mxu0
        %v4052 = vadd.f32 %v3924, %v4051
        %v4053 = vpop.f32.mrf.mxu0
        %4054 = vmatprep.mubr.bf16.mxu0 0
        %4055 = vmatmul.mubr.bf16.gmra.mxu0 %v3670
        %v4056 = vpop.f32.mrf.mxu0
        %v4057 = vadd.f32 %v3924, %v4056
        %v4058 = vpop.f32.mrf.mxu0
        %v4059 = vpop.f32.mrf.mxu0
        %v4060 = vadd.f32 %v3924, %v4059
        %v4061 = vpop.f32.mrf.mxu0
        %4062 = vmatprep.mubr.bf16.mxu0 0
        %4063 = vmatmul.mubr.bf16.gmra.mxu0 %v3671
        %v4064 = vpop.f32.mrf.mxu0
        %v4065 = vadd.f32 %v3924, %v4064
        %v4066 = vpop.f32.mrf.mxu0
        %v4067 = vpop.f32.mrf.mxu0
        %v4068 = vadd.f32 %v3924, %v4067
        %v4069 = vpop.f32.mrf.mxu0
        %4070 = vmatprep.mubr.bf16.mxu0 0
        %4071 = vmatmul.mubr.bf16.gmra.mxu0 %v3672
        %v4072 = vpop.f32.mrf.mxu0
        %v4073 = vadd.f32 %v3924, %v4072
        %v4074 = vpop.f32.mrf.mxu0
        %v4075 = vpop.f32.mrf.mxu0
        %v4076 = vadd.f32 %v3924, %v4075
        %v4077 = vpop.f32.mrf.mxu0
        %4078 = vmatprep.mubr.bf16.mxu0 0
        %4079 = vmatmul.mubr.bf16.gmra.mxu0 %v3673
        %v4080 = vpop.f32.mrf.mxu0
        %v4081 = vadd.f32 %v3924, %v4080
        %v4082 = vpop.f32.mrf.mxu0
        %v4083 = vpop.f32.mrf.mxu0
        %v4084 = vadd.f32 %v3924, %v4083
        %v4085 = vpop.f32.mrf.mxu0
        %4086 = vmatprep.mubr.bf16.mxu0 0
        %4087 = vmatmul.mubr.bf16.gmra.mxu0 %v3674
        %v4088 = vpop.f32.mrf.mxu0
        %v4089 = vadd.f32 %v3924, %v4088
        %v4090 = vpop.f32.mrf.mxu0
        %v4091 = vpop.f32.mrf.mxu0
        %v4092 = vadd.f32 %v3924, %v4091
        %v4093 = vpop.f32.mrf.mxu0
        %4094 = vmatprep.mubr.bf16.mxu0 0
        %4095 = vmatmul.mubr.bf16.gmra.mxu0 %v3675
        %v4096 = vpop.f32.mrf.mxu0
        %v4097 = vadd.f32 %v3924, %v4096
        %v4098 = vpop.f32.mrf.mxu0
        %v4099 = vpop.f32.mrf.mxu0
        %v4100 = vadd.f32 %v3924, %v4099
        %v4101 = vpop.f32.mrf.mxu0
        %4102 = vmatprep.mubr.bf16.mxu0 0
        %4103 = vmatmul.mubr.bf16.gmra.mxu0 %v3676
        %v4104 = vpop.f32.mrf.mxu0
        %v4105 = vadd.f32 %v3924, %v4104
        %v4106 = vpop.f32.mrf.mxu0
        %v4107 = vpop.f32.mrf.mxu0
        %v4108 = vadd.f32 %v3924, %v4107
        %v4109 = vpop.f32.mrf.mxu0
        %4110 = vmatprep.mubr.bf16.mxu0 0
        %4111 = vmatmul.mubr.bf16.gmra.mxu0 %v3677
        %v4112 = vpop.f32.mrf.mxu0
        %v4113 = vadd.f32 %v3924, %v4112
        %v4114 = vpop.f32.mrf.mxu0
        %v4115 = vpop.f32.mrf.mxu0
        %v4116 = vadd.f32 %v3924, %v4115
        %v4117 = vpop.f32.mrf.mxu0
        %4118 = vmatprep.mubr.bf16.mxu0 0
        %4119 = vmatmul.mubr.bf16.gmra.mxu0 %v3678
        %v4120 = vpop.f32.mrf.mxu0
        %v4121 = vadd.f32 %v3924, %v4120
        %v4122 = vpop.f32.mrf.mxu0
        %v4123 = vpop.f32.mrf.mxu0
        %v4124 = vadd.f32 %v3924, %v4123
        %v4125 = vpop.f32.mrf.mxu0
        %4126 = vmatprep.mubr.bf16.mxu0 0
        %4127 = vmatmul.mubr.bf16.gmra.mxu0 %v3679
        %v4128 = vpop.f32.mrf.mxu0
        %v4129 = vadd.f32 %v3924, %v4128
        %v4130 = vpop.f32.mrf.mxu0
        %v4131 = vpop.f32.mrf.mxu0
        %v4132 = vadd.f32 %v3924, %v4131
        %v4133 = vpop.f32.mrf.mxu0
        %4134 = vmatprep.mubr.bf16.mxu0 0
        %4135 = vmatmul.mubr.bf16.gmra.mxu0 %v3744
        %v4136 = vpop.f32.mrf.mxu0
        %v4137 = vadd.f32 %v3924, %v4136
        %v4138 = vpop.f32.mrf.mxu0
        %v4139 = vpop.f32.mrf.mxu0
        %v4140 = vadd.f32 %v3924, %v4139
        %v4141 = vpop.f32.mrf.mxu0
        %4142 = vmatprep.mubr.bf16.mxu0 0
        %4143 = vmatmul.mubr.bf16.gmra.mxu0 %v3745
        %v4144 = vpop.f32.mrf.mxu0
        %v4145 = vadd.f32 %v3924, %v4144
        %v4146 = vpop.f32.mrf.mxu0
        %v4147 = vpop.f32.mrf.mxu0
        %v4148 = vadd.f32 %v3924, %v4147
        %v4149 = vpop.f32.mrf.mxu0
        %4150 = vmatprep.mubr.bf16.mxu0 0
        %4151 = vmatmul.mubr.bf16.gmra.mxu0 %v3746
        %v4152 = vpop.f32.mrf.mxu0
        %v4153 = vadd.f32 %v3924, %v4152
        %v4154 = vpop.f32.mrf.mxu0
        %v4155 = vpop.f32.mrf.mxu0
        %v4156 = vadd.f32 %v3924, %v4155
        %v4157 = vpop.f32.mrf.mxu0
        %4158 = vmatprep.mubr.bf16.mxu0 0
        %4159 = vmatmul.mubr.bf16.gmra.mxu0 %v3747
        %v4160 = vpop.f32.mrf.mxu0
        %v4161 = vadd.f32 %v3924, %v4160
        %v4162 = vpop.f32.mrf.mxu0
        %v4163 = vpop.f32.mrf.mxu0
        %v4164 = vadd.f32 %v3924, %v4163
        %v4165 = vpop.f32.mrf.mxu0
        %4166 = vmatprep.mubr.bf16.mxu0 0
        %4167 = vmatmul.mubr.bf16.gmra.mxu0 %v3748
        %v4168 = vpop.f32.mrf.mxu0
        %v4169 = vadd.f32 %v3924, %v4168
        %v4170 = vpop.f32.mrf.mxu0
        %v4171 = vpop.f32.mrf.mxu0
        %v4172 = vadd.f32 %v3924, %v4171
        %v4173 = vpop.f32.mrf.mxu0
        %4174 = vmatprep.mubr.bf16.mxu0 0
        %4175 = vmatmul.mubr.bf16.gmra.mxu0 %v3749
        %v4176 = vpop.f32.mrf.mxu0
        %v4177 = vadd.f32 %v3924, %v4176
        %v4178 = vpop.f32.mrf.mxu0
        %v4179 = vpop.f32.mrf.mxu0
        %v4180 = vadd.f32 %v3924, %v4179
        %v4181 = vpop.f32.mrf.mxu0
        %4182 = vmatprep.mubr.bf16.mxu0 0
        %4183 = vmatmul.mubr.bf16.gmra.mxu0 %v3750
        %v4184 = vpop.f32.mrf.mxu0
        %v4185 = vadd.f32 %v3924, %v4184
        %v4186 = vpop.f32.mrf.mxu0
        %v4187 = vpop.f32.mrf.mxu0
        %v4188 = vadd.f32 %v3924, %v4187
        %v4189 = vpop.f32.mrf.mxu0
        %4190 = vmatprep.mubr.bf16.mxu0 0
        %4191 = vmatmul.mubr.bf16.gmra.mxu0 %v3751
        %v4192 = vpop.f32.mrf.mxu0
        %v4193 = vadd.f32 %v3924, %v4192
        %v4194 = vpop.f32.mrf.mxu0
        %v4195 = vpop.f32.mrf.mxu0
        %v4196 = vadd.f32 %v3924, %v4195
        %v4197 = vpop.f32.mrf.mxu0
        %4198 = vmatprep.mubr.bf16.mxu0 0
        %4199 = vmatmul.mubr.bf16.gmra.mxu0 %v3752
        %v4200 = vpop.f32.mrf.mxu0
        %v4201 = vadd.f32 %v3924, %v4200
        %v4202 = vpop.f32.mrf.mxu0
        %v4203 = vpop.f32.mrf.mxu0
        %v4204 = vadd.f32 %v3924, %v4203
        %v4205 = vpop.f32.mrf.mxu0
        %4206 = vmatprep.mubr.bf16.mxu0 0
        %4207 = vmatmul.mubr.bf16.gmra.mxu0 %v3753
        %v4208 = vpop.f32.mrf.mxu0
        %v4209 = vadd.f32 %v3924, %v4208
        %v4210 = vpop.f32.mrf.mxu0
        %v4211 = vpop.f32.mrf.mxu0
        %v4212 = vadd.f32 %v3924, %v4211
        %v4213 = vpop.f32.mrf.mxu0
        %4214 = vmatprep.mubr.bf16.mxu0 0
        %4215 = vmatmul.mubr.bf16.gmra.mxu0 %v3754
        %v4216 = vpop.f32.mrf.mxu0
        %v4217 = vadd.f32 %v3924, %v4216
        %v4218 = vpop.f32.mrf.mxu0
        %v4219 = vpop.f32.mrf.mxu0
        %v4220 = vadd.f32 %v3924, %v4219
        %v4221 = vpop.f32.mrf.mxu0
        %4222 = vmatprep.mubr.bf16.mxu0 0
        %4223 = vmatmul.mubr.bf16.gmra.mxu0 %v3755
        %v4224 = vpop.f32.mrf.mxu0
        %v4225 = vadd.f32 %v3924, %v4224
        %v4226 = vpop.f32.mrf.mxu0
        %v4227 = vpop.f32.mrf.mxu0
        %v4228 = vadd.f32 %v3924, %v4227
        %v4229 = vpop.f32.mrf.mxu0
        %4230 = vmatprep.mubr.bf16.mxu0 0
        %4231 = vmatmul.mubr.bf16.gmra.mxu0 %v3756
        %v4232 = vpop.f32.mrf.mxu0
        %v4233 = vadd.f32 %v3924, %v4232
        %v4234 = vpop.f32.mrf.mxu0
        %v4235 = vpop.f32.mrf.mxu0
        %v4236 = vadd.f32 %v3924, %v4235
        %v4237 = vpop.f32.mrf.mxu0
        %4238 = vmatprep.mubr.bf16.mxu0 0
        %4239 = vmatmul.mubr.bf16.gmra.mxu0 %v3757
        %v4240 = vpop.f32.mrf.mxu0
        %v4241 = vadd.f32 %v3924, %v4240
        %v4242 = vpop.f32.mrf.mxu0
        %v4243 = vpop.f32.mrf.mxu0
        %v4244 = vadd.f32 %v3924, %v4243
        %v4245 = vpop.f32.mrf.mxu0
        %4246 = vmatprep.mubr.bf16.mxu0 0
        %4247 = vmatmul.mubr.bf16.gmra.mxu0 %v3758
        %v4248 = vpop.f32.mrf.mxu0
        %v4249 = vadd.f32 %v3924, %v4248
        %v4250 = vpop.f32.mrf.mxu0
        %v4251 = vpop.f32.mrf.mxu0
        %v4252 = vadd.f32 %v3924, %v4251
        %v4253 = vpop.f32.mrf.mxu0
        %4254 = vmatprep.mubr.bf16.mxu0 0
        %4255 = vmatmul.mubr.bf16.gmra.mxu0 %v3759
        %v4256 = vpop.f32.mrf.mxu0
        %v4257 = vadd.f32 %v3924, %v4256
        %v4258 = vpop.f32.mrf.mxu0
        %v4259 = vpop.f32.mrf.mxu0
        %v4260 = vadd.f32 %v3924, %v4259
        %v4261 = vpop.f32.mrf.mxu0
        %4262 = vmatprep.mubr.bf16.mxu0 0
        %4263 = vmatmul.mubr.bf16.gmra.mxu0 %v3824
        %v4264 = vpop.f32.mrf.mxu0
        %v4265 = vadd.f32 %v3924, %v4264
        %v4266 = vpop.f32.mrf.mxu0
        %v4267 = vpop.f32.mrf.mxu0
        %v4268 = vadd.f32 %v3924, %v4267
        %v4269 = vpop.f32.mrf.mxu0
        %4270 = vmatprep.mubr.bf16.mxu0 0
        %4271 = vmatmul.mubr.bf16.gmra.mxu0 %v3825
        %v4272 = vpop.f32.mrf.mxu0
        %v4273 = vadd.f32 %v3924, %v4272
        %v4274 = vpop.f32.mrf.mxu0
        %v4275 = vpop.f32.mrf.mxu0
        %v4276 = vadd.f32 %v3924, %v4275
        %v4277 = vpop.f32.mrf.mxu0
        %4278 = vmatprep.mubr.bf16.mxu0 0
        %4279 = vmatmul.mubr.bf16.gmra.mxu0 %v3826
        %v4280 = vpop.f32.mrf.mxu0
        %v4281 = vadd.f32 %v3924, %v4280
        %v4282 = vpop.f32.mrf.mxu0
        %v4283 = vpop.f32.mrf.mxu0
        %v4284 = vadd.f32 %v3924, %v4283
        %v4285 = vpop.f32.mrf.mxu0
        %4286 = vmatprep.mubr.bf16.mxu0 0
        %4287 = vmatmul.mubr.bf16.gmra.mxu0 %v3827
        %v4288 = vpop.f32.mrf.mxu0
        %v4289 = vadd.f32 %v3924, %v4288
        %v4290 = vpop.f32.mrf.mxu0
        %v4291 = vpop.f32.mrf.mxu0
        %v4292 = vadd.f32 %v3924, %v4291
        %v4293 = vpop.f32.mrf.mxu0
        %4294 = vmatprep.mubr.bf16.mxu0 0
        %4295 = vmatmul.mubr.bf16.gmra.mxu0 %v3828
        %v4296 = vpop.f32.mrf.mxu0
        %v4297 = vadd.f32 %v3924, %v4296
        %v4298 = vpop.f32.mrf.mxu0
        %v4299 = vpop.f32.mrf.mxu0
        %v4300 = vadd.f32 %v3924, %v4299
        %v4301 = vpop.f32.mrf.mxu0
        %4302 = vmatprep.mubr.bf16.mxu0 0
        %4303 = vmatmul.mubr.bf16.gmra.mxu0 %v3829
        %v4304 = vpop.f32.mrf.mxu0
        %v4305 = vadd.f32 %v3924, %v4304
        %v4306 = vpop.f32.mrf.mxu0
        %v4307 = vpop.f32.mrf.mxu0
        %v4308 = vadd.f32 %v3924, %v4307
        %v4309 = vpop.f32.mrf.mxu0
        %4310 = vmatprep.mubr.bf16.mxu0 0
        %4311 = vmatmul.mubr.bf16.gmra.mxu0 %v3830
        %v4312 = vpop.f32.mrf.mxu0
        %v4313 = vadd.f32 %v3924, %v4312
        %v4314 = vpop.f32.mrf.mxu0
        %v4315 = vpop.f32.mrf.mxu0
        %v4316 = vadd.f32 %v3924, %v4315
        %v4317 = vpop.f32.mrf.mxu0
        %4318 = vmatprep.mubr.bf16.mxu0 0
        %4319 = vmatmul.mubr.bf16.gmra.mxu0 %v3831
        %v4320 = vpop.f32.mrf.mxu0
        %v4321 = vadd.f32 %v3924, %v4320
        %v4322 = vpop.f32.mrf.mxu0
        %v4323 = vpop.f32.mrf.mxu0
        %v4324 = vadd.f32 %v3924, %v4323
        %v4325 = vpop.f32.mrf.mxu0
        %4326 = vmatprep.mubr.bf16.mxu0 0
        %4327 = vmatmul.mubr.bf16.gmra.mxu0 %v3832
        %v4328 = vpop.f32.mrf.mxu0
        %v4329 = vadd.f32 %v3924, %v4328
        %v4330 = vpop.f32.mrf.mxu0
        %v4331 = vpop.f32.mrf.mxu0
        %v4332 = vadd.f32 %v3924, %v4331
        %v4333 = vpop.f32.mrf.mxu0
        %4334 = vmatprep.mubr.bf16.mxu0 0
        %4335 = vmatmul.mubr.bf16.gmra.mxu0 %v3833
        %v4336 = vpop.f32.mrf.mxu0
        %v4337 = vadd.f32 %v3924, %v4336
        %v4338 = vpop.f32.mrf.mxu0
        %v4339 = vpop.f32.mrf.mxu0
        %v4340 = vadd.f32 %v3924, %v4339
        %v4341 = vpop.f32.mrf.mxu0
        %4342 = vmatprep.mubr.bf16.mxu0 0
        %4343 = vmatmul.mubr.bf16.gmra.mxu0 %v3834
        %v4344 = vpop.f32.mrf.mxu0
        %v4345 = vadd.f32 %v3924, %v4344
        %v4346 = vpop.f32.mrf.mxu0
        %v4347 = vpop.f32.mrf.mxu0
        %v4348 = vadd.f32 %v3924, %v4347
        %v4349 = vpop.f32.mrf.mxu0
        %4350 = vmatprep.mubr.bf16.mxu0 0
        %4351 = vmatmul.mubr.bf16.gmra.mxu0 %v3835
        %v4352 = vpop.f32.mrf.mxu0
        %v4353 = vadd.f32 %v3924, %v4352
        %v4354 = vpop.f32.mrf.mxu0
        %v4355 = vpop.f32.mrf.mxu0
        %v4356 = vadd.f32 %v3924, %v4355
        %v4357 = vpop.f32.mrf.mxu0
        %4358 = vmatprep.mubr.bf16.mxu0 0
        %4359 = vmatmul.mubr.bf16.gmra.mxu0 %v3836
        %v4360 = vpop.f32.mrf.mxu0
        %v4361 = vadd.f32 %v3924, %v4360
        %v4362 = vpop.f32.mrf.mxu0
        %v4363 = vpop.f32.mrf.mxu0
        %v4364 = vadd.f32 %v3924, %v4363
        %v4365 = vpop.f32.mrf.mxu0
        %4366 = vmatprep.mubr.bf16.mxu0 0
        %4367 = vmatmul.mubr.bf16.gmra.mxu0 %v3837
        %v4368 = vpop.f32.mrf.mxu0
        %v4369 = vadd.f32 %v3924, %v4368
        %v4370 = vpop.f32.mrf.mxu0
        %v4371 = vpop.f32.mrf.mxu0
        %v4372 = vadd.f32 %v3924, %v4371
        %v4373 = vpop.f32.mrf.mxu0
        %4374 = vmatprep.mubr.bf16.mxu0 0
        %4375 = vmatmul.mubr.bf16.gmra.mxu0 %v3838
        %v4376 = vpop.f32.mrf.mxu0
        %v4377 = vadd.f32 %v3924, %v4376
        %v4378 = vpop.f32.mrf.mxu0
        %v4379 = vpop.f32.mrf.mxu0
        %v4380 = vadd.f32 %v3924, %v4379
        %v4381 = vpop.f32.mrf.mxu0
        %4382 = vmatprep.mubr.bf16.mxu0 0
        %4383 = vmatmul.mubr.bf16.gmra.mxu0 %v3839
        %v4384 = vpop.f32.mrf.mxu0
        %v4385 = vadd.f32 %v3924, %v4384
        %v4386 = vpop.f32.mrf.mxu0
        %v4387 = vpop.f32.mrf.mxu0
        %v4388 = vadd.f32 %v3924, %v4387
        %v4389 = vpop.f32.mrf.mxu0
        %4390 = vmatprep.mubr.bf16.mxu0 0
        %4391 = vmatmul.mubr.bf16.gmra.mxu0 %v3904
        %v4392 = vpop.f32.mrf.mxu0
        %v4393 = vadd.f32 %v3924, %v4392
        %v4394 = vpop.f32.mrf.mxu0
        %v4395 = vpop.f32.mrf.mxu0
        %v4396 = vadd.f32 %v3924, %v4395
        %v4397 = vpop.f32.mrf.mxu0
        %4398 = vmatprep.mubr.bf16.mxu0 0
        %4399 = vmatmul.mubr.bf16.gmra.mxu0 %v3905
        %v4400 = vpop.f32.mrf.mxu0
        %v4401 = vadd.f32 %v3924, %v4400
        %v4402 = vpop.f32.mrf.mxu0
        %v4403 = vpop.f32.mrf.mxu0
        %v4404 = vadd.f32 %v3924, %v4403
        %v4405 = vpop.f32.mrf.mxu0
        %4406 = vmatprep.mubr.bf16.mxu0 0
        %4407 = vmatmul.mubr.bf16.gmra.mxu0 %v3906
        %v4408 = vpop.f32.mrf.mxu0
        %v4409 = vadd.f32 %v3924, %v4408
        %v4410 = vpop.f32.mrf.mxu0
        %v4411 = vpop.f32.mrf.mxu0
        %v4412 = vadd.f32 %v3924, %v4411
        %v4413 = vpop.f32.mrf.mxu0
        %4414 = vmatprep.mubr.bf16.mxu0 0
        %4415 = vmatmul.mubr.bf16.gmra.mxu0 %v3907
        %v4416 = vpop.f32.mrf.mxu0
        %v4417 = vadd.f32 %v3924, %v4416
        %v4418 = vpop.f32.mrf.mxu0
        %v4419 = vpop.f32.mrf.mxu0
        %v4420 = vadd.f32 %v3924, %v4419
        %v4421 = vpop.f32.mrf.mxu0
        %4422 = vmatprep.mubr.bf16.mxu0 0
        %4423 = vmatmul.mubr.bf16.gmra.mxu0 %v3908
        %v4424 = vpop.f32.mrf.mxu0
        %v4425 = vadd.f32 %v3924, %v4424
        %v4426 = vpop.f32.mrf.mxu0
        %v4427 = vpop.f32.mrf.mxu0
        %v4428 = vadd.f32 %v3924, %v4427
        %v4429 = vpop.f32.mrf.mxu0
        %4430 = vmatprep.mubr.bf16.mxu0 0
        %4431 = vmatmul.mubr.bf16.gmra.mxu0 %v3909
        %v4432 = vpop.f32.mrf.mxu0
        %v4433 = vadd.f32 %v3924, %v4432
        %v4434 = vpop.f32.mrf.mxu0
        %v4435 = vpop.f32.mrf.mxu0
        %v4436 = vadd.f32 %v3924, %v4435
        %v4437 = vpop.f32.mrf.mxu0
        %4438 = vmatprep.mubr.bf16.mxu0 0
        %4439 = vmatmul.mubr.bf16.gmra.mxu0 %v3910
        %v4440 = vpop.f32.mrf.mxu0
        %v4441 = vadd.f32 %v3924, %v4440
        %v4442 = vpop.f32.mrf.mxu0
        %v4443 = vpop.f32.mrf.mxu0
        %v4444 = vadd.f32 %v3924, %v4443
        %v4445 = vpop.f32.mrf.mxu0
        %4446 = vmatprep.mubr.bf16.mxu0 0
        %4447 = vmatmul.mubr.bf16.gmra.mxu0 %v3911
        %v4448 = vpop.f32.mrf.mxu0
        %v4449 = vadd.f32 %v3924, %v4448
        %v4450 = vpop.f32.mrf.mxu0
        %v4451 = vpop.f32.mrf.mxu0
        %v4452 = vadd.f32 %v3924, %v4451
        %v4453 = vpop.f32.mrf.mxu0
        %4454 = vmatprep.mubr.bf16.mxu0 0
        %4455 = vmatmul.mubr.bf16.gmra.mxu0 %v3912
        %v4456 = vpop.f32.mrf.mxu0
        %v4457 = vadd.f32 %v3924, %v4456
        %v4458 = vpop.f32.mrf.mxu0
        %v4459 = vpop.f32.mrf.mxu0
        %v4460 = vadd.f32 %v3924, %v4459
        %v4461 = vpop.f32.mrf.mxu0
        %4462 = vmatprep.mubr.bf16.mxu0 0
        %4463 = vmatmul.mubr.bf16.gmra.mxu0 %v3913
        %v4464 = vpop.f32.mrf.mxu0
        %v4465 = vadd.f32 %v3924, %v4464
        %v4466 = vpop.f32.mrf.mxu0
        %v4467 = vpop.f32.mrf.mxu0
        %v4468 = vadd.f32 %v3924, %v4467
        %v4469 = vpop.f32.mrf.mxu0
        %4470 = vmatprep.mubr.bf16.mxu0 0
        %4471 = vmatmul.mubr.bf16.gmra.mxu0 %v3914
        %v4472 = vpop.f32.mrf.mxu0
        %v4473 = vadd.f32 %v3924, %v4472
        %v4474 = vpop.f32.mrf.mxu0
        %v4475 = vpop.f32.mrf.mxu0
        %v4476 = vadd.f32 %v3924, %v4475
        %v4477 = vpop.f32.mrf.mxu0
        %4478 = vmatprep.mubr.bf16.mxu0 0
        %4479 = vmatmul.mubr.bf16.gmra.mxu0 %v3915
        %v4480 = vpop.f32.mrf.mxu0
        %v4481 = vadd.f32 %v3924, %v4480
        %v4482 = vpop.f32.mrf.mxu0
        %v4483 = vpop.f32.mrf.mxu0
        %v4484 = vadd.f32 %v3924, %v4483
        %v4485 = vpop.f32.mrf.mxu0
        %4486 = vmatprep.mubr.bf16.mxu0 0
        %4487 = vmatmul.mubr.bf16.gmra.mxu0 %v3916
        %v4488 = vpop.f32.mrf.mxu0
        %v4489 = vadd.f32 %v3924, %v4488
        %v4490 = vpop.f32.mrf.mxu0
        %v4491 = vpop.f32.mrf.mxu0
        %v4492 = vadd.f32 %v3924, %v4491
        %v4493 = vpop.f32.mrf.mxu0
        %4494 = vmatprep.mubr.bf16.mxu0 0
        %4495 = vmatmul.mubr.bf16.gmra.mxu0 %v3917
        %v4496 = vpop.f32.mrf.mxu0
        %v4497 = vadd.f32 %v3924, %v4496
        %v4498 = vpop.f32.mrf.mxu0
        %v4499 = vpop.f32.mrf.mxu0
        %v4500 = vadd.f32 %v3924, %v4499
        %v4501 = vpop.f32.mrf.mxu0
        %4502 = vmatprep.mubr.bf16.mxu0 0
        %4503 = vmatmul.mubr.bf16.gmra.mxu0 %v3918
        %v4504 = vpop.f32.mrf.mxu0
        %v4505 = vadd.f32 %v3924, %v4504
        %v4506 = vpop.f32.mrf.mxu0
        %v4507 = vpop.f32.mrf.mxu0
        %v4508 = vadd.f32 %v3924, %v4507
        %v4509 = vpop.f32.mrf.mxu0
        %4510 = vmatprep.mubr.bf16.mxu0 0
        %4511 = vmatmul.mubr.bf16.gmra.mxu0 %v3919
        %v4512 = vpop.f32.mrf.mxu0
        %v4513 = vadd.f32 %v3924, %v4512
        %v4514 = vpop.f32.mrf.mxu0
        %v4515 = vpop.f32.mrf.mxu0
        %v4516 = vadd.f32 %v3924, %v4515
        %v4517 = vpop.f32.mrf.mxu0
        %4518 = vdwg.mxu0
        %v4519 = vmax.f32 %v4009, 0.0
        %v4520 = vmax.f32 %v4012, 0.0
        %v4521 = vmax.f32 %v4017, 0.0
        %v4522 = vmax.f32 %v4020, 0.0
        %v4523 = vmax.f32 %v4025, 0.0
        %v4524 = vmax.f32 %v4028, 0.0
        %v4525 = vmax.f32 %v4033, 0.0
        %v4526 = vmax.f32 %v4036, 0.0
        %v4527 = vmax.f32 %v4041, 0.0
        %v4528 = vmax.f32 %v4044, 0.0
        %v4529 = vmax.f32 %v4049, 0.0
        %v4530 = vmax.f32 %v4052, 0.0
        %v4531 = vmax.f32 %v4057, 0.0
        %v4532 = vmax.f32 %v4060, 0.0
        %v4533 = vmax.f32 %v4065, 0.0
        %v4534 = vmax.f32 %v4068, 0.0
        %v4535 = vmax.f32 %v4073, 0.0
        %v4536 = vmax.f32 %v4076, 0.0
        %v4537 = vmax.f32 %v4081, 0.0
        %v4538 = vmax.f32 %v4084, 0.0
        %v4539 = vmax.f32 %v4089, 0.0
        %v4540 = vmax.f32 %v4092, 0.0
        %v4541 = vmax.f32 %v4097, 0.0
        %v4542 = vmax.f32 %v4100, 0.0
        %v4543 = vmax.f32 %v4105, 0.0
        %v4544 = vmax.f32 %v4108, 0.0
        %v4545 = vmax.f32 %v4113, 0.0
        %v4546 = vmax.f32 %v4116, 0.0
        %v4547 = vmax.f32 %v4121, 0.0
        %v4548 = vmax.f32 %v4124, 0.0
        %v4549 = vmax.f32 %v4129, 0.0
        %v4550 = vmax.f32 %v4132, 0.0
        %v4551 = vmax.f32 %v4137, 0.0
        %v4552 = vmax.f32 %v4140, 0.0
        %v4553 = vmax.f32 %v4145, 0.0
        %v4554 = vmax.f32 %v4148, 0.0
        %v4555 = vmax.f32 %v4153, 0.0
        %v4556 = vmax.f32 %v4156, 0.0
        %v4557 = vmax.f32 %v4161, 0.0
        %v4558 = vmax.f32 %v4164, 0.0
        %v4559 = vmax.f32 %v4169, 0.0
        %v4560 = vmax.f32 %v4172, 0.0
        %v4561 = vmax.f32 %v4177, 0.0
        %v4562 = vmax.f32 %v4180, 0.0
        %v4563 = vmax.f32 %v4185, 0.0
        %v4564 = vmax.f32 %v4188, 0.0
        %v4565 = vmax.f32 %v4193, 0.0
        %v4566 = vmax.f32 %v4196, 0.0
        %v4567 = vmax.f32 %v4201, 0.0
        %v4568 = vmax.f32 %v4204, 0.0
        %v4569 = vmax.f32 %v4209, 0.0
        %v4570 = vmax.f32 %v4212, 0.0
        %v4571 = vmax.f32 %v4217, 0.0
        %v4572 = vmax.f32 %v4220, 0.0
        %v4573 = vmax.f32 %v4225, 0.0
        %v4574 = vmax.f32 %v4228, 0.0
        %v4575 = vmax.f32 %v4233, 0.0
        %v4576 = vmax.f32 %v4236, 0.0
        %v4577 = vmax.f32 %v4241, 0.0
        %v4578 = vmax.f32 %v4244, 0.0
        %v4579 = vmax.f32 %v4249, 0.0
        %v4580 = vmax.f32 %v4252, 0.0
        %v4581 = vmax.f32 %v4257, 0.0
        %v4582 = vmax.f32 %v4260, 0.0
        %v4583 = vmax.f32 %v4265, 0.0
        %v4584 = vmax.f32 %v4268, 0.0
        %v4585 = vmax.f32 %v4273, 0.0
        %v4586 = vmax.f32 %v4276, 0.0
        %v4587 = vmax.f32 %v4281, 0.0
        %v4588 = vmax.f32 %v4284, 0.0
        %v4589 = vmax.f32 %v4289, 0.0
        %v4590 = vmax.f32 %v4292, 0.0
        %v4591 = vmax.f32 %v4297, 0.0
        %v4592 = vmax.f32 %v4300, 0.0
        %v4593 = vmax.f32 %v4305, 0.0
        %v4594 = vmax.f32 %v4308, 0.0
        %v4595 = vmax.f32 %v4313, 0.0
        %v4596 = vmax.f32 %v4316, 0.0
        %v4597 = vmax.f32 %v4321, 0.0
        %v4598 = vmax.f32 %v4324, 0.0
        %v4599 = vmax.f32 %v4329, 0.0
        %v4600 = vmax.f32 %v4332, 0.0
        %v4601 = vmax.f32 %v4337, 0.0
        %v4602 = vmax.f32 %v4340, 0.0
        %v4603 = vmax.f32 %v4345, 0.0
        %v4604 = vmax.f32 %v4348, 0.0
        %v4605 = vmax.f32 %v4353, 0.0
        %v4606 = vmax.f32 %v4356, 0.0
        %v4607 = vmax.f32 %v4361, 0.0
        %v4608 = vmax.f32 %v4364, 0.0
        %v4609 = vmax.f32 %v4369, 0.0
        %v4610 = vmax.f32 %v4372, 0.0
        %v4611 = vmax.f32 %v4377, 0.0
        %v4612 = vmax.f32 %v4380, 0.0
        %v4613 = vmax.f32 %v4385, 0.0
        %v4614 = vmax.f32 %v4388, 0.0
        %v4615 = vmax.f32 %v4393, 0.0
        %v4616 = vmax.f32 %v4396, 0.0
        %v4617 = vmax.f32 %v4401, 0.0
        %v4618 = vmax.f32 %v4404, 0.0
        %v4619 = vmax.f32 %v4409, 0.0
        %v4620 = vmax.f32 %v4412, 0.0
        %v4621 = vmax.f32 %v4417, 0.0
        %v4622 = vmax.f32 %v4420, 0.0
        %v4623 = vmax.f32 %v4425, 0.0
        %v4624 = vmax.f32 %v4428, 0.0
        %v4625 = vmax.f32 %v4433, 0.0
        %v4626 = vmax.f32 %v4436, 0.0
        %v4627 = vmax.f32 %v4441, 0.0
        %v4628 = vmax.f32 %v4444, 0.0
        %v4629 = vmax.f32 %v4449, 0.0
        %v4630 = vmax.f32 %v4452, 0.0
        %v4631 = vmax.f32 %v4457, 0.0
        %v4632 = vmax.f32 %v4460, 0.0
        %v4633 = vmax.f32 %v4465, 0.0
        %v4634 = vmax.f32 %v4468, 0.0
        %v4635 = vmax.f32 %v4473, 0.0
        %v4636 = vmax.f32 %v4476, 0.0
        %v4637 = vmax.f32 %v4481, 0.0
        %v4638 = vmax.f32 %v4484, 0.0
        %v4639 = vmax.f32 %v4489, 0.0
        %v4640 = vmax.f32 %v4492, 0.0
        %v4641 = vmax.f32 %v4497, 0.0
        %v4642 = vmax.f32 %v4500, 0.0
        %v4643 = vmax.f32 %v4505, 0.0
        %v4644 = vmax.f32 %v4508, 0.0
        %v4645 = vmax.f32 %v4513, 0.0
        %v4646 = vmax.f32 %v4516, 0.0
        %v4647 = vpack.c.bf16 %v4520, %v4519
        %v4648 = vpack.c.bf16 %v4522, %v4521
        %v4649 = vpack.c.bf16 %v4524, %v4523
        %v4650 = vpack.c.bf16 %v4526, %v4525
        %v4651 = vpack.c.bf16 %v4528, %v4527
        %v4652 = vpack.c.bf16 %v4530, %v4529
        %v4653 = vpack.c.bf16 %v4532, %v4531
        %v4654 = vpack.c.bf16 %v4534, %v4533
        %v4655 = vpack.c.bf16 %v4536, %v4535
        %v4656 = vpack.c.bf16 %v4538, %v4537
        %v4657 = vpack.c.bf16 %v4540, %v4539
        %v4658 = vpack.c.bf16 %v4542, %v4541
        %v4659 = vpack.c.bf16 %v4544, %v4543
        %v4660 = vpack.c.bf16 %v4546, %v4545
        %v4661 = vpack.c.bf16 %v4548, %v4547
        %v4662 = vpack.c.bf16 %v4550, %v4549
        %v4663 = vpack.c.bf16 %v4552, %v4551
        %v4664 = vpack.c.bf16 %v4554, %v4553
        %v4665 = vpack.c.bf16 %v4556, %v4555
        %v4666 = vpack.c.bf16 %v4558, %v4557
        %v4667 = vpack.c.bf16 %v4560, %v4559
        %v4668 = vpack.c.bf16 %v4562, %v4561
        %v4669 = vpack.c.bf16 %v4564, %v4563
        %v4670 = vpack.c.bf16 %v4566, %v4565
        %v4671 = vpack.c.bf16 %v4568, %v4567
        %v4672 = vpack.c.bf16 %v4570, %v4569
        %v4673 = vpack.c.bf16 %v4572, %v4571
        %v4674 = vpack.c.bf16 %v4574, %v4573
        %v4675 = vpack.c.bf16 %v4576, %v4575
        %v4676 = vpack.c.bf16 %v4578, %v4577
        %v4677 = vpack.c.bf16 %v4580, %v4579
        %v4678 = vpack.c.bf16 %v4582, %v4581
        %v4679 = vpack.c.bf16 %v4584, %v4583
        %v4680 = vpack.c.bf16 %v4586, %v4585
        %v4681 = vpack.c.bf16 %v4588, %v4587
        %v4682 = vpack.c.bf16 %v4590, %v4589
        %v4683 = vpack.c.bf16 %v4592, %v4591
        %v4684 = vpack.c.bf16 %v4594, %v4593
        %v4685 = vpack.c.bf16 %v4596, %v4595
        %v4686 = vpack.c.bf16 %v4598, %v4597
        %v4687 = vpack.c.bf16 %v4600, %v4599
        %v4688 = vpack.c.bf16 %v4602, %v4601
        %v4689 = vpack.c.bf16 %v4604, %v4603
        %v4690 = vpack.c.bf16 %v4606, %v4605
        %v4691 = vpack.c.bf16 %v4608, %v4607
        %v4692 = vpack.c.bf16 %v4610, %v4609
        %v4693 = vpack.c.bf16 %v4612, %v4611
        %v4694 = vpack.c.bf16 %v4614, %v4613
        %v4695 = vpack.c.bf16 %v4616, %v4615
        %v4696 = vpack.c.bf16 %v4618, %v4617
        %v4697 = vpack.c.bf16 %v4620, %v4619
        %v4698 = vpack.c.bf16 %v4622, %v4621
        %v4699 = vpack.c.bf16 %v4624, %v4623
        %v4700 = vpack.c.bf16 %v4626, %v4625
        %v4701 = vpack.c.bf16 %v4628, %v4627
        %v4702 = vpack.c.bf16 %v4630, %v4629
        %v4703 = vpack.c.bf16 %v4632, %v4631
        %v4704 = vpack.c.bf16 %v4634, %v4633
        %v4705 = vpack.c.bf16 %v4636, %v4635
        %v4706 = vpack.c.bf16 %v4638, %v4637
        %v4707 = vpack.c.bf16 %v4640, %v4639
        %v4708 = vpack.c.bf16 %v4642, %v4641
        %v4709 = vpack.c.bf16 %v4644, %v4643
        %v4710 = vpack.c.bf16 %v4646, %v4645
        %v4727 = vunpack.c.l.b16 %v4647
        %v4728 = vunpack.c.h.b16 %v4647
        %v4729 = vunpack.c.l.b16 %v4648
        %v4730 = vunpack.c.h.b16 %v4648
        %v4731 = vunpack.c.l.b16 %v4649
        %v4732 = vunpack.c.h.b16 %v4649
        %v4733 = vunpack.c.l.b16 %v4650
        %v4734 = vunpack.c.h.b16 %v4650
        %v4735 = vunpack.c.l.b16 %v4651
        %v4736 = vunpack.c.h.b16 %v4651
        %v4737 = vunpack.c.l.b16 %v4652
        %v4738 = vunpack.c.h.b16 %v4652
        %v4739 = vunpack.c.l.b16 %v4653
        %v4740 = vunpack.c.h.b16 %v4653
        %v4741 = vunpack.c.l.b16 %v4654
        %v4742 = vunpack.c.h.b16 %v4654
        %v4743 = vunpack.c.l.b16 %v4655
        %v4744 = vunpack.c.h.b16 %v4655
        %v4745 = vunpack.c.l.b16 %v4656
        %v4746 = vunpack.c.h.b16 %v4656
        %v4747 = vunpack.c.l.b16 %v4657
        %v4748 = vunpack.c.h.b16 %v4657
        %v4749 = vunpack.c.l.b16 %v4658
        %v4750 = vunpack.c.h.b16 %v4658
        %v4751 = vunpack.c.l.b16 %v4659
        %v4752 = vunpack.c.h.b16 %v4659
        %v4753 = vunpack.c.l.b16 %v4660
        %v4754 = vunpack.c.h.b16 %v4660
        %v4755 = vunpack.c.l.b16 %v4661
        %v4756 = vunpack.c.h.b16 %v4661
        %v4757 = vunpack.c.l.b16 %v4662
        %v4758 = vunpack.c.h.b16 %v4662
        %v4759 = vpack.c.b16 %v4727, %v4727
        %v4760 = vpack.c.b16 %v4728, %v4728
        %v4761 = vpack.c.b16 %v4729, %v4729
        %v4762 = vpack.c.b16 %v4730, %v4730
        %v4763 = vpack.c.b16 %v4731, %v4731
        %v4764 = vpack.c.b16 %v4732, %v4732
        %v4765 = vpack.c.b16 %v4733, %v4733
        %v4766 = vpack.c.b16 %v4734, %v4734
        %v4767 = vpack.c.b16 %v4735, %v4735
        %v4768 = vpack.c.b16 %v4736, %v4736
        %v4769 = vpack.c.b16 %v4737, %v4737
        %v4770 = vpack.c.b16 %v4738, %v4738
        %v4771 = vpack.c.b16 %v4739, %v4739
        %v4772 = vpack.c.b16 %v4740, %v4740
        %v4773 = vpack.c.b16 %v4741, %v4741
        %v4774 = vpack.c.b16 %v4742, %v4742
        %v4775 = vpack.c.b16 %v4743, %v4743
        %v4776 = vpack.c.b16 %v4744, %v4744
        %v4777 = vpack.c.b16 %v4745, %v4745
        %v4778 = vpack.c.b16 %v4746, %v4746
        %v4779 = vpack.c.b16 %v4747, %v4747
        %v4780 = vpack.c.b16 %v4748, %v4748
        %v4781 = vpack.c.b16 %v4749, %v4749
        %v4782 = vpack.c.b16 %v4750, %v4750
        %v4783 = vpack.c.b16 %v4751, %v4751
        %v4784 = vpack.c.b16 %v4752, %v4752
        %v4785 = vpack.c.b16 %v4753, %v4753
        %v4786 = vpack.c.b16 %v4754, %v4754
        %v4787 = vpack.c.b16 %v4755, %v4755
        %v4788 = vpack.c.b16 %v4756, %v4756
        %v4789 = vpack.c.b16 %v4757, %v4757
        %v4790 = vpack.c.b16 %v4758, %v4758
        %4823 = vst [vmem:[%s483] sm:$0xf] %v4759
        %4824 = vst [vmem:[%s483 + $0x4] sm:$0xf] %v4760
        %4825 = vst [vmem:[%s483 + $0x8] sm:$0xf] %v4761
        %4826 = vst [vmem:[%s483 + $0xc] sm:$0xf] %v4762
        %4827 = vst [vmem:[%s483 + $0x10] sm:$0xf] %v4763
        %4828 = vst [vmem:[%s483 + $0x14] sm:$0xf] %v4764
        %4829 = vst [vmem:[%s483 + $0x18] sm:$0xf] %v4765
        %4830 = vst [vmem:[%s483 + $0x1c] sm:$0xf] %v4766
        %4831 = vst [vmem:[%s483 + $0x20] sm:$0xf] %v4767
        %4832 = vst [vmem:[%s483 + $0x24] sm:$0xf] %v4768
        %4833 = vst [vmem:[%s483 + $0x28] sm:$0xf] %v4769
        %4834 = vst [vmem:[%s483 + $0x2c] sm:$0xf] %v4770
        %4835 = vst [vmem:[%s483 + $0x30] sm:$0xf] %v4771
        %4836 = vst [vmem:[%s483 + $0x34] sm:$0xf] %v4772
        %4837 = vst [vmem:[%s483 + $0x38] sm:$0xf] %v4773
        %4838 = vst [vmem:[%s483 + $0x3c] sm:$0xf] %v4774
        %4839 = vst [vmem:[%s483 + $0x40] sm:$0xf] %v4775
        %4840 = vst [vmem:[%s483 + $0x44] sm:$0xf] %v4776
        %4841 = vst [vmem:[%s483 + $0x48] sm:$0xf] %v4777
        %4842 = vst [vmem:[%s483 + $0x4c] sm:$0xf] %v4778
        %4843 = vst [vmem:[%s483 + $0x50] sm:$0xf] %v4779
        %4844 = vst [vmem:[%s483 + $0x54] sm:$0xf] %v4780
        %4845 = vst [vmem:[%s483 + $0x58] sm:$0xf] %v4781
        %4846 = vst [vmem:[%s483 + $0x5c] sm:$0xf] %v4782
        %4847 = vst [vmem:[%s483 + $0x60] sm:$0xf] %v4783
        %4848 = vst [vmem:[%s483 + $0x64] sm:$0xf] %v4784
        %4849 = vst [vmem:[%s483 + $0x68] sm:$0xf] %v4785
        %4850 = vst [vmem:[%s483 + $0x6c] sm:$0xf] %v4786
        %4851 = vst [vmem:[%s483 + $0x70] sm:$0xf] %v4787
        %4852 = vst [vmem:[%s483 + $0x74] sm:$0xf] %v4788
        %4853 = vst [vmem:[%s483 + $0x78] sm:$0xf] %v4789
        %4854 = vst [vmem:[%s483 + $0x7c] sm:$0xf] %v4790
        %v4871 = vunpack.c.l.b16 %v4663
        %v4872 = vunpack.c.h.b16 %v4663
        %v4873 = vunpack.c.l.b16 %v4664
        %v4874 = vunpack.c.h.b16 %v4664
        %v4875 = vunpack.c.l.b16 %v4665
        %v4876 = vunpack.c.h.b16 %v4665
        %v4877 = vunpack.c.l.b16 %v4666
        %v4878 = vunpack.c.h.b16 %v4666
        %v4879 = vunpack.c.l.b16 %v4667
        %v4880 = vunpack.c.h.b16 %v4667
        %v4881 = vunpack.c.l.b16 %v4668
        %v4882 = vunpack.c.h.b16 %v4668
        %v4883 = vunpack.c.l.b16 %v4669
        %v4884 = vunpack.c.h.b16 %v4669
        %v4885 = vunpack.c.l.b16 %v4670
        %v4886 = vunpack.c.h.b16 %v4670
        %v4887 = vunpack.c.l.b16 %v4671
        %v4888 = vunpack.c.h.b16 %v4671
        %v4889 = vunpack.c.l.b16 %v4672
        %v4890 = vunpack.c.h.b16 %v4672
        %v4891 = vunpack.c.l.b16 %v4673
        %v4892 = vunpack.c.h.b16 %v4673
        %v4893 = vunpack.c.l.b16 %v4674
        %v4894 = vunpack.c.h.b16 %v4674
        %v4895 = vunpack.c.l.b16 %v4675
        %v4896 = vunpack.c.h.b16 %v4675
        %v4897 = vunpack.c.l.b16 %v4676
        %v4898 = vunpack.c.h.b16 %v4676
        %v4899 = vunpack.c.l.b16 %v4677
        %v4900 = vunpack.c.h.b16 %v4677
        %v4901 = vunpack.c.l.b16 %v4678
        %v4902 = vunpack.c.h.b16 %v4678
        %v4903 = vpack.c.b16 %v4871, %v4871
        %v4904 = vpack.c.b16 %v4872, %v4872
        %v4905 = vpack.c.b16 %v4873, %v4873
        %v4906 = vpack.c.b16 %v4874, %v4874
        %v4907 = vpack.c.b16 %v4875, %v4875
        %v4908 = vpack.c.b16 %v4876, %v4876
        %v4909 = vpack.c.b16 %v4877, %v4877
        %v4910 = vpack.c.b16 %v4878, %v4878
        %v4911 = vpack.c.b16 %v4879, %v4879
        %v4912 = vpack.c.b16 %v4880, %v4880
        %v4913 = vpack.c.b16 %v4881, %v4881
        %v4914 = vpack.c.b16 %v4882, %v4882
        %v4915 = vpack.c.b16 %v4883, %v4883
        %v4916 = vpack.c.b16 %v4884, %v4884
        %v4917 = vpack.c.b16 %v4885, %v4885
        %v4918 = vpack.c.b16 %v4886, %v4886
        %v4919 = vpack.c.b16 %v4887, %v4887
        %v4920 = vpack.c.b16 %v4888, %v4888
        %v4921 = vpack.c.b16 %v4889, %v4889
        %v4922 = vpack.c.b16 %v4890, %v4890
        %v4923 = vpack.c.b16 %v4891, %v4891
        %v4924 = vpack.c.b16 %v4892, %v4892
        %v4925 = vpack.c.b16 %v4893, %v4893
        %v4926 = vpack.c.b16 %v4894, %v4894
        %v4927 = vpack.c.b16 %v4895, %v4895
        %v4928 = vpack.c.b16 %v4896, %v4896
        %v4929 = vpack.c.b16 %v4897, %v4897
        %v4930 = vpack.c.b16 %v4898, %v4898
        %v4931 = vpack.c.b16 %v4899, %v4899
        %v4932 = vpack.c.b16 %v4900, %v4900
        %v4933 = vpack.c.b16 %v4901, %v4901
        %v4934 = vpack.c.b16 %v4902, %v4902
        %s4967 = scalar_lea.vmem %s483, 128 [#allocation13]
        %4968 = vst [vmem:[%s4967] sm:$0xf] %v4903
        %4969 = vst [vmem:[%s4967 + $0x4] sm:$0xf] %v4904
        %4970 = vst [vmem:[%s4967 + $0x8] sm:$0xf] %v4905
        %4971 = vst [vmem:[%s4967 + $0xc] sm:$0xf] %v4906
        %4972 = vst [vmem:[%s4967 + $0x10] sm:$0xf] %v4907
        %4973 = vst [vmem:[%s4967 + $0x14] sm:$0xf] %v4908
        %4974 = vst [vmem:[%s4967 + $0x18] sm:$0xf] %v4909
        %4975 = vst [vmem:[%s4967 + $0x1c] sm:$0xf] %v4910
        %4976 = vst [vmem:[%s4967 + $0x20] sm:$0xf] %v4911
        %4977 = vst [vmem:[%s4967 + $0x24] sm:$0xf] %v4912
        %4978 = vst [vmem:[%s4967 + $0x28] sm:$0xf] %v4913
        %4979 = vst [vmem:[%s4967 + $0x2c] sm:$0xf] %v4914
        %4980 = vst [vmem:[%s4967 + $0x30] sm:$0xf] %v4915
        %4981 = vst [vmem:[%s4967 + $0x34] sm:$0xf] %v4916
        %4982 = vst [vmem:[%s4967 + $0x38] sm:$0xf] %v4917
        %4983 = vst [vmem:[%s4967 + $0x3c] sm:$0xf] %v4918
        %4984 = vst [vmem:[%s4967 + $0x40] sm:$0xf] %v4919
        %4985 = vst [vmem:[%s4967 + $0x44] sm:$0xf] %v4920
        %4986 = vst [vmem:[%s4967 + $0x48] sm:$0xf] %v4921
        %4987 = vst [vmem:[%s4967 + $0x4c] sm:$0xf] %v4922
        %4988 = vst [vmem:[%s4967 + $0x50] sm:$0xf] %v4923
        %4989 = vst [vmem:[%s4967 + $0x54] sm:$0xf] %v4924
        %4990 = vst [vmem:[%s4967 + $0x58] sm:$0xf] %v4925
        %4991 = vst [vmem:[%s4967 + $0x5c] sm:$0xf] %v4926
        %4992 = vst [vmem:[%s4967 + $0x60] sm:$0xf] %v4927
        %4993 = vst [vmem:[%s4967 + $0x64] sm:$0xf] %v4928
        %4994 = vst [vmem:[%s4967 + $0x68] sm:$0xf] %v4929
        %4995 = vst [vmem:[%s4967 + $0x6c] sm:$0xf] %v4930
        %4996 = vst [vmem:[%s4967 + $0x70] sm:$0xf] %v4931
        %4997 = vst [vmem:[%s4967 + $0x74] sm:$0xf] %v4932
        %4998 = vst [vmem:[%s4967 + $0x78] sm:$0xf] %v4933
        %4999 = vst [vmem:[%s4967 + $0x7c] sm:$0xf] %v4934
        %v5016 = vunpack.c.l.b16 %v4679
        %v5017 = vunpack.c.h.b16 %v4679
        %v5018 = vunpack.c.l.b16 %v4680
        %v5019 = vunpack.c.h.b16 %v4680
        %v5020 = vunpack.c.l.b16 %v4681
        %v5021 = vunpack.c.h.b16 %v4681
        %v5022 = vunpack.c.l.b16 %v4682
        %v5023 = vunpack.c.h.b16 %v4682
        %v5024 = vunpack.c.l.b16 %v4683
        %v5025 = vunpack.c.h.b16 %v4683
        %v5026 = vunpack.c.l.b16 %v4684
        %v5027 = vunpack.c.h.b16 %v4684
        %v5028 = vunpack.c.l.b16 %v4685
        %v5029 = vunpack.c.h.b16 %v4685
        %v5030 = vunpack.c.l.b16 %v4686
        %v5031 = vunpack.c.h.b16 %v4686
        %v5032 = vunpack.c.l.b16 %v4687
        %v5033 = vunpack.c.h.b16 %v4687
        %v5034 = vunpack.c.l.b16 %v4688
        %v5035 = vunpack.c.h.b16 %v4688
        %v5036 = vunpack.c.l.b16 %v4689
        %v5037 = vunpack.c.h.b16 %v4689
        %v5038 = vunpack.c.l.b16 %v4690
        %v5039 = vunpack.c.h.b16 %v4690
        %v5040 = vunpack.c.l.b16 %v4691
        %v5041 = vunpack.c.h.b16 %v4691
        %v5042 = vunpack.c.l.b16 %v4692
        %v5043 = vunpack.c.h.b16 %v4692
        %v5044 = vunpack.c.l.b16 %v4693
        %v5045 = vunpack.c.h.b16 %v4693
        %v5046 = vunpack.c.l.b16 %v4694
        %v5047 = vunpack.c.h.b16 %v4694
        %v5048 = vpack.c.b16 %v5016, %v5016
        %v5049 = vpack.c.b16 %v5017, %v5017
        %v5050 = vpack.c.b16 %v5018, %v5018
        %v5051 = vpack.c.b16 %v5019, %v5019
        %v5052 = vpack.c.b16 %v5020, %v5020
        %v5053 = vpack.c.b16 %v5021, %v5021
        %v5054 = vpack.c.b16 %v5022, %v5022
        %v5055 = vpack.c.b16 %v5023, %v5023
        %v5056 = vpack.c.b16 %v5024, %v5024
        %v5057 = vpack.c.b16 %v5025, %v5025
        %v5058 = vpack.c.b16 %v5026, %v5026
        %v5059 = vpack.c.b16 %v5027, %v5027
        %v5060 = vpack.c.b16 %v5028, %v5028
        %v5061 = vpack.c.b16 %v5029, %v5029
        %v5062 = vpack.c.b16 %v5030, %v5030
        %v5063 = vpack.c.b16 %v5031, %v5031
        %v5064 = vpack.c.b16 %v5032, %v5032
        %v5065 = vpack.c.b16 %v5033, %v5033
        %v5066 = vpack.c.b16 %v5034, %v5034
        %v5067 = vpack.c.b16 %v5035, %v5035
        %v5068 = vpack.c.b16 %v5036, %v5036
        %v5069 = vpack.c.b16 %v5037, %v5037
        %v5070 = vpack.c.b16 %v5038, %v5038
        %v5071 = vpack.c.b16 %v5039, %v5039
        %v5072 = vpack.c.b16 %v5040, %v5040
        %v5073 = vpack.c.b16 %v5041, %v5041
        %v5074 = vpack.c.b16 %v5042, %v5042
        %v5075 = vpack.c.b16 %v5043, %v5043
        %v5076 = vpack.c.b16 %v5044, %v5044
        %v5077 = vpack.c.b16 %v5045, %v5045
        %v5078 = vpack.c.b16 %v5046, %v5046
        %v5079 = vpack.c.b16 %v5047, %v5047
        %s5112 = scalar_lea.vmem %s483, 256 [#allocation13]
        %5113 = vst [vmem:[%s5112] sm:$0xf] %v5048
        %5114 = vst [vmem:[%s5112 + $0x4] sm:$0xf] %v5049
        %5115 = vst [vmem:[%s5112 + $0x8] sm:$0xf] %v5050
        %5116 = vst [vmem:[%s5112 + $0xc] sm:$0xf] %v5051
        %5117 = vst [vmem:[%s5112 + $0x10] sm:$0xf] %v5052
        %5118 = vst [vmem:[%s5112 + $0x14] sm:$0xf] %v5053
        %5119 = vst [vmem:[%s5112 + $0x18] sm:$0xf] %v5054
        %5120 = vst [vmem:[%s5112 + $0x1c] sm:$0xf] %v5055
        %5121 = vst [vmem:[%s5112 + $0x20] sm:$0xf] %v5056
        %5122 = vst [vmem:[%s5112 + $0x24] sm:$0xf] %v5057
        %5123 = vst [vmem:[%s5112 + $0x28] sm:$0xf] %v5058
        %5124 = vst [vmem:[%s5112 + $0x2c] sm:$0xf] %v5059
        %5125 = vst [vmem:[%s5112 + $0x30] sm:$0xf] %v5060
        %5126 = vst [vmem:[%s5112 + $0x34] sm:$0xf] %v5061
        %5127 = vst [vmem:[%s5112 + $0x38] sm:$0xf] %v5062
        %5128 = vst [vmem:[%s5112 + $0x3c] sm:$0xf] %v5063
        %5129 = vst [vmem:[%s5112 + $0x40] sm:$0xf] %v5064
        %5130 = vst [vmem:[%s5112 + $0x44] sm:$0xf] %v5065
        %5131 = vst [vmem:[%s5112 + $0x48] sm:$0xf] %v5066
        %5132 = vst [vmem:[%s5112 + $0x4c] sm:$0xf] %v5067
        %5133 = vst [vmem:[%s5112 + $0x50] sm:$0xf] %v5068
        %5134 = vst [vmem:[%s5112 + $0x54] sm:$0xf] %v5069
        %5135 = vst [vmem:[%s5112 + $0x58] sm:$0xf] %v5070
        %5136 = vst [vmem:[%s5112 + $0x5c] sm:$0xf] %v5071
        %5137 = vst [vmem:[%s5112 + $0x60] sm:$0xf] %v5072
        %5138 = vst [vmem:[%s5112 + $0x64] sm:$0xf] %v5073
        %5139 = vst [vmem:[%s5112 + $0x68] sm:$0xf] %v5074
        %5140 = vst [vmem:[%s5112 + $0x6c] sm:$0xf] %v5075
        %5141 = vst [vmem:[%s5112 + $0x70] sm:$0xf] %v5076
        %5142 = vst [vmem:[%s5112 + $0x74] sm:$0xf] %v5077
        %5143 = vst [vmem:[%s5112 + $0x78] sm:$0xf] %v5078
        %5144 = vst [vmem:[%s5112 + $0x7c] sm:$0xf] %v5079
        %v5161 = vunpack.c.l.b16 %v4695
        %v5162 = vunpack.c.h.b16 %v4695
        %v5163 = vunpack.c.l.b16 %v4696
        %v5164 = vunpack.c.h.b16 %v4696
        %v5165 = vunpack.c.l.b16 %v4697
        %v5166 = vunpack.c.h.b16 %v4697
        %v5167 = vunpack.c.l.b16 %v4698
        %v5168 = vunpack.c.h.b16 %v4698
        %v5169 = vunpack.c.l.b16 %v4699
        %v5170 = vunpack.c.h.b16 %v4699
        %v5171 = vunpack.c.l.b16 %v4700
        %v5172 = vunpack.c.h.b16 %v4700
        %v5173 = vunpack.c.l.b16 %v4701
        %v5174 = vunpack.c.h.b16 %v4701
        %v5175 = vunpack.c.l.b16 %v4702
        %v5176 = vunpack.c.h.b16 %v4702
        %v5177 = vunpack.c.l.b16 %v4703
        %v5178 = vunpack.c.h.b16 %v4703
        %v5179 = vunpack.c.l.b16 %v4704
        %v5180 = vunpack.c.h.b16 %v4704
        %v5181 = vunpack.c.l.b16 %v4705
        %v5182 = vunpack.c.h.b16 %v4705
        %v5183 = vunpack.c.l.b16 %v4706
        %v5184 = vunpack.c.h.b16 %v4706
        %v5185 = vunpack.c.l.b16 %v4707
        %v5186 = vunpack.c.h.b16 %v4707
        %v5187 = vunpack.c.l.b16 %v4708
        %v5188 = vunpack.c.h.b16 %v4708
        %v5189 = vunpack.c.l.b16 %v4709
        %v5190 = vunpack.c.h.b16 %v4709
        %v5191 = vunpack.c.l.b16 %v4710
        %v5192 = vunpack.c.h.b16 %v4710
        %v5193 = vpack.c.b16 %v5161, %v5161
        %v5194 = vpack.c.b16 %v5162, %v5162
        %v5195 = vpack.c.b16 %v5163, %v5163
        %v5196 = vpack.c.b16 %v5164, %v5164
        %v5197 = vpack.c.b16 %v5165, %v5165
        %v5198 = vpack.c.b16 %v5166, %v5166
        %v5199 = vpack.c.b16 %v5167, %v5167
        %v5200 = vpack.c.b16 %v5168, %v5168
        %v5201 = vpack.c.b16 %v5169, %v5169
        %v5202 = vpack.c.b16 %v5170, %v5170
        %v5203 = vpack.c.b16 %v5171, %v5171
        %v5204 = vpack.c.b16 %v5172, %v5172
        %v5205 = vpack.c.b16 %v5173, %v5173
        %v5206 = vpack.c.b16 %v5174, %v5174
        %v5207 = vpack.c.b16 %v5175, %v5175
        %v5208 = vpack.c.b16 %v5176, %v5176
        %v5209 = vpack.c.b16 %v5177, %v5177
        %v5210 = vpack.c.b16 %v5178, %v5178
        %v5211 = vpack.c.b16 %v5179, %v5179
        %v5212 = vpack.c.b16 %v5180, %v5180
        %v5213 = vpack.c.b16 %v5181, %v5181
        %v5214 = vpack.c.b16 %v5182, %v5182
        %v5215 = vpack.c.b16 %v5183, %v5183
        %v5216 = vpack.c.b16 %v5184, %v5184
        %v5217 = vpack.c.b16 %v5185, %v5185
        %v5218 = vpack.c.b16 %v5186, %v5186
        %v5219 = vpack.c.b16 %v5187, %v5187
        %v5220 = vpack.c.b16 %v5188, %v5188
        %v5221 = vpack.c.b16 %v5189, %v5189
        %v5222 = vpack.c.b16 %v5190, %v5190
        %v5223 = vpack.c.b16 %v5191, %v5191
        %v5224 = vpack.c.b16 %v5192, %v5192
        %s5257 = scalar_lea.vmem %s483, 384 [#allocation13]
        %5258 = vst [vmem:[%s5257] sm:$0xf] %v5193
        %5259 = vst [vmem:[%s5257 + $0x4] sm:$0xf] %v5194
        %5260 = vst [vmem:[%s5257 + $0x8] sm:$0xf] %v5195
        %5261 = vst [vmem:[%s5257 + $0xc] sm:$0xf] %v5196
        %5262 = vst [vmem:[%s5257 + $0x10] sm:$0xf] %v5197
        %5263 = vst [vmem:[%s5257 + $0x14] sm:$0xf] %v5198
        %5264 = vst [vmem:[%s5257 + $0x18] sm:$0xf] %v5199
        %5265 = vst [vmem:[%s5257 + $0x1c] sm:$0xf] %v5200
        %5266 = vst [vmem:[%s5257 + $0x20] sm:$0xf] %v5201
        %5267 = vst [vmem:[%s5257 + $0x24] sm:$0xf] %v5202
        %5268 = vst [vmem:[%s5257 + $0x28] sm:$0xf] %v5203
        %5269 = vst [vmem:[%s5257 + $0x2c] sm:$0xf] %v5204
        %5270 = vst [vmem:[%s5257 + $0x30] sm:$0xf] %v5205
        %5271 = vst [vmem:[%s5257 + $0x34] sm:$0xf] %v5206
        %5272 = vst [vmem:[%s5257 + $0x38] sm:$0xf] %v5207
        %5273 = vst [vmem:[%s5257 + $0x3c] sm:$0xf] %v5208
        %5274 = vst [vmem:[%s5257 + $0x40] sm:$0xf] %v5209
        %5275 = vst [vmem:[%s5257 + $0x44] sm:$0xf] %v5210
        %5276 = vst [vmem:[%s5257 + $0x48] sm:$0xf] %v5211
        %5277 = vst [vmem:[%s5257 + $0x4c] sm:$0xf] %v5212
        %5278 = vst [vmem:[%s5257 + $0x50] sm:$0xf] %v5213
        %5279 = vst [vmem:[%s5257 + $0x54] sm:$0xf] %v5214
        %5280 = vst [vmem:[%s5257 + $0x58] sm:$0xf] %v5215
        %5281 = vst [vmem:[%s5257 + $0x5c] sm:$0xf] %v5216
        %5282 = vst [vmem:[%s5257 + $0x60] sm:$0xf] %v5217
        %5283 = vst [vmem:[%s5257 + $0x64] sm:$0xf] %v5218
        %5284 = vst [vmem:[%s5257 + $0x68] sm:$0xf] %v5219
        %5285 = vst [vmem:[%s5257 + $0x6c] sm:$0xf] %v5220
        %5286 = vst [vmem:[%s5257 + $0x70] sm:$0xf] %v5221
        %5287 = vst [vmem:[%s5257 + $0x74] sm:$0xf] %v5222
        %5288 = vst [vmem:[%s5257 + $0x78] sm:$0xf] %v5223
        %5289 = vst [vmem:[%s5257 + $0x7c] sm:$0xf] %v5224
        %s5290 = sand.u32 %s264, 1
        %s5291 = scalar_lea.sflag [#allocation4], %s5290
        %s5292 = sand.u32 %s264, 1
        %s5293 = smul.addr %s5292, 512
        %s5294 = scalar_lea.vmem [#allocation13], %s5293
        // Predicated region
        $region81: #{tpu_custom_call.1} parent=55 // pred_check
          %p5295 = pneg %p274
        $region82: #{tpu_custom_call.1} parent=55 // pred_check_branch
          %5297 = sbr.rel (%p5295) target = $region84
        $region83: #{tpu_custom_call.1} parent=55 // pred_region
          %s5298 = smul.u32 16, %s36
          %s5300 = ssub.s32 8192, 8192
          %5301 = vsyncadd %s5291, %s5300
          %s5302 = smul.addr %s5298, 2
          %s5303 = smul.addr %s35, 128
          %s5304 = sadd.s32 %s5302, %s5303
          %s5305 = smul.addr %s5304, 64
          %s5306 = scalar_lea.hbm %s9, %s5305
          %s5307 = sshll.u32 %s5294, 4
          %s5308 = int_to_ptr.vmem [resolvable:$true] %s5307
          %5313 = dma.vmem_to_hbm [thread:$0]  %s5308, 8192, %s5306, %s5291, 64, 64, 4
        $region84: #{tpu_custom_call.1} parent=55 // pred_fallthru
          _
      $region56: #{tpu_custom_call.1} parent=5 // pred_fallthru
        _
      %p5314 = scmp.le.s32.totalorder 2, %s26
      // Predicated region
      $region85: #{tpu_custom_call.1} parent=5 // pred_check
        %p5315 = pneg %p5314
      $region86: #{tpu_custom_call.1} parent=5 // pred_check_branch
        %5317 = sbr.rel (%p5315) target = $region88
      $region87: #{tpu_custom_call.1} parent=5 // pred_region
        %s5318 = ssub.s32 %s26, 2
        // Predicated region
        $region89: #{tpu_custom_call.1} parent=87 // pred_check
          %p5319 = pneg %p280
        $region90: #{tpu_custom_call.1} parent=87 // pred_check_branch
          %5321 = sbr.rel (%p5319) target = $region92
        $region91: #{tpu_custom_call.1} parent=87 // pred_region
          %s5322 = sand.u32 %s265, 1
          %s5323 = scalar_lea.sflag [#allocation4], %s5322
          %s5324 = sand.u32 %s265, 1
          %s5325 = smul.addr %s5324, 512
          %s5326 = scalar_lea.vmem [#allocation13], %s5325
          %5327 = dma.done %s5323, 8192
        $region92: #{tpu_custom_call.1} parent=87 // pred_fallthru
          _
      $region88: #{tpu_custom_call.1} parent=5 // pred_fallthru
        _
    $region6: #{tpu_custom_call.1} parent=1 // loop_footer
      %s30 = sadd.s32 1, %s26
    $region7: #{tpu_custom_call.1} parent=1 // loop_footer_branch
      %25 = sbr.rel target = $region3
    $region8: #{tpu_custom_call.1} parent=1 // loop_exit
      _
    %5328 = vsyncpa [#allocation3], 1
    %s5329 = scalar_lea.sflag [#allocation3], 1
    %5330 = vsyncpa %s5329, 1
    %5331 = vsyncpa [#allocation6], 1
    %s5332 = scalar_lea.sflag [#allocation6], 1
    %5333 = vsyncpa %s5332, 1
    %5334 = vsyncpa [#allocation9], 1
    %5335 = vsyncpa [#allocation12], 1
    %5336 = vsyncpa [#allocation4], 1
    %s5337 = scalar_lea.sflag [#allocation4], 1
    %5338 = vsyncpa %s5337, 1

</llo_original>
